<compile_context>
chip_gen: v5e
topology: v5e:2x2
jax: 0.10.0
libtpu: 0.0.40
codegen_flags: <defaults>
</compile_context>

<pallas_src>
import jax
import jax.numpy as jnp
from jax.experimental import pallas as pl
from jax.experimental.pallas import tpu as pltpu


def _round_up(n, m):
    return ((n + m - 1) // m) * m


def _rnn_encoder_kernel(x_ref, len_ref, w_in_ref, b_in_ref,
                        whh_f_ref, whh_b_ref, wlin_ref, blin_ref,
                        out_ref, gx_ref):
    # x_ref    : (T*Bp, Dp)   bf16  time-major, flattened (t-major, then batch)
    # len_ref  : (Bp, 1)      i32   (padded batch rows have length 0)
    # w_in_ref : (Dp, 8*Hp)   bf16  [Wih_f^T | Wih_b^T], per-gate padded to Hp
    # b_in_ref : (1, 8*Hp)    f32   [b_f | b_b] (b_ih + b_hh), per-gate padded
    # whh_*    : (Hp, 4*Hp)   bf16  W_hh^T per direction, per-gate padded
    # wlin_ref : (2*Hp, Op)   bf16  linear weight^T, padded
    # blin_ref : (1, Op)      f32
    # out_ref  : (Bp, Op)     f32
    # gx_ref   : (T*Bp, 8*Hp) f32   scratch: hoisted input projection
    Bp = len_ref.shape[0]
    T = x_ref.shape[0] // Bp
    Hp = whh_f_ref.shape[0]
    G = 4 * Hp

    # ---- Phase 1: hoisted input projection (both directions, bias folded) ----
    # One MXU-shaped matmul instead of 2*T tiny (B, D)@(D, 4H) matmuls inside
    # the serial dependency chain.
    gx_ref[...] = (jnp.dot(x_ref[...], w_in_ref[...],
                           preferred_element_type=jnp.float32)
                   + b_in_ref[...])

    # ---- Hoist recurrent weights / lengths out of the time loop ----
    whh_f = whh_f_ref[...]
    whh_b = whh_b_ref[...]
    lengths = len_ref[...]                                  # (Bp, 1) int32

    def lstm_gates(pre, c):
        # PyTorch gate order: i, f, g, o; each slab is a full 128-lane slice.
        i = jax.nn.sigmoid(pre[:, 0 * Hp:1 * Hp])
        f = jax.nn.sigmoid(pre[:, 1 * Hp:2 * Hp])
        g = jnp.tanh(pre[:, 2 * Hp:3 * Hp])
        o = jax.nn.sigmoid(pre[:, 3 * Hp:4 * Hp])
        c_new = f * c + i * g
        return o * jnp.tanh(c_new), c_new

    zeros = jnp.zeros((Bp, Hp), jnp.float32)
    h_f, c_f = zeros, zeros
    h_b, c_b = zeros, zeros

    # ---- Phase 2: fused forward + backward recurrence, fully unrolled ----
    # T is a static Python int; the two directions are independent dependency
    # chains so the scheduler can co-issue their MXU / EUP / VPU work.
    for t in range(T):
        tb = T - 1 - t
        pre_f = gx_ref[t * Bp:(t + 1) * Bp, :G] + jnp.dot(
            h_f.astype(whh_f.dtype), whh_f, preferred_element_type=jnp.float32)
        pre_b = gx_ref[tb * Bp:(tb + 1) * Bp, G:] + jnp.dot(
            h_b.astype(whh_b.dtype), whh_b, preferred_element_type=jnp.float32)
        hf_n, cf_n = lstm_gates(pre_f, c_f)
        hb_n, cb_n = lstm_gates(pre_b, c_b)
        # packed-sequence semantics: padding steps never touch the state.
        vf = t < lengths                                    # (Bp, 1) bool
        vb = tb < lengths
        h_f = jnp.where(vf, hf_n, h_f)
        c_f = jnp.where(vf, cf_n, c_f)
        h_b = jnp.where(vb, hb_n, h_b)
        c_b = jnp.where(vb, cb_n, c_b)

    # ---- Phase 3: final-state concat + Linear head (lane-dense output) ----
    # Dropout(p=0.0) / eval-mode dropout is the identity.
    # TODO(synk): train-mode dropout (random mask + 1/(1-p) scaling) not implemented.
    hidden = jnp.concatenate([h_f, h_b], axis=1)            # (Bp, 2*Hp) f32
    out_ref[...] = (jnp.dot(hidden.astype(wlin_ref.dtype), wlin_ref[...],
                            preferred_element_type=jnp.float32)
                    + blin_ref[...])


def _prep_padded_params(params, D, H, O, Dp, Hp, Op):
    """Pad per-gate blocks to Hp (and D->Dp, O->Op), pre-transpose for (B,K)@(K,N)."""

    def gate_pad_ih(wih):            # (4H, D) -> (Dp, 4Hp)
        w = wih.reshape(4, H, D)
        w = jnp.pad(w, ((0, 0), (0, Hp - H), (0, Dp - D)))
        return w.reshape(4 * Hp, Dp).T

    def gate_pad_hh(whh):            # (4H, H) -> (Hp, 4Hp)
        w = whh.reshape(4, H, H)
        w = jnp.pad(w, ((0, 0), (0, Hp - H), (0, Hp - H)))
        return w.reshape(4 * Hp, Hp).T

    def gate_pad_b(b):               # (4H,) -> (4Hp,)
        return jnp.pad(b.reshape(4, H), ((0, 0), (0, Hp - H))).reshape(4 * Hp)

    w_in = jnp.concatenate([gate_pad_ih(params["wih_f"]),
                            gate_pad_ih(params["wih_b"])], axis=1)   # (Dp, 8Hp)
    b_in = jnp.concatenate([gate_pad_b(params["bih_f"] + params["bhh_f"]),
                            gate_pad_b(params["bih_b"] + params["bhh_b"])])
    whh_f = gate_pad_hh(params["whh_f"])
    whh_b = gate_pad_hh(params["whh_b"])
    wlin = params["wlin"].reshape(O, 2, H)
    wlin = jnp.pad(wlin, ((0, Op - O), (0, 0), (0, Hp - H))).reshape(Op, 2 * Hp).T
    blin = jnp.pad(params["blin"], (0, Op - O))
    return w_in, b_in.reshape(1, 8 * Hp), whh_f, whh_b, wlin, blin.reshape(1, Op)


@jax.jit
def rnn_encoder_forward(x, lengths, params):
    """x: (B, T, D) batch_first (PyTorch convention); lengths: (B,) ints."""
    B, T, D = x.shape
    H = params["whh_f"].shape[1]
    O = params["wlin"].shape[0]

    Bp = _round_up(B, 8)      # f32 sublane tile
    Dp = _round_up(D, 128)    # lane tile (matmul K)
    Hp = _round_up(H, 128)    # lane tile: gate slabs are full vregs
    Op = _round_up(O, 128)    # lane-dense final store

    w_in, b_in, whh_f, whh_b, wlin, blin = _prep_padded_params(
        params, D, H, O, Dp, Hp, Op)

    # Time-major + pad. This transpose/pad/cast is fused into the same jit as
    # the pallas_call (no separate standalone HBM pass for x).
    x_tm = jnp.transpose(x, (1, 0, 2)).astype(jnp.float32)       # (T, B, D)
    x_tm = jnp.pad(x_tm, ((0, 0), (0, Bp - B), (0, Dp - D)))     # (T, Bp, Dp)
    x2d = x_tm.reshape(T * Bp, Dp).astype(jnp.bfloat16)          # bf16 MXU operand
    len_p = jnp.pad(lengths.astype(jnp.int32), (0, Bp - B)).reshape(Bp, 1)

    bf16 = jnp.bfloat16
    args = (x2d, len_p,
            w_in.astype(bf16), b_in.astype(jnp.float32),
            whh_f.astype(bf16), whh_b.astype(bf16),
            wlin.astype(bf16), blin.astype(jnp.float32))

    vmem = pl.BlockSpec(memory_space=pltpu.MemorySpace.VMEM)
    out_padded = pl.pallas_call(
        _rnn_encoder_kernel,
        out_shape=jax.ShapeDtypeStruct((Bp, Op), jnp.float32),
        in_specs=[vmem] * len(args),
        out_specs=vmem,
        scratch_shapes=[pltpu.VMEM((T * Bp, 8 * Hp), jnp.float32)],
        compiler_params=pltpu.CompilerParams(
            vmem_limit_bytes=32 * 1024 * 1024),
    )(*args)
    return out_padded[:B, :O]


def _reference(x, lengths, params):
    """Pure-JAX f32 reference (same math) for a correctness check."""
    B, T, D = x.shape
    H = params["whh_f"].shape[1]

    def run_dir(wih, whh, bih, bhh, reverse):
        h = jnp.zeros((B, H), jnp.float32)
        c = jnp.zeros((B, H), jnp.float32)
        ts = range(T - 1, -1, -1) if reverse else range(T)
        for t in ts:
            xt = x[:, t, :]
            gates = xt @ wih.T + h @ whh.T + bih + bhh
            i = jax.nn.sigmoid(gates[:, :H])
            f = jax.nn.sigmoid(gates[:, H:2 * H])
            g = jnp.tanh(gates[:, 2 * H:3 * H])
            o = jax.nn.sigmoid(gates[:, 3 * H:])
            c_new = f * c + i * g
            h_new = o * jnp.tanh(c_new)
            valid = (t < lengths)[:, None]
            h = jnp.where(valid, h_new, h)
            c = jnp.where(valid, c_new, c)
        return h

    hf = run_dir(params["wih_f"], params["whh_f"],
                 params["bih_f"], params["bhh_f"], False)
    hb = run_dir(params["wih_b"], params["whh_b"],
                 params["bih_b"], params["bhh_b"], True)
    hidden = jnp.concatenate([hf, hb], axis=1)
    return hidden @ params["wlin"].T + params["blin"]


def _init_params(key, input_size, hidden_size, output_size):
    """Deterministic init mimicking PyTorch's U(-1/sqrt(H), 1/sqrt(H))."""
    k = 1.0 / jnp.sqrt(jnp.float32(hidden_size))
    names_shapes = [
        ("wih_f", (4 * hidden_size, input_size)),
        ("whh_f", (4 * hidden_size, hidden_size)),
        ("bih_f", (4 * hidden_size,)),
        ("bhh_f", (4 * hidden_size,)),
        ("wih_b", (4 * hidden_size, input_size)),
        ("whh_b", (4 * hidden_size, hidden_size)),
        ("bih_b", (4 * hidden_size,)),
        ("bhh_b", (4 * hidden_size,)),
        ("wlin", (output_size, 2 * hidden_size)),
        ("blin", (output_size,)),
    ]
    keys = jax.random.split(key, len(names_shapes))
    return {
        name: jax.random.uniform(kk, shape, jnp.float32, -k, k)
        for kk, (name, shape) in zip(keys, names_shapes)
    }


if __name__ == "__main__":
    # TODO(synk): multi-layer stacking (config.layers > 1) not implemented;
    # single-layer bidirectional LSTM only (matches the reference math used here).
    B, T, D, H, O = 2, 8, 16, 32, 32

    key = jax.random.PRNGKey(0)
    k_x, k_p = jax.random.split(key)
    x = jax.random.normal(k_x, (B, T, D), jnp.float32)       # (batch, seq, feat)
    lengths = jnp.array([8, 5], jnp.int32)                    # variable lengths
    params = _init_params(k_p, D, H, O)

    out = rnn_encoder_forward(x, lengths, params)
    out = jax.block_until_ready(out)

    ref = _reference(x, lengths, params)
    err = float(jnp.max(jnp.abs(out - ref)))
    assert out.shape == (B, O)
    # bf16 matmul operands (f32 accumulate) -> loosened tolerance per review.
    assert jnp.allclose(out, ref, atol=5e-2, rtol=5e-2), \
        f"mismatch vs reference (max |err| = {err})"

    print("KERNEL_OK")
</pallas_src>

<mosaic_0001>
module attributes {stable_mosaic.version = 11 : i64} {
  func.func @_rnn_encoder_kernel(%arg0: memref<64x128xbf16, #tpu.memory_space<vmem>>, %arg1: memref<8x1xi32, #tpu.memory_space<vmem>>, %arg2: memref<128x1024xbf16, #tpu.memory_space<vmem>>, %arg3: memref<1x1024xf32, #tpu.memory_space<vmem>>, %arg4: memref<128x512xbf16, #tpu.memory_space<vmem>>, %arg5: memref<128x512xbf16, #tpu.memory_space<vmem>>, %arg6: memref<256x128xbf16, #tpu.memory_space<vmem>>, %arg7: memref<1x128xf32, #tpu.memory_space<vmem>>, %arg8: memref<8x128xf32, #tpu.memory_space<vmem>>, %arg9: memref<64x1024xf32, #tpu.memory_space<vmem>>) attributes {dimension_semantics = [], scalar_prefetch = 0 : i64, scratch_operands = 1 : i64, tpu.core_type = #tpu.core_type<tc>} {
    %c0 = arith.constant 0 : index
    %c0_0 = arith.constant 0 : index
    %0 = vector.load %arg0[%c0, %c0_0] : memref<64x128xbf16, #tpu.memory_space<vmem>>, vector<64x128xbf16>
    %c0_1 = arith.constant 0 : index
    %c0_2 = arith.constant 0 : index
    %1 = vector.load %arg2[%c0_1, %c0_2] : memref<128x1024xbf16, #tpu.memory_space<vmem>>, vector<128x1024xbf16>
    %cst = arith.constant dense<0.000000e+00> : vector<64x1024xf32>
    %2 = tpu.matmul %0, %1, %cst {dimension_numbers = #tpu.dot_dimension_numbers<[1], [0], [0], [1], [0, 0, 1, 1], [], []>} : vector<64x128xbf16>, vector<128x1024xbf16>, vector<64x1024xf32> -> vector<64x1024xf32>
    %c0_3 = arith.constant 0 : index
    %c0_4 = arith.constant 0 : index
    %3 = vector.load %arg3[%c0_3, %c0_4] : memref<1x1024xf32, #tpu.memory_space<vmem>>, vector<1x1024xf32>
    %4 = vector.broadcast %3 : vector<1x1024xf32> to vector<64x1024xf32>
    %5 = arith.addf %2, %4 : vector<64x1024xf32>
    %c0_5 = arith.constant 0 : index
    %c0_6 = arith.constant 0 : index
    %6 = vector.load %arg9[%c0_5, %c0_6] : memref<64x1024xf32, #tpu.memory_space<vmem>>, vector<64x1024xf32>
    tpu.vector_store %arg9[%c0_5, %c0_6], %5 {strides = array<i32>} : memref<64x1024xf32, #tpu.memory_space<vmem>>, vector<64x1024xf32>,
    %c0_7 = arith.constant 0 : index
    %c0_8 = arith.constant 0 : index
    %7 = vector.load %arg4[%c0_7, %c0_8] : memref<128x512xbf16, #tpu.memory_space<vmem>>, vector<128x512xbf16>
    %c0_9 = arith.constant 0 : index
    %c0_10 = arith.constant 0 : index
    %8 = vector.load %arg5[%c0_9, %c0_10] : memref<128x512xbf16, #tpu.memory_space<vmem>>, vector<128x512xbf16>
    %c0_11 = arith.constant 0 : index
    %c0_12 = arith.constant 0 : index
    %9 = vector.load %arg1[%c0_11, %c0_12] : memref<8x1xi32, #tpu.memory_space<vmem>>, vector<8x1xi32>
    %cst_13 = arith.constant 0.000000e+00 : f32
    %10 = vector.broadcast %cst_13 : f32 to vector<8x128xf32>
    %c0_14 = arith.constant 0 : index
    %c0_15 = arith.constant 0 : index
    %11 = vector.load %arg9[%c0_14, %c0_15] : memref<64x1024xf32, #tpu.memory_space<vmem>>, vector<8x512xf32>
    %12 = arith.truncf %10 : vector<8x128xf32> to vector<8x128xbf16>
    %cst_16 = arith.constant dense<0.000000e+00> : vector<8x512xf32>
    %13 = tpu.matmul %12, %7, %cst_16 {dimension_numbers = #tpu.dot_dimension_numbers<[1], [0], [0], [1], [0, 0, 1, 1], [], []>} : vector<8x128xbf16>, vector<128x512xbf16>, vector<8x512xf32> -> vector<8x512xf32>
    %14 = arith.addf %11, %13 : vector<8x512xf32>
    %c56 = arith.constant 56 : index
    %c512 = arith.constant 512 : index
    %15 = vector.load %arg9[%c56, %c512] : memref<64x1024xf32, #tpu.memory_space<vmem>>, vector<8x512xf32>
    %16 = arith.truncf %10 : vector<8x128xf32> to vector<8x128xbf16>
    %cst_17 = arith.constant dense<0.000000e+00> : vector<8x512xf32>
    %17 = tpu.matmul %16, %8, %cst_17 {dimension_numbers = #tpu.dot_dimension_numbers<[1], [0], [0], [1], [0, 0, 1, 1], [], []>} : vector<8x128xbf16>, vector<128x512xbf16>, vector<8x512xf32> -> vector<8x512xf32>
    %18 = arith.addf %15, %17 : vector<8x512xf32>
    %19 = vector.extract_strided_slice %14 {offsets = [0, 0], sizes = [8, 128], strides = [1, 1]} : vector<8x512xf32> to vector<8x128xf32>
    %20 = arith.negf %19 : vector<8x128xf32>
    %21 = math.exp %20 : vector<8x128xf32>
    %cst_18 = arith.constant 1.000000e+00 : f32
    %22 = vector.broadcast %cst_18 : f32 to vector<8x128xf32>
    %23 = arith.addf %22, %21 : vector<8x128xf32>
    %24 = arith.divf %22, %23 : vector<8x128xf32>
    %25 = vector.extract_strided_slice %14 {offsets = [0, 128], sizes = [8, 128], strides = [1, 1]} : vector<8x512xf32> to vector<8x128xf32>
    %26 = arith.negf %25 : vector<8x128xf32>
    %27 = math.exp %26 : vector<8x128xf32>
    %cst_19 = arith.constant 1.000000e+00 : f32
    %28 = vector.broadcast %cst_19 : f32 to vector<8x128xf32>
    %29 = arith.addf %28, %27 : vector<8x128xf32>
    %30 = arith.divf %28, %29 : vector<8x128xf32>
    %31 = vector.extract_strided_slice %14 {offsets = [0, 256], sizes = [8, 128], strides = [1, 1]} : vector<8x512xf32> to vector<8x128xf32>
    %32 = math.tanh %31 : vector<8x128xf32>
    %33 = vector.extract_strided_slice %14 {offsets = [0, 384], sizes = [8, 128], strides = [1, 1]} : vector<8x512xf32> to vector<8x128xf32>
    %34 = arith.negf %33 : vector<8x128xf32>
    %35 = math.exp %34 : vector<8x128xf32>
    %cst_20 = arith.constant 1.000000e+00 : f32
    %36 = vector.broadcast %cst_20 : f32 to vector<8x128xf32>
    %37 = arith.addf %36, %35 : vector<8x128xf32>
    %38 = arith.divf %36, %37 : vector<8x128xf32>
    %39 = arith.mulf %30, %10 : vector<8x128xf32>
    %40 = arith.mulf %24, %32 : vector<8x128xf32>
    %41 = arith.addf %39, %40 : vector<8x128xf32>
    %42 = math.tanh %41 : vector<8x128xf32>
    %43 = arith.mulf %38, %42 : vector<8x128xf32>
    %44 = vector.extract_strided_slice %18 {offsets = [0, 0], sizes = [8, 128], strides = [1, 1]} : vector<8x512xf32> to vector<8x128xf32>
    %45 = arith.negf %44 : vector<8x128xf32>
    %46 = math.exp %45 : vector<8x128xf32>
    %cst_21 = arith.constant 1.000000e+00 : f32
    %47 = vector.broadcast %cst_21 : f32 to vector<8x128xf32>
    %48 = arith.addf %47, %46 : vector<8x128xf32>
    %49 = arith.divf %47, %48 : vector<8x128xf32>
    %50 = vector.extract_strided_slice %18 {offsets = [0, 128], sizes = [8, 128], strides = [1, 1]} : vector<8x512xf32> to vector<8x128xf32>
    %51 = arith.negf %50 : vector<8x128xf32>
    %52 = math.exp %51 : vector<8x128xf32>
    %cst_22 = arith.constant 1.000000e+00 : f32
    %53 = vector.broadcast %cst_22 : f32 to vector<8x128xf32>
    %54 = arith.addf %53, %52 : vector<8x128xf32>
    %55 = arith.divf %53, %54 : vector<8x128xf32>
    %56 = vector.extract_strided_slice %18 {offsets = [0, 256], sizes = [8, 128], strides = [1, 1]} : vector<8x512xf32> to vector<8x128xf32>
    %57 = math.tanh %56 : vector<8x128xf32>
    %58 = vector.extract_strided_slice %18 {offsets = [0, 384], sizes = [8, 128], strides = [1, 1]} : vector<8x512xf32> to vector<8x128xf32>
    %59 = arith.negf %58 : vector<8x128xf32>
    %60 = math.exp %59 : vector<8x128xf32>
    %cst_23 = arith.constant 1.000000e+00 : f32
    %61 = vector.broadcast %cst_23 : f32 to vector<8x128xf32>
    %62 = arith.addf %61, %60 : vector<8x128xf32>
    %63 = arith.divf %61, %62 : vector<8x128xf32>
    %64 = arith.mulf %55, %10 : vector<8x128xf32>
    %65 = arith.mulf %49, %57 : vector<8x128xf32>
    %66 = arith.addf %64, %65 : vector<8x128xf32>
    %67 = math.tanh %66 : vector<8x128xf32>
    %68 = arith.mulf %63, %67 : vector<8x128xf32>
    %c0_i32 = arith.constant 0 : i32
    %69 = vector.broadcast %c0_i32 : i32 to vector<8x1xi32>
    %70 = arith.cmpi sgt, %9, %69 : vector<8x1xi32>
    %c7_i32 = arith.constant 7 : i32
    %71 = vector.broadcast %c7_i32 : i32 to vector<8x1xi32>
    %72 = arith.cmpi sgt, %9, %71 : vector<8x1xi32>
    %73 = vector.shape_cast %70 : vector<8x1xi1> to vector<8x1xi1>
    %74 = vector.broadcast %73 : vector<8x1xi1> to vector<8x128xi1>
    %75 = arith.select %74, %43, %10 : vector<8x128xi1>, vector<8x128xf32>
    %76 = vector.shape_cast %70 : vector<8x1xi1> to vector<8x1xi1>
    %77 = vector.broadcast %76 : vector<8x1xi1> to vector<8x128xi1>
    %78 = arith.select %77, %41, %10 : vector<8x128xi1>, vector<8x128xf32>
    %79 = vector.shape_cast %72 : vector<8x1xi1> to vector<8x1xi1>
    %80 = vector.broadcast %79 : vector<8x1xi1> to vector<8x128xi1>
    %81 = arith.select %80, %68, %10 : vector<8x128xi1>, vector<8x128xf32>
    %82 = vector.shape_cast %72 : vector<8x1xi1> to vector<8x1xi1>
    %83 = vector.broadcast %82 : vector<8x1xi1> to vector<8x128xi1>
    %84 = arith.select %83, %66, %10 : vector<8x128xi1>, vector<8x128xf32>
    %c8 = arith.constant 8 : index
    %c0_24 = arith.constant 0 : index
    %85 = vector.load %arg9[%c8, %c0_24] : memref<64x1024xf32, #tpu.memory_space<vmem>>, vector<8x512xf32>
    %86 = arith.truncf %75 : vector<8x128xf32> to vector<8x128xbf16>
    %cst_25 = arith.constant dense<0.000000e+00> : vector<8x512xf32>
    %87 = tpu.matmul %86, %7, %cst_25 {dimension_numbers = #tpu.dot_dimension_numbers<[1], [0], [0], [1], [0, 0, 1, 1], [], []>} : vector<8x128xbf16>, vector<128x512xbf16>, vector<8x512xf32> -> vector<8x512xf32>
    %88 = arith.addf %85, %87 : vector<8x512xf32>
    %c48 = arith.constant 48 : index
    %c512_26 = arith.constant 512 : index
    %89 = vector.load %arg9[%c48, %c512_26] : memref<64x1024xf32, #tpu.memory_space<vmem>>, vector<8x512xf32>
    %90 = arith.truncf %81 : vector<8x128xf32> to vector<8x128xbf16>
    %cst_27 = arith.constant dense<0.000000e+00> : vector<8x512xf32>
    %91 = tpu.matmul %90, %8, %cst_27 {dimension_numbers = #tpu.dot_dimension_numbers<[1], [0], [0], [1], [0, 0, 1, 1], [], []>} : vector<8x128xbf16>, vector<128x512xbf16>, vector<8x512xf32> -> vector<8x512xf32>
    %92 = arith.addf %89, %91 : vector<8x512xf32>
    %93 = vector.extract_strided_slice %88 {offsets = [0, 0], sizes = [8, 128], strides = [1, 1]} : vector<8x512xf32> to vector<8x128xf32>
    %94 = arith.negf %93 : vector<8x128xf32>
    %95 = math.exp %94 : vector<8x128xf32>
    %cst_28 = arith.constant 1.000000e+00 : f32
    %96 = vector.broadcast %cst_28 : f32 to vector<8x128xf32>
    %97 = arith.addf %96, %95 : vector<8x128xf32>
    %98 = arith.divf %96, %97 : vector<8x128xf32>
    %99 = vector.extract_strided_slice %88 {offsets = [0, 128], sizes = [8, 128], strides = [1, 1]} : vector<8x512xf32> to vector<8x128xf32>
    %100 = arith.negf %99 : vector<8x128xf32>
    %101 = math.exp %100 : vector<8x128xf32>
    %cst_29 = arith.constant 1.000000e+00 : f32
    %102 = vector.broadcast %cst_29 : f32 to vector<8x128xf32>
    %103 = arith.addf %102, %101 : vector<8x128xf32>
    %104 = arith.divf %102, %103 : vector<8x128xf32>
    %105 = vector.extract_strided_slice %88 {offsets = [0, 256], sizes = [8, 128], strides = [1, 1]} : vector<8x512xf32> to vector<8x128xf32>
    %106 = math.tanh %105 : vector<8x128xf32>
    %107 = vector.extract_strided_slice %88 {offsets = [0, 384], sizes = [8, 128], strides = [1, 1]} : vector<8x512xf32> to vector<8x128xf32>
    %108 = arith.negf %107 : vector<8x128xf32>
    %109 = math.exp %108 : vector<8x128xf32>
    %cst_30 = arith.constant 1.000000e+00 : f32
    %110 = vector.broadcast %cst_30 : f32 to vector<8x128xf32>
    %111 = arith.addf %110, %109 : vector<8x128xf32>
    %112 = arith.divf %110, %111 : vector<8x128xf32>
    %113 = arith.mulf %104, %78 : vector<8x128xf32>
    %114 = arith.mulf %98, %106 : vector<8x128xf32>
    %115 = arith.addf %113, %114 : vector<8x128xf32>
    %116 = math.tanh %115 : vector<8x128xf32>
    %117 = arith.mulf %112, %116 : vector<8x128xf32>
    %118 = vector.extract_strided_slice %92 {offsets = [0, 0], sizes = [8, 128], strides = [1, 1]} : vector<8x512xf32> to vector<8x128xf32>
    %119 = arith.negf %118 : vector<8x128xf32>
    %120 = math.exp %119 : vector<8x128xf32>
    %cst_31 = arith.constant 1.000000e+00 : f32
    %121 = vector.broadcast %cst_31 : f32 to vector<8x128xf32>
    %122 = arith.addf %121, %120 : vector<8x128xf32>
    %123 = arith.divf %121, %122 : vector<8x128xf32>
    %124 = vector.extract_strided_slice %92 {offsets = [0, 128], sizes = [8, 128], strides = [1, 1]} : vector<8x512xf32> to vector<8x128xf32>
    %125 = arith.negf %124 : vector<8x128xf32>
    %126 = math.exp %125 : vector<8x128xf32>
    %cst_32 = arith.constant 1.000000e+00 : f32
    %127 = vector.broadcast %cst_32 : f32 to vector<8x128xf32>
    %128 = arith.addf %127, %126 : vector<8x128xf32>
    %129 = arith.divf %127, %128 : vector<8x128xf32>
    %130 = vector.extract_strided_slice %92 {offsets = [0, 256], sizes = [8, 128], strides = [1, 1]} : vector<8x512xf32> to vector<8x128xf32>
    %131 = math.tanh %130 : vector<8x128xf32>
    %132 = vector.extract_strided_slice %92 {offsets = [0, 384], sizes = [8, 128], strides = [1, 1]} : vector<8x512xf32> to vector<8x128xf32>
    %133 = arith.negf %132 : vector<8x128xf32>
    %134 = math.exp %133 : vector<8x128xf32>
    %cst_33 = arith.constant 1.000000e+00 : f32
    %135 = vector.broadcast %cst_33 : f32 to vector<8x128xf32>
    %136 = arith.addf %135, %134 : vector<8x128xf32>
    %137 = arith.divf %135, %136 : vector<8x128xf32>
    %138 = arith.mulf %129, %84 : vector<8x128xf32>
    %139 = arith.mulf %123, %131 : vector<8x128xf32>
    %140 = arith.addf %138, %139 : vector<8x128xf32>
    %141 = math.tanh %140 : vector<8x128xf32>
    %142 = arith.mulf %137, %141 : vector<8x128xf32>
    %c1_i32 = arith.constant 1 : i32
    %143 = vector.broadcast %c1_i32 : i32 to vector<8x1xi32>
    %144 = arith.cmpi sgt, %9, %143 : vector<8x1xi32>
    %c6_i32 = arith.constant 6 : i32
    %145 = vector.broadcast %c6_i32 : i32 to vector<8x1xi32>
    %146 = arith.cmpi sgt, %9, %145 : vector<8x1xi32>
    %147 = vector.shape_cast %144 : vector<8x1xi1> to vector<8x1xi1>
    %148 = vector.broadcast %147 : vector<8x1xi1> to vector<8x128xi1>
    %149 = arith.select %148, %117, %75 : vector<8x128xi1>, vector<8x128xf32>
    %150 = vector.shape_cast %144 : vector<8x1xi1> to vector<8x1xi1>
    %151 = vector.broadcast %150 : vector<8x1xi1> to vector<8x128xi1>
    %152 = arith.select %151, %115, %78 : vector<8x128xi1>, vector<8x128xf32>
    %153 = vector.shape_cast %146 : vector<8x1xi1> to vector<8x1xi1>
    %154 = vector.broadcast %153 : vector<8x1xi1> to vector<8x128xi1>
    %155 = arith.select %154, %142, %81 : vector<8x128xi1>, vector<8x128xf32>
    %156 = vector.shape_cast %146 : vector<8x1xi1> to vector<8x1xi1>
    %157 = vector.broadcast %156 : vector<8x1xi1> to vector<8x128xi1>
    %158 = arith.select %157, %140, %84 : vector<8x128xi1>, vector<8x128xf32>
    %c16 = arith.constant 16 : index
    %c0_34 = arith.constant 0 : index
    %159 = vector.load %arg9[%c16, %c0_34] : memref<64x1024xf32, #tpu.memory_space<vmem>>, vector<8x512xf32>
    %160 = arith.truncf %149 : vector<8x128xf32> to vector<8x128xbf16>
    %cst_35 = arith.constant dense<0.000000e+00> : vector<8x512xf32>
    %161 = tpu.matmul %160, %7, %cst_35 {dimension_numbers = #tpu.dot_dimension_numbers<[1], [0], [0], [1], [0, 0, 1, 1], [], []>} : vector<8x128xbf16>, vector<128x512xbf16>, vector<8x512xf32> -> vector<8x512xf32>
    %162 = arith.addf %159, %161 : vector<8x512xf32>
    %c40 = arith.constant 40 : index
    %c512_36 = arith.constant 512 : index
    %163 = vector.load %arg9[%c40, %c512_36] : memref<64x1024xf32, #tpu.memory_space<vmem>>, vector<8x512xf32>
    %164 = arith.truncf %155 : vector<8x128xf32> to vector<8x128xbf16>
    %cst_37 = arith.constant dense<0.000000e+00> : vector<8x512xf32>
    %165 = tpu.matmul %164, %8, %cst_37 {dimension_numbers = #tpu.dot_dimension_numbers<[1], [0], [0], [1], [0, 0, 1, 1], [], []>} : vector<8x128xbf16>, vector<128x512xbf16>, vector<8x512xf32> -> vector<8x512xf32>
    %166 = arith.addf %163, %165 : vector<8x512xf32>
    %167 = vector.extract_strided_slice %162 {offsets = [0, 0], sizes = [8, 128], strides = [1, 1]} : vector<8x512xf32> to vector<8x128xf32>
    %168 = arith.negf %167 : vector<8x128xf32>
    %169 = math.exp %168 : vector<8x128xf32>
    %cst_38 = arith.constant 1.000000e+00 : f32
    %170 = vector.broadcast %cst_38 : f32 to vector<8x128xf32>
    %171 = arith.addf %170, %169 : vector<8x128xf32>
    %172 = arith.divf %170, %171 : vector<8x128xf32>
    %173 = vector.extract_strided_slice %162 {offsets = [0, 128], sizes = [8, 128], strides = [1, 1]} : vector<8x512xf32> to vector<8x128xf32>
    %174 = arith.negf %173 : vector<8x128xf32>
    %175 = math.exp %174 : vector<8x128xf32>
    %cst_39 = arith.constant 1.000000e+00 : f32
    %176 = vector.broadcast %cst_39 : f32 to vector<8x128xf32>
    %177 = arith.addf %176, %175 : vector<8x128xf32>
    %178 = arith.divf %176, %177 : vector<8x128xf32>
    %179 = vector.extract_strided_slice %162 {offsets = [0, 256], sizes = [8, 128], strides = [1, 1]} : vector<8x512xf32> to vector<8x128xf32>
    %180 = math.tanh %179 : vector<8x128xf32>
    %181 = vector.extract_strided_slice %162 {offsets = [0, 384], sizes = [8, 128], strides = [1, 1]} : vector<8x512xf32> to vector<8x128xf32>
    %182 = arith.negf %181 : vector<8x128xf32>
    %183 = math.exp %182 : vector<8x128xf32>
    %cst_40 = arith.constant 1.000000e+00 : f32
    %184 = vector.broadcast %cst_40 : f32 to vector<8x128xf32>
    %185 = arith.addf %184, %183 : vector<8x128xf32>
    %186 = arith.divf %184, %185 : vector<8x128xf32>
    %187 = arith.mulf %178, %152 : vector<8x128xf32>
    %188 = arith.mulf %172, %180 : vector<8x128xf32>
    %189 = arith.addf %187, %188 : vector<8x128xf32>
    %190 = math.tanh %189 : vector<8x128xf32>
    %191 = arith.mulf %186, %190 : vector<8x128xf32>
    %192 = vector.extract_strided_slice %166 {offsets = [0, 0], sizes = [8, 128], strides = [1, 1]} : vector<8x512xf32> to vector<8x128xf32>
    %193 = arith.negf %192 : vector<8x128xf32>
    %194 = math.exp %193 : vector<8x128xf32>
    %cst_41 = arith.constant 1.000000e+00 : f32
    %195 = vector.broadcast %cst_41 : f32 to vector<8x128xf32>
    %196 = arith.addf %195, %194 : vector<8x128xf32>
    %197 = arith.divf %195, %196 : vector<8x128xf32>
    %198 = vector.extract_strided_slice %166 {offsets = [0, 128], sizes = [8, 128], strides = [1, 1]} : vector<8x512xf32> to vector<8x128xf32>
    %199 = arith.negf %198 : vector<8x128xf32>
    %200 = math.exp %199 : vector<8x128xf32>
    %cst_42 = arith.constant 1.000000e+00 : f32
    %201 = vector.broadcast %cst_42 : f32 to vector<8x128xf32>
    %202 = arith.addf %201, %200 : vector<8x128xf32>
    %203 = arith.divf %201, %202 : vector<8x128xf32>
    %204 = vector.extract_strided_slice %166 {offsets = [0, 256], sizes = [8, 128], strides = [1, 1]} : vector<8x512xf32> to vector<8x128xf32>
    %205 = math.tanh %204 : vector<8x128xf32>
    %206 = vector.extract_strided_slice %166 {offsets = [0, 384], sizes = [8, 128], strides = [1, 1]} : vector<8x512xf32> to vector<8x128xf32>
    %207 = arith.negf %206 : vector<8x128xf32>
    %208 = math.exp %207 : vector<8x128xf32>
    %cst_43 = arith.constant 1.000000e+00 : f32
    %209 = vector.broadcast %cst_43 : f32 to vector<8x128xf32>
    %210 = arith.addf %209, %208 : vector<8x128xf32>
    %211 = arith.divf %209, %210 : vector<8x128xf32>
    %212 = arith.mulf %203, %158 : vector<8x128xf32>
    %213 = arith.mulf %197, %205 : vector<8x128xf32>
    %214 = arith.addf %212, %213 : vector<8x128xf32>
    %215 = math.tanh %214 : vector<8x128xf32>
    %216 = arith.mulf %211, %215 : vector<8x128xf32>
    %c2_i32 = arith.constant 2 : i32
    %217 = vector.broadcast %c2_i32 : i32 to vector<8x1xi32>
    %218 = arith.cmpi sgt, %9, %217 : vector<8x1xi32>
    %c5_i32 = arith.constant 5 : i32
    %219 = vector.broadcast %c5_i32 : i32 to vector<8x1xi32>
    %220 = arith.cmpi sgt, %9, %219 : vector<8x1xi32>
    %221 = vector.shape_cast %218 : vector<8x1xi1> to vector<8x1xi1>
    %222 = vector.broadcast %221 : vector<8x1xi1> to vector<8x128xi1>
    %223 = arith.select %222, %191, %149 : vector<8x128xi1>, vector<8x128xf32>
    %224 = vector.shape_cast %218 : vector<8x1xi1> to vector<8x1xi1>
    %225 = vector.broadcast %224 : vector<8x1xi1> to vector<8x128xi1>
    %226 = arith.select %225, %189, %152 : vector<8x128xi1>, vector<8x128xf32>
    %227 = vector.shape_cast %220 : vector<8x1xi1> to vector<8x1xi1>
    %228 = vector.broadcast %227 : vector<8x1xi1> to vector<8x128xi1>
    %229 = arith.select %228, %216, %155 : vector<8x128xi1>, vector<8x128xf32>
    %230 = vector.shape_cast %220 : vector<8x1xi1> to vector<8x1xi1>
    %231 = vector.broadcast %230 : vector<8x1xi1> to vector<8x128xi1>
    %232 = arith.select %231, %214, %158 : vector<8x128xi1>, vector<8x128xf32>
    %c24 = arith.constant 24 : index
    %c0_44 = arith.constant 0 : index
    %233 = vector.load %arg9[%c24, %c0_44] : memref<64x1024xf32, #tpu.memory_space<vmem>>, vector<8x512xf32>
    %234 = arith.truncf %223 : vector<8x128xf32> to vector<8x128xbf16>
    %cst_45 = arith.constant dense<0.000000e+00> : vector<8x512xf32>
    %235 = tpu.matmul %234, %7, %cst_45 {dimension_numbers = #tpu.dot_dimension_numbers<[1], [0], [0], [1], [0, 0, 1, 1], [], []>} : vector<8x128xbf16>, vector<128x512xbf16>, vector<8x512xf32> -> vector<8x512xf32>
    %236 = arith.addf %233, %235 : vector<8x512xf32>
    %c32 = arith.constant 32 : index
    %c512_46 = arith.constant 512 : index
    %237 = vector.load %arg9[%c32, %c512_46] : memref<64x1024xf32, #tpu.memory_space<vmem>>, vector<8x512xf32>
    %238 = arith.truncf %229 : vector<8x128xf32> to vector<8x128xbf16>
    %cst_47 = arith.constant dense<0.000000e+00> : vector<8x512xf32>
    %239 = tpu.matmul %238, %8, %cst_47 {dimension_numbers = #tpu.dot_dimension_numbers<[1], [0], [0], [1], [0, 0, 1, 1], [], []>} : vector<8x128xbf16>, vector<128x512xbf16>, vector<8x512xf32> -> vector<8x512xf32>
    %240 = arith.addf %237, %239 : vector<8x512xf32>
    %241 = vector.extract_strided_slice %236 {offsets = [0, 0], sizes = [8, 128], strides = [1, 1]} : vector<8x512xf32> to vector<8x128xf32>
    %242 = arith.negf %241 : vector<8x128xf32>
    %243 = math.exp %242 : vector<8x128xf32>
    %cst_48 = arith.constant 1.000000e+00 : f32
    %244 = vector.broadcast %cst_48 : f32 to vector<8x128xf32>
    %245 = arith.addf %244, %243 : vector<8x128xf32>
    %246 = arith.divf %244, %245 : vector<8x128xf32>
    %247 = vector.extract_strided_slice %236 {offsets = [0, 128], sizes = [8, 128], strides = [1, 1]} : vector<8x512xf32> to vector<8x128xf32>
    %248 = arith.negf %247 : vector<8x128xf32>
    %249 = math.exp %248 : vector<8x128xf32>
    %cst_49 = arith.constant 1.000000e+00 : f32
    %250 = vector.broadcast %cst_49 : f32 to vector<8x128xf32>
    %251 = arith.addf %250, %249 : vector<8x128xf32>
    %252 = arith.divf %250, %251 : vector<8x128xf32>
    %253 = vector.extract_strided_slice %236 {offsets = [0, 256], sizes = [8, 128], strides = [1, 1]} : vector<8x512xf32> to vector<8x128xf32>
    %254 = math.tanh %253 : vector<8x128xf32>
    %255 = vector.extract_strided_slice %236 {offsets = [0, 384], sizes = [8, 128], strides = [1, 1]} : vector<8x512xf32> to vector<8x128xf32>
    %256 = arith.negf %255 : vector<8x128xf32>
    %257 = math.exp %256 : vector<8x128xf32>
    %cst_50 = arith.constant 1.000000e+00 : f32
    %258 = vector.broadcast %cst_50 : f32 to vector<8x128xf32>
    %259 = arith.addf %258, %257 : vector<8x128xf32>
    %260 = arith.divf %258, %259 : vector<8x128xf32>
    %261 = arith.mulf %252, %226 : vector<8x128xf32>
    %262 = arith.mulf %246, %254 : vector<8x128xf32>
    %263 = arith.addf %261, %262 : vector<8x128xf32>
    %264 = math.tanh %263 : vector<8x128xf32>
    %265 = arith.mulf %260, %264 : vector<8x128xf32>
    %266 = vector.extract_strided_slice %240 {offsets = [0, 0], sizes = [8, 128], strides = [1, 1]} : vector<8x512xf32> to vector<8x128xf32>
    %267 = arith.negf %266 : vector<8x128xf32>
    %268 = math.exp %267 : vector<8x128xf32>
    %cst_51 = arith.constant 1.000000e+00 : f32
    %269 = vector.broadcast %cst_51 : f32 to vector<8x128xf32>
    %270 = arith.addf %269, %268 : vector<8x128xf32>
    %271 = arith.divf %269, %270 : vector<8x128xf32>
    %272 = vector.extract_strided_slice %240 {offsets = [0, 128], sizes = [8, 128], strides = [1, 1]} : vector<8x512xf32> to vector<8x128xf32>
    %273 = arith.negf %272 : vector<8x128xf32>
    %274 = math.exp %273 : vector<8x128xf32>
    %cst_52 = arith.constant 1.000000e+00 : f32
    %275 = vector.broadcast %cst_52 : f32 to vector<8x128xf32>
    %276 = arith.addf %275, %274 : vector<8x128xf32>
    %277 = arith.divf %275, %276 : vector<8x128xf32>
    %278 = vector.extract_strided_slice %240 {offsets = [0, 256], sizes = [8, 128], strides = [1, 1]} : vector<8x512xf32> to vector<8x128xf32>
    %279 = math.tanh %278 : vector<8x128xf32>
    %280 = vector.extract_strided_slice %240 {offsets = [0, 384], sizes = [8, 128], strides = [1, 1]} : vector<8x512xf32> to vector<8x128xf32>
    %281 = arith.negf %280 : vector<8x128xf32>
    %282 = math.exp %281 : vector<8x128xf32>
    %cst_53 = arith.constant 1.000000e+00 : f32
    %283 = vector.broadcast %cst_53 : f32 to vector<8x128xf32>
    %284 = arith.addf %283, %282 : vector<8x128xf32>
    %285 = arith.divf %283, %284 : vector<8x128xf32>
    %286 = arith.mulf %277, %232 : vector<8x128xf32>
    %287 = arith.mulf %271, %279 : vector<8x128xf32>
    %288 = arith.addf %286, %287 : vector<8x128xf32>
    %289 = math.tanh %288 : vector<8x128xf32>
    %290 = arith.mulf %285, %289 : vector<8x128xf32>
    %c3_i32 = arith.constant 3 : i32
    %291 = vector.broadcast %c3_i32 : i32 to vector<8x1xi32>
    %292 = arith.cmpi sgt, %9, %291 : vector<8x1xi32>
    %c4_i32 = arith.constant 4 : i32
    %293 = vector.broadcast %c4_i32 : i32 to vector<8x1xi32>
    %294 = arith.cmpi sgt, %9, %293 : vector<8x1xi32>
    %295 = vector.shape_cast %292 : vector<8x1xi1> to vector<8x1xi1>
    %296 = vector.broadcast %295 : vector<8x1xi1> to vector<8x128xi1>
    %297 = arith.select %296, %265, %223 : vector<8x128xi1>, vector<8x128xf32>
    %298 = vector.shape_cast %292 : vector<8x1xi1> to vector<8x1xi1>
    %299 = vector.broadcast %298 : vector<8x1xi1> to vector<8x128xi1>
    %300 = arith.select %299, %263, %226 : vector<8x128xi1>, vector<8x128xf32>
    %301 = vector.shape_cast %294 : vector<8x1xi1> to vector<8x1xi1>
    %302 = vector.broadcast %301 : vector<8x1xi1> to vector<8x128xi1>
    %303 = arith.select %302, %290, %229 : vector<8x128xi1>, vector<8x128xf32>
    %304 = vector.shape_cast %294 : vector<8x1xi1> to vector<8x1xi1>
    %305 = vector.broadcast %304 : vector<8x1xi1> to vector<8x128xi1>
    %306 = arith.select %305, %288, %232 : vector<8x128xi1>, vector<8x128xf32>
    %c32_54 = arith.constant 32 : index
    %c0_55 = arith.constant 0 : index
    %307 = vector.load %arg9[%c32_54, %c0_55] : memref<64x1024xf32, #tpu.memory_space<vmem>>, vector<8x512xf32>
    %308 = arith.truncf %297 : vector<8x128xf32> to vector<8x128xbf16>
    %cst_56 = arith.constant dense<0.000000e+00> : vector<8x512xf32>
    %309 = tpu.matmul %308, %7, %cst_56 {dimension_numbers = #tpu.dot_dimension_numbers<[1], [0], [0], [1], [0, 0, 1, 1], [], []>} : vector<8x128xbf16>, vector<128x512xbf16>, vector<8x512xf32> -> vector<8x512xf32>
    %310 = arith.addf %307, %309 : vector<8x512xf32>
    %c24_57 = arith.constant 24 : index
    %c512_58 = arith.constant 512 : index
    %311 = vector.load %arg9[%c24_57, %c512_58] : memref<64x1024xf32, #tpu.memory_space<vmem>>, vector<8x512xf32>
    %312 = arith.truncf %303 : vector<8x128xf32> to vector<8x128xbf16>
    %cst_59 = arith.constant dense<0.000000e+00> : vector<8x512xf32>
    %313 = tpu.matmul %312, %8, %cst_59 {dimension_numbers = #tpu.dot_dimension_numbers<[1], [0], [0], [1], [0, 0, 1, 1], [], []>} : vector<8x128xbf16>, vector<128x512xbf16>, vector<8x512xf32> -> vector<8x512xf32>
    %314 = arith.addf %311, %313 : vector<8x512xf32>
    %315 = vector.extract_strided_slice %310 {offsets = [0, 0], sizes = [8, 128], strides = [1, 1]} : vector<8x512xf32> to vector<8x128xf32>
    %316 = arith.negf %315 : vector<8x128xf32>
    %317 = math.exp %316 : vector<8x128xf32>
    %cst_60 = arith.constant 1.000000e+00 : f32
    %318 = vector.broadcast %cst_60 : f32 to vector<8x128xf32>
    %319 = arith.addf %318, %317 : vector<8x128xf32>
    %320 = arith.divf %318, %319 : vector<8x128xf32>
    %321 = vector.extract_strided_slice %310 {offsets = [0, 128], sizes = [8, 128], strides = [1, 1]} : vector<8x512xf32> to vector<8x128xf32>
    %322 = arith.negf %321 : vector<8x128xf32>
    %323 = math.exp %322 : vector<8x128xf32>
    %cst_61 = arith.constant 1.000000e+00 : f32
    %324 = vector.broadcast %cst_61 : f32 to vector<8x128xf32>
    %325 = arith.addf %324, %323 : vector<8x128xf32>
    %326 = arith.divf %324, %325 : vector<8x128xf32>
    %327 = vector.extract_strided_slice %310 {offsets = [0, 256], sizes = [8, 128], strides = [1, 1]} : vector<8x512xf32> to vector<8x128xf32>
    %328 = math.tanh %327 : vector<8x128xf32>
    %329 = vector.extract_strided_slice %310 {offsets = [0, 384], sizes = [8, 128], strides = [1, 1]} : vector<8x512xf32> to vector<8x128xf32>
    %330 = arith.negf %329 : vector<8x128xf32>
    %331 = math.exp %330 : vector<8x128xf32>
    %cst_62 = arith.constant 1.000000e+00 : f32
    %332 = vector.broadcast %cst_62 : f32 to vector<8x128xf32>
    %333 = arith.addf %332, %331 : vector<8x128xf32>
    %334 = arith.divf %332, %333 : vector<8x128xf32>
    %335 = arith.mulf %326, %300 : vector<8x128xf32>
    %336 = arith.mulf %320, %328 : vector<8x128xf32>
    %337 = arith.addf %335, %336 : vector<8x128xf32>
    %338 = math.tanh %337 : vector<8x128xf32>
    %339 = arith.mulf %334, %338 : vector<8x128xf32>
    %340 = vector.extract_strided_slice %314 {offsets = [0, 0], sizes = [8, 128], strides = [1, 1]} : vector<8x512xf32> to vector<8x128xf32>
    %341 = arith.negf %340 : vector<8x128xf32>
    %342 = math.exp %341 : vector<8x128xf32>
    %cst_63 = arith.constant 1.000000e+00 : f32
    %343 = vector.broadcast %cst_63 : f32 to vector<8x128xf32>
    %344 = arith.addf %343, %342 : vector<8x128xf32>
    %345 = arith.divf %343, %344 : vector<8x128xf32>
    %346 = vector.extract_strided_slice %314 {offsets = [0, 128], sizes = [8, 128], strides = [1, 1]} : vector<8x512xf32> to vector<8x128xf32>
    %347 = arith.negf %346 : vector<8x128xf32>
    %348 = math.exp %347 : vector<8x128xf32>
    %cst_64 = arith.constant 1.000000e+00 : f32
    %349 = vector.broadcast %cst_64 : f32 to vector<8x128xf32>
    %350 = arith.addf %349, %348 : vector<8x128xf32>
    %351 = arith.divf %349, %350 : vector<8x128xf32>
    %352 = vector.extract_strided_slice %314 {offsets = [0, 256], sizes = [8, 128], strides = [1, 1]} : vector<8x512xf32> to vector<8x128xf32>
    %353 = math.tanh %352 : vector<8x128xf32>
    %354 = vector.extract_strided_slice %314 {offsets = [0, 384], sizes = [8, 128], strides = [1, 1]} : vector<8x512xf32> to vector<8x128xf32>
    %355 = arith.negf %354 : vector<8x128xf32>
    %356 = math.exp %355 : vector<8x128xf32>
    %cst_65 = arith.constant 1.000000e+00 : f32
    %357 = vector.broadcast %cst_65 : f32 to vector<8x128xf32>
    %358 = arith.addf %357, %356 : vector<8x128xf32>
    %359 = arith.divf %357, %358 : vector<8x128xf32>
    %360 = arith.mulf %351, %306 : vector<8x128xf32>
    %361 = arith.mulf %345, %353 : vector<8x128xf32>
    %362 = arith.addf %360, %361 : vector<8x128xf32>
    %363 = math.tanh %362 : vector<8x128xf32>
    %364 = arith.mulf %359, %363 : vector<8x128xf32>
    %c4_i32_66 = arith.constant 4 : i32
    %365 = vector.broadcast %c4_i32_66 : i32 to vector<8x1xi32>
    %366 = arith.cmpi sgt, %9, %365 : vector<8x1xi32>
    %c3_i32_67 = arith.constant 3 : i32
    %367 = vector.broadcast %c3_i32_67 : i32 to vector<8x1xi32>
    %368 = arith.cmpi sgt, %9, %367 : vector<8x1xi32>
    %369 = vector.shape_cast %366 : vector<8x1xi1> to vector<8x1xi1>
    %370 = vector.broadcast %369 : vector<8x1xi1> to vector<8x128xi1>
    %371 = arith.select %370, %339, %297 : vector<8x128xi1>, vector<8x128xf32>
    %372 = vector.shape_cast %366 : vector<8x1xi1> to vector<8x1xi1>
    %373 = vector.broadcast %372 : vector<8x1xi1> to vector<8x128xi1>
    %374 = arith.select %373, %337, %300 : vector<8x128xi1>, vector<8x128xf32>
    %375 = vector.shape_cast %368 : vector<8x1xi1> to vector<8x1xi1>
    %376 = vector.broadcast %375 : vector<8x1xi1> to vector<8x128xi1>
    %377 = arith.select %376, %364, %303 : vector<8x128xi1>, vector<8x128xf32>
    %378 = vector.shape_cast %368 : vector<8x1xi1> to vector<8x1xi1>
    %379 = vector.broadcast %378 : vector<8x1xi1> to vector<8x128xi1>
    %380 = arith.select %379, %362, %306 : vector<8x128xi1>, vector<8x128xf32>
    %c40_68 = arith.constant 40 : index
    %c0_69 = arith.constant 0 : index
    %381 = vector.load %arg9[%c40_68, %c0_69] : memref<64x1024xf32, #tpu.memory_space<vmem>>, vector<8x512xf32>
    %382 = arith.truncf %371 : vector<8x128xf32> to vector<8x128xbf16>
    %cst_70 = arith.constant dense<0.000000e+00> : vector<8x512xf32>
    %383 = tpu.matmul %382, %7, %cst_70 {dimension_numbers = #tpu.dot_dimension_numbers<[1], [0], [0], [1], [0, 0, 1, 1], [], []>} : vector<8x128xbf16>, vector<128x512xbf16>, vector<8x512xf32> -> vector<8x512xf32>
    %384 = arith.addf %381, %383 : vector<8x512xf32>
    %c16_71 = arith.constant 16 : index
    %c512_72 = arith.constant 512 : index
    %385 = vector.load %arg9[%c16_71, %c512_72] : memref<64x1024xf32, #tpu.memory_space<vmem>>, vector<8x512xf32>
    %386 = arith.truncf %377 : vector<8x128xf32> to vector<8x128xbf16>
    %cst_73 = arith.constant dense<0.000000e+00> : vector<8x512xf32>
    %387 = tpu.matmul %386, %8, %cst_73 {dimension_numbers = #tpu.dot_dimension_numbers<[1], [0], [0], [1], [0, 0, 1, 1], [], []>} : vector<8x128xbf16>, vector<128x512xbf16>, vector<8x512xf32> -> vector<8x512xf32>
    %388 = arith.addf %385, %387 : vector<8x512xf32>
    %389 = vector.extract_strided_slice %384 {offsets = [0, 0], sizes = [8, 128], strides = [1, 1]} : vector<8x512xf32> to vector<8x128xf32>
    %390 = arith.negf %389 : vector<8x128xf32>
    %391 = math.exp %390 : vector<8x128xf32>
    %cst_74 = arith.constant 1.000000e+00 : f32
    %392 = vector.broadcast %cst_74 : f32 to vector<8x128xf32>
    %393 = arith.addf %392, %391 : vector<8x128xf32>
    %394 = arith.divf %392, %393 : vector<8x128xf32>
    %395 = vector.extract_strided_slice %384 {offsets = [0, 128], sizes = [8, 128], strides = [1, 1]} : vector<8x512xf32> to vector<8x128xf32>
    %396 = arith.negf %395 : vector<8x128xf32>
    %397 = math.exp %396 : vector<8x128xf32>
    %cst_75 = arith.constant 1.000000e+00 : f32
    %398 = vector.broadcast %cst_75 : f32 to vector<8x128xf32>
    %399 = arith.addf %398, %397 : vector<8x128xf32>
    %400 = arith.divf %398, %399 : vector<8x128xf32>
    %401 = vector.extract_strided_slice %384 {offsets = [0, 256], sizes = [8, 128], strides = [1, 1]} : vector<8x512xf32> to vector<8x128xf32>
    %402 = math.tanh %401 : vector<8x128xf32>
    %403 = vector.extract_strided_slice %384 {offsets = [0, 384], sizes = [8, 128], strides = [1, 1]} : vector<8x512xf32> to vector<8x128xf32>
    %404 = arith.negf %403 : vector<8x128xf32>
    %405 = math.exp %404 : vector<8x128xf32>
    %cst_76 = arith.constant 1.000000e+00 : f32
    %406 = vector.broadcast %cst_76 : f32 to vector<8x128xf32>
    %407 = arith.addf %406, %405 : vector<8x128xf32>
    %408 = arith.divf %406, %407 : vector<8x128xf32>
    %409 = arith.mulf %400, %374 : vector<8x128xf32>
    %410 = arith.mulf %394, %402 : vector<8x128xf32>
    %411 = arith.addf %409, %410 : vector<8x128xf32>
    %412 = math.tanh %411 : vector<8x128xf32>
    %413 = arith.mulf %408, %412 : vector<8x128xf32>
    %414 = vector.extract_strided_slice %388 {offsets = [0, 0], sizes = [8, 128], strides = [1, 1]} : vector<8x512xf32> to vector<8x128xf32>
    %415 = arith.negf %414 : vector<8x128xf32>
    %416 = math.exp %415 : vector<8x128xf32>
    %cst_77 = arith.constant 1.000000e+00 : f32
    %417 = vector.broadcast %cst_77 : f32 to vector<8x128xf32>
    %418 = arith.addf %417, %416 : vector<8x128xf32>
    %419 = arith.divf %417, %418 : vector<8x128xf32>
    %420 = vector.extract_strided_slice %388 {offsets = [0, 128], sizes = [8, 128], strides = [1, 1]} : vector<8x512xf32> to vector<8x128xf32>
    %421 = arith.negf %420 : vector<8x128xf32>
    %422 = math.exp %421 : vector<8x128xf32>
    %cst_78 = arith.constant 1.000000e+00 : f32
    %423 = vector.broadcast %cst_78 : f32 to vector<8x128xf32>
    %424 = arith.addf %423, %422 : vector<8x128xf32>
    %425 = arith.divf %423, %424 : vector<8x128xf32>
    %426 = vector.extract_strided_slice %388 {offsets = [0, 256], sizes = [8, 128], strides = [1, 1]} : vector<8x512xf32> to vector<8x128xf32>
    %427 = math.tanh %426 : vector<8x128xf32>
    %428 = vector.extract_strided_slice %388 {offsets = [0, 384], sizes = [8, 128], strides = [1, 1]} : vector<8x512xf32> to vector<8x128xf32>
    %429 = arith.negf %428 : vector<8x128xf32>
    %430 = math.exp %429 : vector<8x128xf32>
    %cst_79 = arith.constant 1.000000e+00 : f32
    %431 = vector.broadcast %cst_79 : f32 to vector<8x128xf32>
    %432 = arith.addf %431, %430 : vector<8x128xf32>
    %433 = arith.divf %431, %432 : vector<8x128xf32>
    %434 = arith.mulf %425, %380 : vector<8x128xf32>
    %435 = arith.mulf %419, %427 : vector<8x128xf32>
    %436 = arith.addf %434, %435 : vector<8x128xf32>
    %437 = math.tanh %436 : vector<8x128xf32>
    %438 = arith.mulf %433, %437 : vector<8x128xf32>
    %c5_i32_80 = arith.constant 5 : i32
    %439 = vector.broadcast %c5_i32_80 : i32 to vector<8x1xi32>
    %440 = arith.cmpi sgt, %9, %439 : vector<8x1xi32>
    %c2_i32_81 = arith.constant 2 : i32
    %441 = vector.broadcast %c2_i32_81 : i32 to vector<8x1xi32>
    %442 = arith.cmpi sgt, %9, %441 : vector<8x1xi32>
    %443 = vector.shape_cast %440 : vector<8x1xi1> to vector<8x1xi1>
    %444 = vector.broadcast %443 : vector<8x1xi1> to vector<8x128xi1>
    %445 = arith.select %444, %413, %371 : vector<8x128xi1>, vector<8x128xf32>
    %446 = vector.shape_cast %440 : vector<8x1xi1> to vector<8x1xi1>
    %447 = vector.broadcast %446 : vector<8x1xi1> to vector<8x128xi1>
    %448 = arith.select %447, %411, %374 : vector<8x128xi1>, vector<8x128xf32>
    %449 = vector.shape_cast %442 : vector<8x1xi1> to vector<8x1xi1>
    %450 = vector.broadcast %449 : vector<8x1xi1> to vector<8x128xi1>
    %451 = arith.select %450, %438, %377 : vector<8x128xi1>, vector<8x128xf32>
    %452 = vector.shape_cast %442 : vector<8x1xi1> to vector<8x1xi1>
    %453 = vector.broadcast %452 : vector<8x1xi1> to vector<8x128xi1>
    %454 = arith.select %453, %436, %380 : vector<8x128xi1>, vector<8x128xf32>
    %c48_82 = arith.constant 48 : index
    %c0_83 = arith.constant 0 : index
    %455 = vector.load %arg9[%c48_82, %c0_83] : memref<64x1024xf32, #tpu.memory_space<vmem>>, vector<8x512xf32>
    %456 = arith.truncf %445 : vector<8x128xf32> to vector<8x128xbf16>
    %cst_84 = arith.constant dense<0.000000e+00> : vector<8x512xf32>
    %457 = tpu.matmul %456, %7, %cst_84 {dimension_numbers = #tpu.dot_dimension_numbers<[1], [0], [0], [1], [0, 0, 1, 1], [], []>} : vector<8x128xbf16>, vector<128x512xbf16>, vector<8x512xf32> -> vector<8x512xf32>
    %458 = arith.addf %455, %457 : vector<8x512xf32>
    %c8_85 = arith.constant 8 : index
    %c512_86 = arith.constant 512 : index
    %459 = vector.load %arg9[%c8_85, %c512_86] : memref<64x1024xf32, #tpu.memory_space<vmem>>, vector<8x512xf32>
    %460 = arith.truncf %451 : vector<8x128xf32> to vector<8x128xbf16>
    %cst_87 = arith.constant dense<0.000000e+00> : vector<8x512xf32>
    %461 = tpu.matmul %460, %8, %cst_87 {dimension_numbers = #tpu.dot_dimension_numbers<[1], [0], [0], [1], [0, 0, 1, 1], [], []>} : vector<8x128xbf16>, vector<128x512xbf16>, vector<8x512xf32> -> vector<8x512xf32>
    %462 = arith.addf %459, %461 : vector<8x512xf32>
    %463 = vector.extract_strided_slice %458 {offsets = [0, 0], sizes = [8, 128], strides = [1, 1]} : vector<8x512xf32> to vector<8x128xf32>
    %464 = arith.negf %463 : vector<8x128xf32>
    %465 = math.exp %464 : vector<8x128xf32>
    %cst_88 = arith.constant 1.000000e+00 : f32
    %466 = vector.broadcast %cst_88 : f32 to vector<8x128xf32>
    %467 = arith.addf %466, %465 : vector<8x128xf32>
    %468 = arith.divf %466, %467 : vector<8x128xf32>
    %469 = vector.extract_strided_slice %458 {offsets = [0, 128], sizes = [8, 128], strides = [1, 1]} : vector<8x512xf32> to vector<8x128xf32>
    %470 = arith.negf %469 : vector<8x128xf32>
    %471 = math.exp %470 : vector<8x128xf32>
    %cst_89 = arith.constant 1.000000e+00 : f32
    %472 = vector.broadcast %cst_89 : f32 to vector<8x128xf32>
    %473 = arith.addf %472, %471 : vector<8x128xf32>
    %474 = arith.divf %472, %473 : vector<8x128xf32>
    %475 = vector.extract_strided_slice %458 {offsets = [0, 256], sizes = [8, 128], strides = [1, 1]} : vector<8x512xf32> to vector<8x128xf32>
    %476 = math.tanh %475 : vector<8x128xf32>
    %477 = vector.extract_strided_slice %458 {offsets = [0, 384], sizes = [8, 128], strides = [1, 1]} : vector<8x512xf32> to vector<8x128xf32>
    %478 = arith.negf %477 : vector<8x128xf32>
    %479 = math.exp %478 : vector<8x128xf32>
    %cst_90 = arith.constant 1.000000e+00 : f32
    %480 = vector.broadcast %cst_90 : f32 to vector<8x128xf32>
    %481 = arith.addf %480, %479 : vector<8x128xf32>
    %482 = arith.divf %480, %481 : vector<8x128xf32>
    %483 = arith.mulf %474, %448 : vector<8x128xf32>
    %484 = arith.mulf %468, %476 : vector<8x128xf32>
    %485 = arith.addf %483, %484 : vector<8x128xf32>
    %486 = math.tanh %485 : vector<8x128xf32>
    %487 = arith.mulf %482, %486 : vector<8x128xf32>
    %488 = vector.extract_strided_slice %462 {offsets = [0, 0], sizes = [8, 128], strides = [1, 1]} : vector<8x512xf32> to vector<8x128xf32>
    %489 = arith.negf %488 : vector<8x128xf32>
    %490 = math.exp %489 : vector<8x128xf32>
    %cst_91 = arith.constant 1.000000e+00 : f32
    %491 = vector.broadcast %cst_91 : f32 to vector<8x128xf32>
    %492 = arith.addf %491, %490 : vector<8x128xf32>
    %493 = arith.divf %491, %492 : vector<8x128xf32>
    %494 = vector.extract_strided_slice %462 {offsets = [0, 128], sizes = [8, 128], strides = [1, 1]} : vector<8x512xf32> to vector<8x128xf32>
    %495 = arith.negf %494 : vector<8x128xf32>
    %496 = math.exp %495 : vector<8x128xf32>
    %cst_92 = arith.constant 1.000000e+00 : f32
    %497 = vector.broadcast %cst_92 : f32 to vector<8x128xf32>
    %498 = arith.addf %497, %496 : vector<8x128xf32>
    %499 = arith.divf %497, %498 : vector<8x128xf32>
    %500 = vector.extract_strided_slice %462 {offsets = [0, 256], sizes = [8, 128], strides = [1, 1]} : vector<8x512xf32> to vector<8x128xf32>
    %501 = math.tanh %500 : vector<8x128xf32>
    %502 = vector.extract_strided_slice %462 {offsets = [0, 384], sizes = [8, 128], strides = [1, 1]} : vector<8x512xf32> to vector<8x128xf32>
    %503 = arith.negf %502 : vector<8x128xf32>
    %504 = math.exp %503 : vector<8x128xf32>
    %cst_93 = arith.constant 1.000000e+00 : f32
    %505 = vector.broadcast %cst_93 : f32 to vector<8x128xf32>
    %506 = arith.addf %505, %504 : vector<8x128xf32>
    %507 = arith.divf %505, %506 : vector<8x128xf32>
    %508 = arith.mulf %499, %454 : vector<8x128xf32>
    %509 = arith.mulf %493, %501 : vector<8x128xf32>
    %510 = arith.addf %508, %509 : vector<8x128xf32>
    %511 = math.tanh %510 : vector<8x128xf32>
    %512 = arith.mulf %507, %511 : vector<8x128xf32>
    %c6_i32_94 = arith.constant 6 : i32
    %513 = vector.broadcast %c6_i32_94 : i32 to vector<8x1xi32>
    %514 = arith.cmpi sgt, %9, %513 : vector<8x1xi32>
    %c1_i32_95 = arith.constant 1 : i32
    %515 = vector.broadcast %c1_i32_95 : i32 to vector<8x1xi32>
    %516 = arith.cmpi sgt, %9, %515 : vector<8x1xi32>
    %517 = vector.shape_cast %514 : vector<8x1xi1> to vector<8x1xi1>
    %518 = vector.broadcast %517 : vector<8x1xi1> to vector<8x128xi1>
    %519 = arith.select %518, %487, %445 : vector<8x128xi1>, vector<8x128xf32>
    %520 = vector.shape_cast %514 : vector<8x1xi1> to vector<8x1xi1>
    %521 = vector.broadcast %520 : vector<8x1xi1> to vector<8x128xi1>
    %522 = arith.select %521, %485, %448 : vector<8x128xi1>, vector<8x128xf32>
    %523 = vector.shape_cast %516 : vector<8x1xi1> to vector<8x1xi1>
    %524 = vector.broadcast %523 : vector<8x1xi1> to vector<8x128xi1>
    %525 = arith.select %524, %512, %451 : vector<8x128xi1>, vector<8x128xf32>
    %526 = vector.shape_cast %516 : vector<8x1xi1> to vector<8x1xi1>
    %527 = vector.broadcast %526 : vector<8x1xi1> to vector<8x128xi1>
    %528 = arith.select %527, %510, %454 : vector<8x128xi1>, vector<8x128xf32>
    %c56_96 = arith.constant 56 : index
    %c0_97 = arith.constant 0 : index
    %529 = vector.load %arg9[%c56_96, %c0_97] : memref<64x1024xf32, #tpu.memory_space<vmem>>, vector<8x512xf32>
    %530 = arith.truncf %519 : vector<8x128xf32> to vector<8x128xbf16>
    %cst_98 = arith.constant dense<0.000000e+00> : vector<8x512xf32>
    %531 = tpu.matmul %530, %7, %cst_98 {dimension_numbers = #tpu.dot_dimension_numbers<[1], [0], [0], [1], [0, 0, 1, 1], [], []>} : vector<8x128xbf16>, vector<128x512xbf16>, vector<8x512xf32> -> vector<8x512xf32>
    %532 = arith.addf %529, %531 : vector<8x512xf32>
    %c0_99 = arith.constant 0 : index
    %c512_100 = arith.constant 512 : index
    %533 = vector.load %arg9[%c0_99, %c512_100] : memref<64x1024xf32, #tpu.memory_space<vmem>>, vector<8x512xf32>
    %534 = arith.truncf %525 : vector<8x128xf32> to vector<8x128xbf16>
    %cst_101 = arith.constant dense<0.000000e+00> : vector<8x512xf32>
    %535 = tpu.matmul %534, %8, %cst_101 {dimension_numbers = #tpu.dot_dimension_numbers<[1], [0], [0], [1], [0, 0, 1, 1], [], []>} : vector<8x128xbf16>, vector<128x512xbf16>, vector<8x512xf32> -> vector<8x512xf32>
    %536 = arith.addf %533, %535 : vector<8x512xf32>
    %537 = vector.extract_strided_slice %532 {offsets = [0, 0], sizes = [8, 128], strides = [1, 1]} : vector<8x512xf32> to vector<8x128xf32>
    %538 = arith.negf %537 : vector<8x128xf32>
    %539 = math.exp %538 : vector<8x128xf32>
    %cst_102 = arith.constant 1.000000e+00 : f32
    %540 = vector.broadcast %cst_102 : f32 to vector<8x128xf32>
    %541 = arith.addf %540, %539 : vector<8x128xf32>
    %542 = arith.divf %540, %541 : vector<8x128xf32>
    %543 = vector.extract_strided_slice %532 {offsets = [0, 128], sizes = [8, 128], strides = [1, 1]} : vector<8x512xf32> to vector<8x128xf32>
    %544 = arith.negf %543 : vector<8x128xf32>
    %545 = math.exp %544 : vector<8x128xf32>
    %cst_103 = arith.constant 1.000000e+00 : f32
    %546 = vector.broadcast %cst_103 : f32 to vector<8x128xf32>
    %547 = arith.addf %546, %545 : vector<8x128xf32>
    %548 = arith.divf %546, %547 : vector<8x128xf32>
    %549 = vector.extract_strided_slice %532 {offsets = [0, 256], sizes = [8, 128], strides = [1, 1]} : vector<8x512xf32> to vector<8x128xf32>
    %550 = math.tanh %549 : vector<8x128xf32>
    %551 = vector.extract_strided_slice %532 {offsets = [0, 384], sizes = [8, 128], strides = [1, 1]} : vector<8x512xf32> to vector<8x128xf32>
    %552 = arith.negf %551 : vector<8x128xf32>
    %553 = math.exp %552 : vector<8x128xf32>
    %cst_104 = arith.constant 1.000000e+00 : f32
    %554 = vector.broadcast %cst_104 : f32 to vector<8x128xf32>
    %555 = arith.addf %554, %553 : vector<8x128xf32>
    %556 = arith.divf %554, %555 : vector<8x128xf32>
    %557 = arith.mulf %548, %522 : vector<8x128xf32>
    %558 = arith.mulf %542, %550 : vector<8x128xf32>
    %559 = arith.addf %557, %558 : vector<8x128xf32>
    %560 = math.tanh %559 : vector<8x128xf32>
    %561 = arith.mulf %556, %560 : vector<8x128xf32>
    %562 = vector.extract_strided_slice %536 {offsets = [0, 0], sizes = [8, 128], strides = [1, 1]} : vector<8x512xf32> to vector<8x128xf32>
    %563 = arith.negf %562 : vector<8x128xf32>
    %564 = math.exp %563 : vector<8x128xf32>
    %cst_105 = arith.constant 1.000000e+00 : f32
    %565 = vector.broadcast %cst_105 : f32 to vector<8x128xf32>
    %566 = arith.addf %565, %564 : vector<8x128xf32>
    %567 = arith.divf %565, %566 : vector<8x128xf32>
    %568 = vector.extract_strided_slice %536 {offsets = [0, 128], sizes = [8, 128], strides = [1, 1]} : vector<8x512xf32> to vector<8x128xf32>
    %569 = arith.negf %568 : vector<8x128xf32>
    %570 = math.exp %569 : vector<8x128xf32>
    %cst_106 = arith.constant 1.000000e+00 : f32
    %571 = vector.broadcast %cst_106 : f32 to vector<8x128xf32>
    %572 = arith.addf %571, %570 : vector<8x128xf32>
    %573 = arith.divf %571, %572 : vector<8x128xf32>
    %574 = vector.extract_strided_slice %536 {offsets = [0, 256], sizes = [8, 128], strides = [1, 1]} : vector<8x512xf32> to vector<8x128xf32>
    %575 = math.tanh %574 : vector<8x128xf32>
    %576 = vector.extract_strided_slice %536 {offsets = [0, 384], sizes = [8, 128], strides = [1, 1]} : vector<8x512xf32> to vector<8x128xf32>
    %577 = arith.negf %576 : vector<8x128xf32>
    %578 = math.exp %577 : vector<8x128xf32>
    %cst_107 = arith.constant 1.000000e+00 : f32
    %579 = vector.broadcast %cst_107 : f32 to vector<8x128xf32>
    %580 = arith.addf %579, %578 : vector<8x128xf32>
    %581 = arith.divf %579, %580 : vector<8x128xf32>
    %582 = arith.mulf %573, %528 : vector<8x128xf32>
    %583 = arith.mulf %567, %575 : vector<8x128xf32>
    %584 = arith.addf %582, %583 : vector<8x128xf32>
    %585 = math.tanh %584 : vector<8x128xf32>
    %586 = arith.mulf %581, %585 : vector<8x128xf32>
    %c7_i32_108 = arith.constant 7 : i32
    %587 = vector.broadcast %c7_i32_108 : i32 to vector<8x1xi32>
    %588 = arith.cmpi sgt, %9, %587 : vector<8x1xi32>
    %c0_i32_109 = arith.constant 0 : i32
    %589 = vector.broadcast %c0_i32_109 : i32 to vector<8x1xi32>
    %590 = arith.cmpi sgt, %9, %589 : vector<8x1xi32>
    %591 = vector.shape_cast %588 : vector<8x1xi1> to vector<8x1xi1>
    %592 = vector.broadcast %591 : vector<8x1xi1> to vector<8x128xi1>
    %593 = arith.select %592, %561, %519 : vector<8x128xi1>, vector<8x128xf32>
    %594 = vector.shape_cast %590 : vector<8x1xi1> to vector<8x1xi1>
    %595 = vector.broadcast %594 : vector<8x1xi1> to vector<8x128xi1>
    %596 = arith.select %595, %586, %525 : vector<8x128xi1>, vector<8x128xf32>
    %597 = tpu.concatenate %593, %596 in 1 : vector<8x128xf32>, vector<8x128xf32> -> vector<8x256xf32>
    %598 = arith.truncf %597 : vector<8x256xf32> to vector<8x256xbf16>
    %c0_110 = arith.constant 0 : index
    %c0_111 = arith.constant 0 : index
    %599 = vector.load %arg6[%c0_110, %c0_111] : memref<256x128xbf16, #tpu.memory_space<vmem>>, vector<256x128xbf16>
    %cst_112 = arith.constant dense<0.000000e+00> : vector<8x128xf32>
    %600 = tpu.matmul %598, %599, %cst_112 {dimension_numbers = #tpu.dot_dimension_numbers<[1], [0], [0], [1], [0, 0, 1, 1], [], []>} : vector<8x256xbf16>, vector<256x128xbf16>, vector<8x128xf32> -> vector<8x128xf32>
    %c0_113 = arith.constant 0 : index
    %c0_114 = arith.constant 0 : index
    %601 = vector.load %arg7[%c0_113, %c0_114] : memref<1x128xf32, #tpu.memory_space<vmem>>, vector<1x128xf32>
    %602 = vector.broadcast %601 : vector<1x128xf32> to vector<8x128xf32>
    %603 = arith.addf %600, %602 : vector<8x128xf32>
    %c0_115 = arith.constant 0 : index
    %c0_116 = arith.constant 0 : index
    %604 = vector.load %arg8[%c0_115, %c0_116] : memref<8x128xf32, #tpu.memory_space<vmem>>, vector<8x128xf32>
    tpu.vector_store %arg8[%c0_115, %c0_116], %603 {strides = array<i32>} : memref<8x128xf32, #tpu.memory_space<vmem>>, vector<8x128xf32>,
    return
  }
}

</mosaic_0001>

<llo_original>
// kernel: rnn_encoder_forward.1
$region0: #{rnn_encoder_forward.1}
  #allocation0 [shape = 'u32[]', space=smem, size = 0x4, offset = 0x4, fixed_abs, tag = 'smem constant byte address 0x4 - core index']
  #allocation1 [shape = 'u32[72,128]{1,0:T(1,128)}', space=vmem, size = 0x9000, scoped, tag = 'internal scratch']
  #allocation2 [shape = 'f32[64,1024]{1,0:T(8,128)}', space=vmem, size = 0x40000, scoped, tag = 'scratch operand']
  %s0 = inlined_call_operand.vmem [shape: bf16[64,128], index: 0, kind: input, shape index: {}]
  %s1 = inlined_call_operand.vmem [shape: s32[8,1], index: 1, kind: input, shape index: {}]
  %s2 = inlined_call_operand.vmem [shape: bf16[128,1024], index: 2, kind: input, shape index: {}]
  %s3 = inlined_call_operand.vmem [shape: f32[1,1024], index: 3, kind: input, shape index: {}]
  %s4 = inlined_call_operand.vmem [shape: bf16[128,512], index: 4, kind: input, shape index: {}]
  %s5 = inlined_call_operand.vmem [shape: bf16[128,512], index: 5, kind: input, shape index: {}]
  %s6 = inlined_call_operand.vmem [shape: bf16[256,128], index: 6, kind: input, shape index: {}]
  %s7 = inlined_call_operand.vmem [shape: f32[1,128], index: 7, kind: input, shape index: {}]
  %s8 = inlined_call_operand.vmem [shape: f32[8,128], index: 8, kind: output, shape index: {}]
  %s9 = sld [smem:[#allocation0]]
  $region42: #{rnn_encoder_forward.1} parent=0
    _
  %s11 = ssub.s32 1, %s9
  %s12 = scalar_select 0, %s11, %s9
  // Predicated region
  $region2: #{rnn_encoder_forward.1} parent=0 // pred_check
    _
  $region3: #{rnn_encoder_forward.1} parent=0 // pred_check_branch
    %14 = sbr.rel (0) target = $region5
  $region4: #{rnn_encoder_forward.1} parent=0 // pred_region
    _
  $region5: #{rnn_encoder_forward.1} parent=0 // pred_fallthru
    _
  // Predicated region
  $region6: #{rnn_encoder_forward.1} parent=0 // pred_check
    _
  $region7: #{rnn_encoder_forward.1} parent=0 // pred_check_branch
    %16 = sbr.rel (0) target = $region9
  $region8: #{rnn_encoder_forward.1} parent=0 // pred_region
    _
  $region9: #{rnn_encoder_forward.1} parent=0 // pred_fallthru
    _
  // Predicated region
  $region10: #{rnn_encoder_forward.1} parent=0 // pred_check
    _
  $region11: #{rnn_encoder_forward.1} parent=0 // pred_check_branch
    %18 = sbr.rel (0) target = $region13
  $region12: #{rnn_encoder_forward.1} parent=0 // pred_region
    _
  $region13: #{rnn_encoder_forward.1} parent=0 // pred_fallthru
    _
  // Predicated region
  $region14: #{rnn_encoder_forward.1} parent=0 // pred_check
    _
  $region15: #{rnn_encoder_forward.1} parent=0 // pred_check_branch
    %20 = sbr.rel (0) target = $region17
  $region16: #{rnn_encoder_forward.1} parent=0 // pred_region
    _
  $region17: #{rnn_encoder_forward.1} parent=0 // pred_fallthru
    _
  // Predicated region
  $region18: #{rnn_encoder_forward.1} parent=0 // pred_check
    _
  $region19: #{rnn_encoder_forward.1} parent=0 // pred_check_branch
    %22 = sbr.rel (0) target = $region21
  $region20: #{rnn_encoder_forward.1} parent=0 // pred_region
    _
  $region21: #{rnn_encoder_forward.1} parent=0 // pred_fallthru
    _
  // Predicated region
  $region22: #{rnn_encoder_forward.1} parent=0 // pred_check
    _
  $region23: #{rnn_encoder_forward.1} parent=0 // pred_check_branch
    %24 = sbr.rel (0) target = $region25
  $region24: #{rnn_encoder_forward.1} parent=0 // pred_region
    _
  $region25: #{rnn_encoder_forward.1} parent=0 // pred_fallthru
    _
  // Predicated region
  $region26: #{rnn_encoder_forward.1} parent=0 // pred_check
    _
  $region27: #{rnn_encoder_forward.1} parent=0 // pred_check_branch
    %26 = sbr.rel (0) target = $region29
  $region28: #{rnn_encoder_forward.1} parent=0 // pred_region
    _
  $region29: #{rnn_encoder_forward.1} parent=0 // pred_fallthru
    _
  // Predicated region
  $region30: #{rnn_encoder_forward.1} parent=0 // pred_check
    _
  $region31: #{rnn_encoder_forward.1} parent=0 // pred_check_branch
    %28 = sbr.rel (0) target = $region33
  $region32: #{rnn_encoder_forward.1} parent=0 // pred_region
    _
  $region33: #{rnn_encoder_forward.1} parent=0 // pred_fallthru
    _
  %v30 = vld [vmem:[%s0] sm:$0xf]
  %v31 = vld [vmem:[%s0 + $0x4] sm:$0xf]
  %v32 = vld [vmem:[%s0 + $0x8] sm:$0xf]
  %v33 = vld [vmem:[%s0 + $0xc] sm:$0xf]
  %v34 = vld [vmem:[%s0 + $0x10] sm:$0xf]
  %v35 = vld [vmem:[%s0 + $0x14] sm:$0xf]
  %v36 = vld [vmem:[%s0 + $0x18] sm:$0xf]
  %v37 = vld [vmem:[%s0 + $0x1c] sm:$0xf]
  %v38 = vld [vmem:[%s2] sm:$0xff]
  %v39 = vld [vmem:[%s2 + $0x8] sm:$0xff]
  %v40 = vld [vmem:[%s2 + $0x10] sm:$0xff]
  %v41 = vld [vmem:[%s2 + $0x18] sm:$0xff]
  %v42 = vld [vmem:[%s2 + $0x20] sm:$0xff]
  %v43 = vld [vmem:[%s2 + $0x28] sm:$0xff]
  %v44 = vld [vmem:[%s2 + $0x30] sm:$0xff]
  %v45 = vld [vmem:[%s2 + $0x38] sm:$0xff]
  %v46 = vld [vmem:[%s2 + $0x40] sm:$0xff]
  %v47 = vld [vmem:[%s2 + $0x48] sm:$0xff]
  %v48 = vld [vmem:[%s2 + $0x50] sm:$0xff]
  %v49 = vld [vmem:[%s2 + $0x58] sm:$0xff]
  %v50 = vld [vmem:[%s2 + $0x60] sm:$0xff]
  %v51 = vld [vmem:[%s2 + $0x68] sm:$0xff]
  %v52 = vld [vmem:[%s2 + $0x70] sm:$0xff]
  %v53 = vld [vmem:[%s2 + $0x78] sm:$0xff]
  %v54 = vld [vmem:[%s2 + $0x80] sm:$0xff]
  %v55 = vld [vmem:[%s2 + $0x88] sm:$0xff]
  %v56 = vld [vmem:[%s2 + $0x90] sm:$0xff]
  %v57 = vld [vmem:[%s2 + $0x98] sm:$0xff]
  %v58 = vld [vmem:[%s2 + $0xa0] sm:$0xff]
  %v59 = vld [vmem:[%s2 + $0xa8] sm:$0xff]
  %v60 = vld [vmem:[%s2 + $0xb0] sm:$0xff]
  %v61 = vld [vmem:[%s2 + $0xb8] sm:$0xff]
  %v62 = vld [vmem:[%s2 + $0xc0] sm:$0xff]
  %v63 = vld [vmem:[%s2 + $0xc8] sm:$0xff]
  %v64 = vld [vmem:[%s2 + $0xd0] sm:$0xff]
  %v65 = vld [vmem:[%s2 + $0xd8] sm:$0xff]
  %v66 = vld [vmem:[%s2 + $0xe0] sm:$0xff]
  %v67 = vld [vmem:[%s2 + $0xe8] sm:$0xff]
  %v68 = vld [vmem:[%s2 + $0xf0] sm:$0xff]
  %v69 = vld [vmem:[%s2 + $0xf8] sm:$0xff]
  %v70 = vld [vmem:[%s2 + $0x100] sm:$0xff]
  %v71 = vld [vmem:[%s2 + $0x108] sm:$0xff]
  %v72 = vld [vmem:[%s2 + $0x110] sm:$0xff]
  %v73 = vld [vmem:[%s2 + $0x118] sm:$0xff]
  %v74 = vld [vmem:[%s2 + $0x120] sm:$0xff]
  %v75 = vld [vmem:[%s2 + $0x128] sm:$0xff]
  %v76 = vld [vmem:[%s2 + $0x130] sm:$0xff]
  %v77 = vld [vmem:[%s2 + $0x138] sm:$0xff]
  %v78 = vld [vmem:[%s2 + $0x140] sm:$0xff]
  %v79 = vld [vmem:[%s2 + $0x148] sm:$0xff]
  %v80 = vld [vmem:[%s2 + $0x150] sm:$0xff]
  %v81 = vld [vmem:[%s2 + $0x158] sm:$0xff]
  %v82 = vld [vmem:[%s2 + $0x160] sm:$0xff]
  %v83 = vld [vmem:[%s2 + $0x168] sm:$0xff]
  %v84 = vld [vmem:[%s2 + $0x170] sm:$0xff]
  %v85 = vld [vmem:[%s2 + $0x178] sm:$0xff]
  %v86 = vld [vmem:[%s2 + $0x180] sm:$0xff]
  %v87 = vld [vmem:[%s2 + $0x188] sm:$0xff]
  %v88 = vld [vmem:[%s2 + $0x190] sm:$0xff]
  %v89 = vld [vmem:[%s2 + $0x198] sm:$0xff]
  %v90 = vld [vmem:[%s2 + $0x1a0] sm:$0xff]
  %v91 = vld [vmem:[%s2 + $0x1a8] sm:$0xff]
  %v92 = vld [vmem:[%s2 + $0x1b0] sm:$0xff]
  %v93 = vld [vmem:[%s2 + $0x1b8] sm:$0xff]
  %v94 = vld [vmem:[%s2 + $0x1c0] sm:$0xff]
  %v95 = vld [vmem:[%s2 + $0x1c8] sm:$0xff]
  %v96 = vld [vmem:[%s2 + $0x1d0] sm:$0xff]
  %v97 = vld [vmem:[%s2 + $0x1d8] sm:$0xff]
  %v98 = vld [vmem:[%s2 + $0x1e0] sm:$0xff]
  %v99 = vld [vmem:[%s2 + $0x1e8] sm:$0xff]
  %v100 = vld [vmem:[%s2 + $0x1f0] sm:$0xff]
  %v101 = vld [vmem:[%s2 + $0x1f8] sm:$0xff]
  %v102 = vld [vmem:[%s3] sm:$0xff]
  %v104 = vperm.slane %v102, 0
  %v105 = vperm.slane %v102, 1
  %v106 = vperm.slane %v102, 2
  %v107 = vperm.slane %v102, 3
  %v108 = vperm.slane %v102, 4
  %v109 = vperm.slane %v102, 5
  %v110 = vperm.slane %v102, 6
  %v111 = vperm.slane %v102, 7
  %v128 = vunpack.c.l.b16 %v30
  %v129 = vunpack.c.l.b16 %v31
  %v130 = vunpack.c.l.b16 %v32
  %v131 = vunpack.c.l.b16 %v33
  %v132 = vunpack.c.l.b16 %v34
  %v133 = vunpack.c.l.b16 %v35
  %v134 = vunpack.c.l.b16 %v36
  %v135 = vunpack.c.l.b16 %v37
  %v136 = vpack.c.b16 %v129, %v128
  %v137 = vpack.c.b16 %v131, %v130
  %v138 = vpack.c.b16 %v133, %v132
  %v139 = vpack.c.b16 %v135, %v134
  %v208 = vunpack.c.l.b16 %v38
  %v209 = vunpack.c.h.b16 %v38
  %v210 = vunpack.c.l.b16 %v39
  %v211 = vunpack.c.h.b16 %v39
  %v212 = vunpack.c.l.b16 %v40
  %v213 = vunpack.c.h.b16 %v40
  %v214 = vunpack.c.l.b16 %v41
  %v215 = vunpack.c.h.b16 %v41
  %v216 = vunpack.c.l.b16 %v42
  %v217 = vunpack.c.h.b16 %v42
  %v218 = vunpack.c.l.b16 %v43
  %v219 = vunpack.c.h.b16 %v43
  %v220 = vunpack.c.l.b16 %v44
  %v221 = vunpack.c.h.b16 %v44
  %v222 = vunpack.c.l.b16 %v45
  %v223 = vunpack.c.h.b16 %v45
  %v224 = vunpack.c.l.b16 %v46
  %v225 = vunpack.c.h.b16 %v46
  %v226 = vunpack.c.l.b16 %v47
  %v227 = vunpack.c.h.b16 %v47
  %v228 = vunpack.c.l.b16 %v48
  %v229 = vunpack.c.h.b16 %v48
  %v230 = vunpack.c.l.b16 %v49
  %v231 = vunpack.c.h.b16 %v49
  %v232 = vunpack.c.l.b16 %v50
  %v233 = vunpack.c.h.b16 %v50
  %v234 = vunpack.c.l.b16 %v51
  %v235 = vunpack.c.h.b16 %v51
  %v236 = vunpack.c.l.b16 %v52
  %v237 = vunpack.c.h.b16 %v52
  %v238 = vunpack.c.l.b16 %v53
  %v239 = vunpack.c.h.b16 %v53
  %v240 = vunpack.c.l.b16 %v54
  %v241 = vunpack.c.h.b16 %v54
  %v242 = vunpack.c.l.b16 %v55
  %v243 = vunpack.c.h.b16 %v55
  %v244 = vunpack.c.l.b16 %v56
  %v245 = vunpack.c.h.b16 %v56
  %v246 = vunpack.c.l.b16 %v57
  %v247 = vunpack.c.h.b16 %v57
  %v248 = vunpack.c.l.b16 %v58
  %v249 = vunpack.c.h.b16 %v58
  %v250 = vunpack.c.l.b16 %v59
  %v251 = vunpack.c.h.b16 %v59
  %v252 = vunpack.c.l.b16 %v60
  %v253 = vunpack.c.h.b16 %v60
  %v254 = vunpack.c.l.b16 %v61
  %v255 = vunpack.c.h.b16 %v61
  %v256 = vunpack.c.l.b16 %v62
  %v257 = vunpack.c.h.b16 %v62
  %v258 = vunpack.c.l.b16 %v63
  %v259 = vunpack.c.h.b16 %v63
  %v260 = vunpack.c.l.b16 %v64
  %v261 = vunpack.c.h.b16 %v64
  %v262 = vunpack.c.l.b16 %v65
  %v263 = vunpack.c.h.b16 %v65
  %v264 = vunpack.c.l.b16 %v66
  %v265 = vunpack.c.h.b16 %v66
  %v266 = vunpack.c.l.b16 %v67
  %v267 = vunpack.c.h.b16 %v67
  %v268 = vunpack.c.l.b16 %v68
  %v269 = vunpack.c.h.b16 %v68
  %v270 = vunpack.c.l.b16 %v69
  %v271 = vunpack.c.h.b16 %v69
  %v272 = vunpack.c.l.b16 %v70
  %v273 = vunpack.c.h.b16 %v70
  %v274 = vunpack.c.l.b16 %v71
  %v275 = vunpack.c.h.b16 %v71
  %v276 = vunpack.c.l.b16 %v72
  %v277 = vunpack.c.h.b16 %v72
  %v278 = vunpack.c.l.b16 %v73
  %v279 = vunpack.c.h.b16 %v73
  %v280 = vunpack.c.l.b16 %v74
  %v281 = vunpack.c.h.b16 %v74
  %v282 = vunpack.c.l.b16 %v75
  %v283 = vunpack.c.h.b16 %v75
  %v284 = vunpack.c.l.b16 %v76
  %v285 = vunpack.c.h.b16 %v76
  %v286 = vunpack.c.l.b16 %v77
  %v287 = vunpack.c.h.b16 %v77
  %v288 = vunpack.c.l.b16 %v78
  %v289 = vunpack.c.h.b16 %v78
  %v290 = vunpack.c.l.b16 %v79
  %v291 = vunpack.c.h.b16 %v79
  %v292 = vunpack.c.l.b16 %v80
  %v293 = vunpack.c.h.b16 %v80
  %v294 = vunpack.c.l.b16 %v81
  %v295 = vunpack.c.h.b16 %v81
  %v296 = vunpack.c.l.b16 %v82
  %v297 = vunpack.c.h.b16 %v82
  %v298 = vunpack.c.l.b16 %v83
  %v299 = vunpack.c.h.b16 %v83
  %v300 = vunpack.c.l.b16 %v84
  %v301 = vunpack.c.h.b16 %v84
  %v302 = vunpack.c.l.b16 %v85
  %v303 = vunpack.c.h.b16 %v85
  %v304 = vunpack.c.l.b16 %v86
  %v305 = vunpack.c.h.b16 %v86
  %v306 = vunpack.c.l.b16 %v87
  %v307 = vunpack.c.h.b16 %v87
  %v308 = vunpack.c.l.b16 %v88
  %v309 = vunpack.c.h.b16 %v88
  %v310 = vunpack.c.l.b16 %v89
  %v311 = vunpack.c.h.b16 %v89
  %v312 = vunpack.c.l.b16 %v90
  %v313 = vunpack.c.h.b16 %v90
  %v314 = vunpack.c.l.b16 %v91
  %v315 = vunpack.c.h.b16 %v91
  %v316 = vunpack.c.l.b16 %v92
  %v317 = vunpack.c.h.b16 %v92
  %v318 = vunpack.c.l.b16 %v93
  %v319 = vunpack.c.h.b16 %v93
  %v320 = vunpack.c.l.b16 %v94
  %v321 = vunpack.c.h.b16 %v94
  %v322 = vunpack.c.l.b16 %v95
  %v323 = vunpack.c.h.b16 %v95
  %v324 = vunpack.c.l.b16 %v96
  %v325 = vunpack.c.h.b16 %v96
  %v326 = vunpack.c.l.b16 %v97
  %v327 = vunpack.c.h.b16 %v97
  %v328 = vunpack.c.l.b16 %v98
  %v329 = vunpack.c.h.b16 %v98
  %v330 = vunpack.c.l.b16 %v99
  %v331 = vunpack.c.h.b16 %v99
  %v332 = vunpack.c.l.b16 %v100
  %v333 = vunpack.c.h.b16 %v100
  %v334 = vunpack.c.l.b16 %v101
  %v335 = vunpack.c.h.b16 %v101
  %v336 = vpack.c.b16 %v216, %v208
  %v337 = vpack.c.b16 %v217, %v209
  %v338 = vpack.c.b16 %v218, %v210
  %v339 = vpack.c.b16 %v219, %v211
  %v340 = vpack.c.b16 %v220, %v212
  %v341 = vpack.c.b16 %v221, %v213
  %v342 = vpack.c.b16 %v222, %v214
  %v343 = vpack.c.b16 %v223, %v215
  %v344 = vpack.c.b16 %v232, %v224
  %v345 = vpack.c.b16 %v233, %v225
  %v346 = vpack.c.b16 %v234, %v226
  %v347 = vpack.c.b16 %v235, %v227
  %v348 = vpack.c.b16 %v236, %v228
  %v349 = vpack.c.b16 %v237, %v229
  %v350 = vpack.c.b16 %v238, %v230
  %v351 = vpack.c.b16 %v239, %v231
  %v352 = vpack.c.b16 %v248, %v240
  %v353 = vpack.c.b16 %v249, %v241
  %v354 = vpack.c.b16 %v250, %v242
  %v355 = vpack.c.b16 %v251, %v243
  %v356 = vpack.c.b16 %v252, %v244
  %v357 = vpack.c.b16 %v253, %v245
  %v358 = vpack.c.b16 %v254, %v246
  %v359 = vpack.c.b16 %v255, %v247
  %v360 = vpack.c.b16 %v264, %v256
  %v361 = vpack.c.b16 %v265, %v257
  %v362 = vpack.c.b16 %v266, %v258
  %v363 = vpack.c.b16 %v267, %v259
  %v364 = vpack.c.b16 %v268, %v260
  %v365 = vpack.c.b16 %v269, %v261
  %v366 = vpack.c.b16 %v270, %v262
  %v367 = vpack.c.b16 %v271, %v263
  %v368 = vpack.c.b16 %v280, %v272
  %v369 = vpack.c.b16 %v281, %v273
  %v370 = vpack.c.b16 %v282, %v274
  %v371 = vpack.c.b16 %v283, %v275
  %v372 = vpack.c.b16 %v284, %v276
  %v373 = vpack.c.b16 %v285, %v277
  %v374 = vpack.c.b16 %v286, %v278
  %v375 = vpack.c.b16 %v287, %v279
  %v376 = vpack.c.b16 %v296, %v288
  %v377 = vpack.c.b16 %v297, %v289
  %v378 = vpack.c.b16 %v298, %v290
  %v379 = vpack.c.b16 %v299, %v291
  %v380 = vpack.c.b16 %v300, %v292
  %v381 = vpack.c.b16 %v301, %v293
  %v382 = vpack.c.b16 %v302, %v294
  %v383 = vpack.c.b16 %v303, %v295
  %v384 = vpack.c.b16 %v312, %v304
  %v385 = vpack.c.b16 %v313, %v305
  %v386 = vpack.c.b16 %v314, %v306
  %v387 = vpack.c.b16 %v315, %v307
  %v388 = vpack.c.b16 %v316, %v308
  %v389 = vpack.c.b16 %v317, %v309
  %v390 = vpack.c.b16 %v318, %v310
  %v391 = vpack.c.b16 %v319, %v311
  %v392 = vpack.c.b16 %v328, %v320
  %v393 = vpack.c.b16 %v329, %v321
  %v394 = vpack.c.b16 %v330, %v322
  %v395 = vpack.c.b16 %v331, %v323
  %v396 = vpack.c.b16 %v332, %v324
  %v397 = vpack.c.b16 %v333, %v325
  %v398 = vpack.c.b16 %v334, %v326
  %v399 = vpack.c.b16 %v335, %v327
  %464 = vmatpush.bf16.msra.mxu0 %v392
  %465 = vmatpush.bf16.msra.mxu0 %v384
  %466 = vmatpush.bf16.msra.mxu0 %v376
  %467 = vmatpush.bf16.msra.mxu0 %v368
  %468 = vmatpush.bf16.msra.mxu0 %v360
  %469 = vmatpush.bf16.msra.mxu0 %v352
  %470 = vmatpush.bf16.msra.mxu0 %v344
  %471 = vmatpush.bf16.msra.mxu0 %v336
  %472 = vmatmul.bf16.gmra.mxu0 %v136
  %v473 = vpop.f32.mrf.mxu0
  %v474 = vadd.f32 %v104, %v473
  %v475 = vpop.f32.mrf.mxu0
  %v476 = vadd.f32 %v104, %v475
  %477 = vmatmul.bf16.gmra.mxu0 %v137
  %v478 = vpop.f32.mrf.mxu0
  %v479 = vadd.f32 %v104, %v478
  %v480 = vpop.f32.mrf.mxu0
  %v481 = vadd.f32 %v104, %v480
  %482 = vmatmul.bf16.gmra.mxu0 %v138
  %v483 = vpop.f32.mrf.mxu0
  %v484 = vadd.f32 %v104, %v483
  %v485 = vpop.f32.mrf.mxu0
  %v486 = vadd.f32 %v104, %v485
  %487 = vmatmul.bf16.gmra.mxu0 %v139
  %v488 = vpop.f32.mrf.mxu0
  %v489 = vadd.f32 %v104, %v488
  %v490 = vpop.f32.mrf.mxu0
  %v491 = vadd.f32 %v104, %v490
  %492 = vdwg.mxu0
  %493 = vmatpush.bf16.msra.mxu0 %v393
  %494 = vmatpush.bf16.msra.mxu0 %v385
  %495 = vmatpush.bf16.msra.mxu0 %v377
  %496 = vmatpush.bf16.msra.mxu0 %v369
  %497 = vmatpush.bf16.msra.mxu0 %v361
  %498 = vmatpush.bf16.msra.mxu0 %v353
  %499 = vmatpush.bf16.msra.mxu0 %v345
  %500 = vmatpush.bf16.msra.mxu0 %v337
  %501 = vmatmul.bf16.gmra.mxu0 %v136
  %v502 = vpop.f32.mrf.mxu0
  %v503 = vadd.f32 %v105, %v502
  %v504 = vpop.f32.mrf.mxu0
  %v505 = vadd.f32 %v105, %v504
  %506 = vmatmul.bf16.gmra.mxu0 %v137
  %v507 = vpop.f32.mrf.mxu0
  %v508 = vadd.f32 %v105, %v507
  %v509 = vpop.f32.mrf.mxu0
  %v510 = vadd.f32 %v105, %v509
  %511 = vmatmul.bf16.gmra.mxu0 %v138
  %v512 = vpop.f32.mrf.mxu0
  %v513 = vadd.f32 %v105, %v512
  %v514 = vpop.f32.mrf.mxu0
  %v515 = vadd.f32 %v105, %v514
  %516 = vmatmul.bf16.gmra.mxu0 %v139
  %v517 = vpop.f32.mrf.mxu0
  %v518 = vadd.f32 %v105, %v517
  %v519 = vpop.f32.mrf.mxu0
  %v520 = vadd.f32 %v105, %v519
  %521 = vdwg.mxu0
  %522 = vmatpush.bf16.msra.mxu0 %v394
  %523 = vmatpush.bf16.msra.mxu0 %v386
  %524 = vmatpush.bf16.msra.mxu0 %v378
  %525 = vmatpush.bf16.msra.mxu0 %v370
  %526 = vmatpush.bf16.msra.mxu0 %v362
  %527 = vmatpush.bf16.msra.mxu0 %v354
  %528 = vmatpush.bf16.msra.mxu0 %v346
  %529 = vmatpush.bf16.msra.mxu0 %v338
  %530 = vmatmul.bf16.gmra.mxu0 %v136
  %v531 = vpop.f32.mrf.mxu0
  %v532 = vadd.f32 %v106, %v531
  %v533 = vpop.f32.mrf.mxu0
  %v534 = vadd.f32 %v106, %v533
  %535 = vmatmul.bf16.gmra.mxu0 %v137
  %v536 = vpop.f32.mrf.mxu0
  %v537 = vadd.f32 %v106, %v536
  %v538 = vpop.f32.mrf.mxu0
  %v539 = vadd.f32 %v106, %v538
  %540 = vmatmul.bf16.gmra.mxu0 %v138
  %v541 = vpop.f32.mrf.mxu0
  %v542 = vadd.f32 %v106, %v541
  %v543 = vpop.f32.mrf.mxu0
  %v544 = vadd.f32 %v106, %v543
  %545 = vmatmul.bf16.gmra.mxu0 %v139
  %v546 = vpop.f32.mrf.mxu0
  %v547 = vadd.f32 %v106, %v546
  %v548 = vpop.f32.mrf.mxu0
  %v549 = vadd.f32 %v106, %v548
  %550 = vdwg.mxu0
  %551 = vmatpush.bf16.msra.mxu0 %v395
  %552 = vmatpush.bf16.msra.mxu0 %v387
  %553 = vmatpush.bf16.msra.mxu0 %v379
  %554 = vmatpush.bf16.msra.mxu0 %v371
  %555 = vmatpush.bf16.msra.mxu0 %v363
  %556 = vmatpush.bf16.msra.mxu0 %v355
  %557 = vmatpush.bf16.msra.mxu0 %v347
  %558 = vmatpush.bf16.msra.mxu0 %v339
  %559 = vmatmul.bf16.gmra.mxu0 %v136
  %v560 = vpop.f32.mrf.mxu0
  %v561 = vadd.f32 %v107, %v560
  %v562 = vpop.f32.mrf.mxu0
  %v563 = vadd.f32 %v107, %v562
  %564 = vmatmul.bf16.gmra.mxu0 %v137
  %v565 = vpop.f32.mrf.mxu0
  %v566 = vadd.f32 %v107, %v565
  %v567 = vpop.f32.mrf.mxu0
  %v568 = vadd.f32 %v107, %v567
  %569 = vmatmul.bf16.gmra.mxu0 %v138
  %v570 = vpop.f32.mrf.mxu0
  %v571 = vadd.f32 %v107, %v570
  %v572 = vpop.f32.mrf.mxu0
  %v573 = vadd.f32 %v107, %v572
  %574 = vmatmul.bf16.gmra.mxu0 %v139
  %v575 = vpop.f32.mrf.mxu0
  %v576 = vadd.f32 %v107, %v575
  %v577 = vpop.f32.mrf.mxu0
  %v578 = vadd.f32 %v107, %v577
  %579 = vdwg.mxu0
  %580 = vmatpush.bf16.msra.mxu0 %v396
  %581 = vmatpush.bf16.msra.mxu0 %v388
  %582 = vmatpush.bf16.msra.mxu0 %v380
  %583 = vmatpush.bf16.msra.mxu0 %v372
  %584 = vmatpush.bf16.msra.mxu0 %v364
  %585 = vmatpush.bf16.msra.mxu0 %v356
  %586 = vmatpush.bf16.msra.mxu0 %v348
  %587 = vmatpush.bf16.msra.mxu0 %v340
  %588 = vmatmul.bf16.gmra.mxu0 %v136
  %v589 = vpop.f32.mrf.mxu0
  %v590 = vadd.f32 %v108, %v589
  %v591 = vpop.f32.mrf.mxu0
  %v592 = vadd.f32 %v108, %v591
  %593 = vmatmul.bf16.gmra.mxu0 %v137
  %v594 = vpop.f32.mrf.mxu0
  %v595 = vadd.f32 %v108, %v594
  %v596 = vpop.f32.mrf.mxu0
  %v597 = vadd.f32 %v108, %v596
  %598 = vmatmul.bf16.gmra.mxu0 %v138
  %v599 = vpop.f32.mrf.mxu0
  %v600 = vadd.f32 %v108, %v599
  %v601 = vpop.f32.mrf.mxu0
  %v602 = vadd.f32 %v108, %v601
  %603 = vmatmul.bf16.gmra.mxu0 %v139
  %v604 = vpop.f32.mrf.mxu0
  %v605 = vadd.f32 %v108, %v604
  %v606 = vpop.f32.mrf.mxu0
  %v607 = vadd.f32 %v108, %v606
  %608 = vdwg.mxu0
  %609 = vmatpush.bf16.msra.mxu0 %v397
  %610 = vmatpush.bf16.msra.mxu0 %v389
  %611 = vmatpush.bf16.msra.mxu0 %v381
  %612 = vmatpush.bf16.msra.mxu0 %v373
  %613 = vmatpush.bf16.msra.mxu0 %v365
  %614 = vmatpush.bf16.msra.mxu0 %v357
  %615 = vmatpush.bf16.msra.mxu0 %v349
  %616 = vmatpush.bf16.msra.mxu0 %v341
  %617 = vmatmul.bf16.gmra.mxu0 %v136
  %v618 = vpop.f32.mrf.mxu0
  %v619 = vadd.f32 %v109, %v618
  %v620 = vpop.f32.mrf.mxu0
  %v621 = vadd.f32 %v109, %v620
  %622 = vmatmul.bf16.gmra.mxu0 %v137
  %v623 = vpop.f32.mrf.mxu0
  %v624 = vadd.f32 %v109, %v623
  %v625 = vpop.f32.mrf.mxu0
  %v626 = vadd.f32 %v109, %v625
  %627 = vmatmul.bf16.gmra.mxu0 %v138
  %v628 = vpop.f32.mrf.mxu0
  %v629 = vadd.f32 %v109, %v628
  %v630 = vpop.f32.mrf.mxu0
  %v631 = vadd.f32 %v109, %v630
  %632 = vmatmul.bf16.gmra.mxu0 %v139
  %v633 = vpop.f32.mrf.mxu0
  %v634 = vadd.f32 %v109, %v633
  %v635 = vpop.f32.mrf.mxu0
  %v636 = vadd.f32 %v109, %v635
  %637 = vdwg.mxu0
  %638 = vmatpush.bf16.msra.mxu0 %v398
  %639 = vmatpush.bf16.msra.mxu0 %v390
  %640 = vmatpush.bf16.msra.mxu0 %v382
  %641 = vmatpush.bf16.msra.mxu0 %v374
  %642 = vmatpush.bf16.msra.mxu0 %v366
  %643 = vmatpush.bf16.msra.mxu0 %v358
  %644 = vmatpush.bf16.msra.mxu0 %v350
  %645 = vmatpush.bf16.msra.mxu0 %v342
  %646 = vmatmul.bf16.gmra.mxu0 %v136
  %v647 = vpop.f32.mrf.mxu0
  %v648 = vadd.f32 %v110, %v647
  %v649 = vpop.f32.mrf.mxu0
  %v650 = vadd.f32 %v110, %v649
  %651 = vmatmul.bf16.gmra.mxu0 %v137
  %v652 = vpop.f32.mrf.mxu0
  %v653 = vadd.f32 %v110, %v652
  %v654 = vpop.f32.mrf.mxu0
  %v655 = vadd.f32 %v110, %v654
  %656 = vmatmul.bf16.gmra.mxu0 %v138
  %v657 = vpop.f32.mrf.mxu0
  %v658 = vadd.f32 %v110, %v657
  %v659 = vpop.f32.mrf.mxu0
  %v660 = vadd.f32 %v110, %v659
  %661 = vmatmul.bf16.gmra.mxu0 %v139
  %v662 = vpop.f32.mrf.mxu0
  %v663 = vadd.f32 %v110, %v662
  %v664 = vpop.f32.mrf.mxu0
  %v665 = vadd.f32 %v110, %v664
  %666 = vdwg.mxu0
  %667 = vmatpush.bf16.msra.mxu0 %v399
  %668 = vmatpush.bf16.msra.mxu0 %v391
  %669 = vmatpush.bf16.msra.mxu0 %v383
  %670 = vmatpush.bf16.msra.mxu0 %v375
  %671 = vmatpush.bf16.msra.mxu0 %v367
  %672 = vmatpush.bf16.msra.mxu0 %v359
  %673 = vmatpush.bf16.msra.mxu0 %v351
  %674 = vmatpush.bf16.msra.mxu0 %v343
  %675 = vmatmul.bf16.gmra.mxu0 %v136
  %v676 = vpop.f32.mrf.mxu0
  %v677 = vadd.f32 %v111, %v676
  %v678 = vpop.f32.mrf.mxu0
  %v679 = vadd.f32 %v111, %v678
  %680 = vmatmul.bf16.gmra.mxu0 %v137
  %v681 = vpop.f32.mrf.mxu0
  %v682 = vadd.f32 %v111, %v681
  %v683 = vpop.f32.mrf.mxu0
  %v684 = vadd.f32 %v111, %v683
  %685 = vmatmul.bf16.gmra.mxu0 %v138
  %v686 = vpop.f32.mrf.mxu0
  %v687 = vadd.f32 %v111, %v686
  %v688 = vpop.f32.mrf.mxu0
  %v689 = vadd.f32 %v111, %v688
  %690 = vmatmul.bf16.gmra.mxu0 %v139
  %v691 = vpop.f32.mrf.mxu0
  %v692 = vadd.f32 %v111, %v691
  %v693 = vpop.f32.mrf.mxu0
  %v694 = vadd.f32 %v111, %v693
  %695 = vdwg.mxu0
  %696 = vst [vmem:[#allocation2] sm:$0xff] %v474
  %697 = vst [vmem:[#allocation2 + $0x8] sm:$0xff] %v503
  %698 = vst [vmem:[#allocation2 + $0x10] sm:$0xff] %v532
  %699 = vst [vmem:[#allocation2 + $0x18] sm:$0xff] %v561
  %700 = vst [vmem:[#allocation2 + $0x20] sm:$0xff] %v590
  %701 = vst [vmem:[#allocation2 + $0x28] sm:$0xff] %v619
  %702 = vst [vmem:[#allocation2 + $0x30] sm:$0xff] %v648
  %703 = vst [vmem:[#allocation2 + $0x38] sm:$0xff] %v677
  %704 = vst [vmem:[#allocation2 + $0x40] sm:$0xff] %v476
  %705 = vst [vmem:[#allocation2 + $0x48] sm:$0xff] %v505
  %706 = vst [vmem:[#allocation2 + $0x50] sm:$0xff] %v534
  %707 = vst [vmem:[#allocation2 + $0x58] sm:$0xff] %v563
  %708 = vst [vmem:[#allocation2 + $0x60] sm:$0xff] %v592
  %709 = vst [vmem:[#allocation2 + $0x68] sm:$0xff] %v621
  %710 = vst [vmem:[#allocation2 + $0x70] sm:$0xff] %v650
  %711 = vst [vmem:[#allocation2 + $0x78] sm:$0xff] %v679
  %712 = vst [vmem:[#allocation2 + $0x80] sm:$0xff] %v479
  %713 = vst [vmem:[#allocation2 + $0x88] sm:$0xff] %v508
  %714 = vst [vmem:[#allocation2 + $0x90] sm:$0xff] %v537
  %715 = vst [vmem:[#allocation2 + $0x98] sm:$0xff] %v566
  %716 = vst [vmem:[#allocation2 + $0xa0] sm:$0xff] %v595
  %717 = vst [vmem:[#allocation2 + $0xa8] sm:$0xff] %v624
  %718 = vst [vmem:[#allocation2 + $0xb0] sm:$0xff] %v653
  %719 = vst [vmem:[#allocation2 + $0xb8] sm:$0xff] %v682
  %720 = vst [vmem:[#allocation2 + $0xc0] sm:$0xff] %v481
  %721 = vst [vmem:[#allocation2 + $0xc8] sm:$0xff] %v510
  %722 = vst [vmem:[#allocation2 + $0xd0] sm:$0xff] %v539
  %723 = vst [vmem:[#allocation2 + $0xd8] sm:$0xff] %v568
  %724 = vst [vmem:[#allocation2 + $0xe0] sm:$0xff] %v597
  %725 = vst [vmem:[#allocation2 + $0xe8] sm:$0xff] %v626
  %726 = vst [vmem:[#allocation2 + $0xf0] sm:$0xff] %v655
  %727 = vst [vmem:[#allocation2 + $0xf8] sm:$0xff] %v684
  %728 = vst [vmem:[#allocation2 + $0x100] sm:$0xff] %v484
  %729 = vst [vmem:[#allocation2 + $0x108] sm:$0xff] %v513
  %730 = vst [vmem:[#allocation2 + $0x110] sm:$0xff] %v542
  %731 = vst [vmem:[#allocation2 + $0x118] sm:$0xff] %v571
  %732 = vst [vmem:[#allocation2 + $0x120] sm:$0xff] %v600
  %733 = vst [vmem:[#allocation2 + $0x128] sm:$0xff] %v629
  %734 = vst [vmem:[#allocation2 + $0x130] sm:$0xff] %v658
  %735 = vst [vmem:[#allocation2 + $0x138] sm:$0xff] %v687
  %736 = vst [vmem:[#allocation2 + $0x140] sm:$0xff] %v486
  %737 = vst [vmem:[#allocation2 + $0x148] sm:$0xff] %v515
  %738 = vst [vmem:[#allocation2 + $0x150] sm:$0xff] %v544
  %739 = vst [vmem:[#allocation2 + $0x158] sm:$0xff] %v573
  %740 = vst [vmem:[#allocation2 + $0x160] sm:$0xff] %v602
  %741 = vst [vmem:[#allocation2 + $0x168] sm:$0xff] %v631
  %742 = vst [vmem:[#allocation2 + $0x170] sm:$0xff] %v660
  %743 = vst [vmem:[#allocation2 + $0x178] sm:$0xff] %v689
  %744 = vst [vmem:[#allocation2 + $0x180] sm:$0xff] %v489
  %745 = vst [vmem:[#allocation2 + $0x188] sm:$0xff] %v518
  %746 = vst [vmem:[#allocation2 + $0x190] sm:$0xff] %v547
  %747 = vst [vmem:[#allocation2 + $0x198] sm:$0xff] %v576
  %748 = vst [vmem:[#allocation2 + $0x1a0] sm:$0xff] %v605
  %749 = vst [vmem:[#allocation2 + $0x1a8] sm:$0xff] %v634
  %750 = vst [vmem:[#allocation2 + $0x1b0] sm:$0xff] %v663
  %751 = vst [vmem:[#allocation2 + $0x1b8] sm:$0xff] %v692
  %752 = vst [vmem:[#allocation2 + $0x1c0] sm:$0xff] %v491
  %753 = vst [vmem:[#allocation2 + $0x1c8] sm:$0xff] %v520
  %754 = vst [vmem:[#allocation2 + $0x1d0] sm:$0xff] %v549
  %755 = vst [vmem:[#allocation2 + $0x1d8] sm:$0xff] %v578
  %756 = vst [vmem:[#allocation2 + $0x1e0] sm:$0xff] %v607
  %757 = vst [vmem:[#allocation2 + $0x1e8] sm:$0xff] %v636
  %758 = vst [vmem:[#allocation2 + $0x1f0] sm:$0xff] %v665
  %759 = vst [vmem:[#allocation2 + $0x1f8] sm:$0xff] %v694
  %v760 = vld [vmem:[%s4] sm:$0xff]
  %v761 = vld [vmem:[%s4 + $0x8] sm:$0xff]
  %v762 = vld [vmem:[%s4 + $0x10] sm:$0xff]
  %v763 = vld [vmem:[%s4 + $0x18] sm:$0xff]
  %v764 = vld [vmem:[%s4 + $0x20] sm:$0xff]
  %v765 = vld [vmem:[%s4 + $0x28] sm:$0xff]
  %v766 = vld [vmem:[%s4 + $0x30] sm:$0xff]
  %v767 = vld [vmem:[%s4 + $0x38] sm:$0xff]
  %v768 = vld [vmem:[%s4 + $0x40] sm:$0xff]
  %v769 = vld [vmem:[%s4 + $0x48] sm:$0xff]
  %v770 = vld [vmem:[%s4 + $0x50] sm:$0xff]
  %v771 = vld [vmem:[%s4 + $0x58] sm:$0xff]
  %v772 = vld [vmem:[%s4 + $0x60] sm:$0xff]
  %v773 = vld [vmem:[%s4 + $0x68] sm:$0xff]
  %v774 = vld [vmem:[%s4 + $0x70] sm:$0xff]
  %v775 = vld [vmem:[%s4 + $0x78] sm:$0xff]
  %v776 = vld [vmem:[%s4 + $0x80] sm:$0xff]
  %v777 = vld [vmem:[%s4 + $0x88] sm:$0xff]
  %v778 = vld [vmem:[%s4 + $0x90] sm:$0xff]
  %v779 = vld [vmem:[%s4 + $0x98] sm:$0xff]
  %v780 = vld [vmem:[%s4 + $0xa0] sm:$0xff]
  %v781 = vld [vmem:[%s4 + $0xa8] sm:$0xff]
  %v782 = vld [vmem:[%s4 + $0xb0] sm:$0xff]
  %v783 = vld [vmem:[%s4 + $0xb8] sm:$0xff]
  %v784 = vld [vmem:[%s4 + $0xc0] sm:$0xff]
  %v785 = vld [vmem:[%s4 + $0xc8] sm:$0xff]
  %v786 = vld [vmem:[%s4 + $0xd0] sm:$0xff]
  %v787 = vld [vmem:[%s4 + $0xd8] sm:$0xff]
  %v788 = vld [vmem:[%s4 + $0xe0] sm:$0xff]
  %v789 = vld [vmem:[%s4 + $0xe8] sm:$0xff]
  %v790 = vld [vmem:[%s4 + $0xf0] sm:$0xff]
  %v791 = vld [vmem:[%s4 + $0xf8] sm:$0xff]
  %v792 = vld [vmem:[%s5] sm:$0xff]
  %v793 = vld [vmem:[%s5 + $0x8] sm:$0xff]
  %v794 = vld [vmem:[%s5 + $0x10] sm:$0xff]
  %v795 = vld [vmem:[%s5 + $0x18] sm:$0xff]
  %v796 = vld [vmem:[%s5 + $0x20] sm:$0xff]
  %v797 = vld [vmem:[%s5 + $0x28] sm:$0xff]
  %v798 = vld [vmem:[%s5 + $0x30] sm:$0xff]
  %v799 = vld [vmem:[%s5 + $0x38] sm:$0xff]
  %v800 = vld [vmem:[%s5 + $0x40] sm:$0xff]
  %v801 = vld [vmem:[%s5 + $0x48] sm:$0xff]
  %v802 = vld [vmem:[%s5 + $0x50] sm:$0xff]
  %v803 = vld [vmem:[%s5 + $0x58] sm:$0xff]
  %v804 = vld [vmem:[%s5 + $0x60] sm:$0xff]
  %v805 = vld [vmem:[%s5 + $0x68] sm:$0xff]
  %v806 = vld [vmem:[%s5 + $0x70] sm:$0xff]
  %v807 = vld [vmem:[%s5 + $0x78] sm:$0xff]
  %v808 = vld [vmem:[%s5 + $0x80] sm:$0xff]
  %v809 = vld [vmem:[%s5 + $0x88] sm:$0xff]
  %v810 = vld [vmem:[%s5 + $0x90] sm:$0xff]
  %v811 = vld [vmem:[%s5 + $0x98] sm:$0xff]
  %v812 = vld [vmem:[%s5 + $0xa0] sm:$0xff]
  %v813 = vld [vmem:[%s5 + $0xa8] sm:$0xff]
  %v814 = vld [vmem:[%s5 + $0xb0] sm:$0xff]
  %v815 = vld [vmem:[%s5 + $0xb8] sm:$0xff]
  %v816 = vld [vmem:[%s5 + $0xc0] sm:$0xff]
  %v817 = vld [vmem:[%s5 + $0xc8] sm:$0xff]
  %v818 = vld [vmem:[%s5 + $0xd0] sm:$0xff]
  %v819 = vld [vmem:[%s5 + $0xd8] sm:$0xff]
  %v820 = vld [vmem:[%s5 + $0xe0] sm:$0xff]
  %v821 = vld [vmem:[%s5 + $0xe8] sm:$0xff]
  %v822 = vld [vmem:[%s5 + $0xf0] sm:$0xff]
  %v823 = vld [vmem:[%s5 + $0xf8] sm:$0xff]
  %v824 = vld [vmem:[%s1] sm:$0xff]
  %v825 = vld [vmem:[#allocation2] sm:$0xff]
  %v826 = vld [vmem:[#allocation2 + $0x8] sm:$0xff]
  %v827 = vld [vmem:[#allocation2 + $0x10] sm:$0xff]
  %v828 = vld [vmem:[#allocation2 + $0x18] sm:$0xff]
  %v861 = vunpack.c.l.b16 %v760
  %v862 = vunpack.c.h.b16 %v760
  %v863 = vunpack.c.l.b16 %v761
  %v864 = vunpack.c.h.b16 %v761
  %v865 = vunpack.c.l.b16 %v762
  %v866 = vunpack.c.h.b16 %v762
  %v867 = vunpack.c.l.b16 %v763
  %v868 = vunpack.c.h.b16 %v763
  %v869 = vunpack.c.l.b16 %v764
  %v870 = vunpack.c.h.b16 %v764
  %v871 = vunpack.c.l.b16 %v765
  %v872 = vunpack.c.h.b16 %v765
  %v873 = vunpack.c.l.b16 %v766
  %v874 = vunpack.c.h.b16 %v766
  %v875 = vunpack.c.l.b16 %v767
  %v876 = vunpack.c.h.b16 %v767
  %v877 = vunpack.c.l.b16 %v768
  %v878 = vunpack.c.h.b16 %v768
  %v879 = vunpack.c.l.b16 %v769
  %v880 = vunpack.c.h.b16 %v769
  %v881 = vunpack.c.l.b16 %v770
  %v882 = vunpack.c.h.b16 %v770
  %v883 = vunpack.c.l.b16 %v771
  %v884 = vunpack.c.h.b16 %v771
  %v885 = vunpack.c.l.b16 %v772
  %v886 = vunpack.c.h.b16 %v772
  %v887 = vunpack.c.l.b16 %v773
  %v888 = vunpack.c.h.b16 %v773
  %v889 = vunpack.c.l.b16 %v774
  %v890 = vunpack.c.h.b16 %v774
  %v891 = vunpack.c.l.b16 %v775
  %v892 = vunpack.c.h.b16 %v775
  %v893 = vunpack.c.l.b16 %v776
  %v894 = vunpack.c.h.b16 %v776
  %v895 = vunpack.c.l.b16 %v777
  %v896 = vunpack.c.h.b16 %v777
  %v897 = vunpack.c.l.b16 %v778
  %v898 = vunpack.c.h.b16 %v778
  %v899 = vunpack.c.l.b16 %v779
  %v900 = vunpack.c.h.b16 %v779
  %v901 = vunpack.c.l.b16 %v780
  %v902 = vunpack.c.h.b16 %v780
  %v903 = vunpack.c.l.b16 %v781
  %v904 = vunpack.c.h.b16 %v781
  %v905 = vunpack.c.l.b16 %v782
  %v906 = vunpack.c.h.b16 %v782
  %v907 = vunpack.c.l.b16 %v783
  %v908 = vunpack.c.h.b16 %v783
  %v909 = vunpack.c.l.b16 %v784
  %v910 = vunpack.c.h.b16 %v784
  %v911 = vunpack.c.l.b16 %v785
  %v912 = vunpack.c.h.b16 %v785
  %v913 = vunpack.c.l.b16 %v786
  %v914 = vunpack.c.h.b16 %v786
  %v915 = vunpack.c.l.b16 %v787
  %v916 = vunpack.c.h.b16 %v787
  %v917 = vunpack.c.l.b16 %v788
  %v918 = vunpack.c.h.b16 %v788
  %v919 = vunpack.c.l.b16 %v789
  %v920 = vunpack.c.h.b16 %v789
  %v921 = vunpack.c.l.b16 %v790
  %v922 = vunpack.c.h.b16 %v790
  %v923 = vunpack.c.l.b16 %v791
  %v924 = vunpack.c.h.b16 %v791
  %v925 = vpack.c.b16 %v865, %v861
  %v926 = vpack.c.b16 %v866, %v862
  %v927 = vpack.c.b16 %v867, %v863
  %v928 = vpack.c.b16 %v868, %v864
  %v929 = vpack.c.b16 %v873, %v869
  %v930 = vpack.c.b16 %v874, %v870
  %v931 = vpack.c.b16 %v875, %v871
  %v932 = vpack.c.b16 %v876, %v872
  %v933 = vpack.c.b16 %v881, %v877
  %v934 = vpack.c.b16 %v882, %v878
  %v935 = vpack.c.b16 %v883, %v879
  %v936 = vpack.c.b16 %v884, %v880
  %v937 = vpack.c.b16 %v889, %v885
  %v938 = vpack.c.b16 %v890, %v886
  %v939 = vpack.c.b16 %v891, %v887
  %v940 = vpack.c.b16 %v892, %v888
  %v941 = vpack.c.b16 %v897, %v893
  %v942 = vpack.c.b16 %v898, %v894
  %v943 = vpack.c.b16 %v899, %v895
  %v944 = vpack.c.b16 %v900, %v896
  %v945 = vpack.c.b16 %v905, %v901
  %v946 = vpack.c.b16 %v906, %v902
  %v947 = vpack.c.b16 %v907, %v903
  %v948 = vpack.c.b16 %v908, %v904
  %v949 = vpack.c.b16 %v913, %v909
  %v950 = vpack.c.b16 %v914, %v910
  %v951 = vpack.c.b16 %v915, %v911
  %v952 = vpack.c.b16 %v916, %v912
  %v953 = vpack.c.b16 %v921, %v917
  %v954 = vpack.c.b16 %v922, %v918
  %v955 = vpack.c.b16 %v923, %v919
  %v956 = vpack.c.b16 %v924, %v920
  %989 = vmatpush.bf16.msra.mxu0 %v953
  %990 = vmatpush.bf16.msra.mxu0 %v949
  %991 = vmatpush.bf16.msra.mxu0 %v945
  %992 = vmatpush.bf16.msra.mxu0 %v941
  %993 = vmatpush.bf16.msra.mxu0 %v937
  %994 = vmatpush.bf16.msra.mxu0 %v933
  %995 = vmatpush.bf16.msra.mxu0 %v929
  %996 = vmatpush.bf16.msra.mxu0 %v925
  %997 = vmatmul.bf16.gmra.mxu0 0
  %v998 = vpop.f32.mrf.mxu0
  %v999 = vadd.f32 0.0, %v998
  %v1000 = vpop.f32.mrf.mxu0
  %1001 = vdwg.mxu0
  %1002 = vmatpush.bf16.msra.mxu0 %v954
  %1003 = vmatpush.bf16.msra.mxu0 %v950
  %1004 = vmatpush.bf16.msra.mxu0 %v946
  %1005 = vmatpush.bf16.msra.mxu0 %v942
  %1006 = vmatpush.bf16.msra.mxu0 %v938
  %1007 = vmatpush.bf16.msra.mxu0 %v934
  %1008 = vmatpush.bf16.msra.mxu0 %v930
  %1009 = vmatpush.bf16.msra.mxu0 %v926
  %1010 = vmatmul.bf16.gmra.mxu0 0
  %v1011 = vpop.f32.mrf.mxu0
  %v1012 = vadd.f32 0.0, %v1011
  %v1013 = vpop.f32.mrf.mxu0
  %1014 = vdwg.mxu0
  %1015 = vmatpush.bf16.msra.mxu0 %v955
  %1016 = vmatpush.bf16.msra.mxu0 %v951
  %1017 = vmatpush.bf16.msra.mxu0 %v947
  %1018 = vmatpush.bf16.msra.mxu0 %v943
  %1019 = vmatpush.bf16.msra.mxu0 %v939
  %1020 = vmatpush.bf16.msra.mxu0 %v935
  %1021 = vmatpush.bf16.msra.mxu0 %v931
  %1022 = vmatpush.bf16.msra.mxu0 %v927
  %1023 = vmatmul.bf16.gmra.mxu0 0
  %v1024 = vpop.f32.mrf.mxu0
  %v1025 = vadd.f32 0.0, %v1024
  %v1026 = vpop.f32.mrf.mxu0
  %1027 = vdwg.mxu0
  %1028 = vmatpush.bf16.msra.mxu0 %v956
  %1029 = vmatpush.bf16.msra.mxu0 %v952
  %1030 = vmatpush.bf16.msra.mxu0 %v948
  %1031 = vmatpush.bf16.msra.mxu0 %v944
  %1032 = vmatpush.bf16.msra.mxu0 %v940
  %1033 = vmatpush.bf16.msra.mxu0 %v936
  %1034 = vmatpush.bf16.msra.mxu0 %v932
  %1035 = vmatpush.bf16.msra.mxu0 %v928
  %1036 = vmatmul.bf16.gmra.mxu0 0
  %v1037 = vpop.f32.mrf.mxu0
  %v1038 = vadd.f32 0.0, %v1037
  %v1039 = vpop.f32.mrf.mxu0
  %1040 = vdwg.mxu0
  %v1041 = vadd.f32 %v825, %v999
  %v1042 = vadd.f32 %v826, %v1012
  %v1043 = vadd.f32 %v827, %v1025
  %v1044 = vadd.f32 %v828, %v1038
  %v1045 = vld [vmem:[#allocation2 + $0x1e0] sm:$0xff]
  %v1046 = vld [vmem:[#allocation2 + $0x1e8] sm:$0xff]
  %v1047 = vld [vmem:[#allocation2 + $0x1f0] sm:$0xff]
  %v1048 = vld [vmem:[#allocation2 + $0x1f8] sm:$0xff]
  %v1081 = vunpack.c.l.b16 %v792
  %v1082 = vunpack.c.h.b16 %v792
  %v1083 = vunpack.c.l.b16 %v793
  %v1084 = vunpack.c.h.b16 %v793
  %v1085 = vunpack.c.l.b16 %v794
  %v1086 = vunpack.c.h.b16 %v794
  %v1087 = vunpack.c.l.b16 %v795
  %v1088 = vunpack.c.h.b16 %v795
  %v1089 = vunpack.c.l.b16 %v796
  %v1090 = vunpack.c.h.b16 %v796
  %v1091 = vunpack.c.l.b16 %v797
  %v1092 = vunpack.c.h.b16 %v797
  %v1093 = vunpack.c.l.b16 %v798
  %v1094 = vunpack.c.h.b16 %v798
  %v1095 = vunpack.c.l.b16 %v799
  %v1096 = vunpack.c.h.b16 %v799
  %v1097 = vunpack.c.l.b16 %v800
  %v1098 = vunpack.c.h.b16 %v800
  %v1099 = vunpack.c.l.b16 %v801
  %v1100 = vunpack.c.h.b16 %v801
  %v1101 = vunpack.c.l.b16 %v802
  %v1102 = vunpack.c.h.b16 %v802
  %v1103 = vunpack.c.l.b16 %v803
  %v1104 = vunpack.c.h.b16 %v803
  %v1105 = vunpack.c.l.b16 %v804
  %v1106 = vunpack.c.h.b16 %v804
  %v1107 = vunpack.c.l.b16 %v805
  %v1108 = vunpack.c.h.b16 %v805
  %v1109 = vunpack.c.l.b16 %v806
  %v1110 = vunpack.c.h.b16 %v806
  %v1111 = vunpack.c.l.b16 %v807
  %v1112 = vunpack.c.h.b16 %v807
  %v1113 = vunpack.c.l.b16 %v808
  %v1114 = vunpack.c.h.b16 %v808
  %v1115 = vunpack.c.l.b16 %v809
  %v1116 = vunpack.c.h.b16 %v809
  %v1117 = vunpack.c.l.b16 %v810
  %v1118 = vunpack.c.h.b16 %v810
  %v1119 = vunpack.c.l.b16 %v811
  %v1120 = vunpack.c.h.b16 %v811
  %v1121 = vunpack.c.l.b16 %v812
  %v1122 = vunpack.c.h.b16 %v812
  %v1123 = vunpack.c.l.b16 %v813
  %v1124 = vunpack.c.h.b16 %v813
  %v1125 = vunpack.c.l.b16 %v814
  %v1126 = vunpack.c.h.b16 %v814
  %v1127 = vunpack.c.l.b16 %v815
  %v1128 = vunpack.c.h.b16 %v815
  %v1129 = vunpack.c.l.b16 %v816
  %v1130 = vunpack.c.h.b16 %v816
  %v1131 = vunpack.c.l.b16 %v817
  %v1132 = vunpack.c.h.b16 %v817
  %v1133 = vunpack.c.l.b16 %v818
  %v1134 = vunpack.c.h.b16 %v818
  %v1135 = vunpack.c.l.b16 %v819
  %v1136 = vunpack.c.h.b16 %v819
  %v1137 = vunpack.c.l.b16 %v820
  %v1138 = vunpack.c.h.b16 %v820
  %v1139 = vunpack.c.l.b16 %v821
  %v1140 = vunpack.c.h.b16 %v821
  %v1141 = vunpack.c.l.b16 %v822
  %v1142 = vunpack.c.h.b16 %v822
  %v1143 = vunpack.c.l.b16 %v823
  %v1144 = vunpack.c.h.b16 %v823
  %v1145 = vpack.c.b16 %v1085, %v1081
  %v1146 = vpack.c.b16 %v1086, %v1082
  %v1147 = vpack.c.b16 %v1087, %v1083
  %v1148 = vpack.c.b16 %v1088, %v1084
  %v1149 = vpack.c.b16 %v1093, %v1089
  %v1150 = vpack.c.b16 %v1094, %v1090
  %v1151 = vpack.c.b16 %v1095, %v1091
  %v1152 = vpack.c.b16 %v1096, %v1092
  %v1153 = vpack.c.b16 %v1101, %v1097
  %v1154 = vpack.c.b16 %v1102, %v1098
  %v1155 = vpack.c.b16 %v1103, %v1099
  %v1156 = vpack.c.b16 %v1104, %v1100
  %v1157 = vpack.c.b16 %v1109, %v1105
  %v1158 = vpack.c.b16 %v1110, %v1106
  %v1159 = vpack.c.b16 %v1111, %v1107
  %v1160 = vpack.c.b16 %v1112, %v1108
  %v1161 = vpack.c.b16 %v1117, %v1113
  %v1162 = vpack.c.b16 %v1118, %v1114
  %v1163 = vpack.c.b16 %v1119, %v1115
  %v1164 = vpack.c.b16 %v1120, %v1116
  %v1165 = vpack.c.b16 %v1125, %v1121
  %v1166 = vpack.c.b16 %v1126, %v1122
  %v1167 = vpack.c.b16 %v1127, %v1123
  %v1168 = vpack.c.b16 %v1128, %v1124
  %v1169 = vpack.c.b16 %v1133, %v1129
  %v1170 = vpack.c.b16 %v1134, %v1130
  %v1171 = vpack.c.b16 %v1135, %v1131
  %v1172 = vpack.c.b16 %v1136, %v1132
  %v1173 = vpack.c.b16 %v1141, %v1137
  %v1174 = vpack.c.b16 %v1142, %v1138
  %v1175 = vpack.c.b16 %v1143, %v1139
  %v1176 = vpack.c.b16 %v1144, %v1140
  %1209 = vmatpush.bf16.msra.mxu0 %v1173
  %1210 = vmatpush.bf16.msra.mxu0 %v1169
  %1211 = vmatpush.bf16.msra.mxu0 %v1165
  %1212 = vmatpush.bf16.msra.mxu0 %v1161
  %1213 = vmatpush.bf16.msra.mxu0 %v1157
  %1214 = vmatpush.bf16.msra.mxu0 %v1153
  %1215 = vmatpush.bf16.msra.mxu0 %v1149
  %1216 = vmatpush.bf16.msra.mxu0 %v1145
  %1217 = vmatmul.bf16.gmra.mxu0 0
  %v1218 = vpop.f32.mrf.mxu0
  %v1219 = vadd.f32 0.0, %v1218
  %v1220 = vpop.f32.mrf.mxu0
  %1221 = vdwg.mxu0
  %1222 = vmatpush.bf16.msra.mxu0 %v1174
  %1223 = vmatpush.bf16.msra.mxu0 %v1170
  %1224 = vmatpush.bf16.msra.mxu0 %v1166
  %1225 = vmatpush.bf16.msra.mxu0 %v1162
  %1226 = vmatpush.bf16.msra.mxu0 %v1158
  %1227 = vmatpush.bf16.msra.mxu0 %v1154
  %1228 = vmatpush.bf16.msra.mxu0 %v1150
  %1229 = vmatpush.bf16.msra.mxu0 %v1146
  %1230 = vmatmul.bf16.gmra.mxu0 0
  %v1231 = vpop.f32.mrf.mxu0
  %v1232 = vadd.f32 0.0, %v1231
  %v1233 = vpop.f32.mrf.mxu0
  %1234 = vdwg.mxu0
  %1235 = vmatpush.bf16.msra.mxu0 %v1175
  %1236 = vmatpush.bf16.msra.mxu0 %v1171
  %1237 = vmatpush.bf16.msra.mxu0 %v1167
  %1238 = vmatpush.bf16.msra.mxu0 %v1163
  %1239 = vmatpush.bf16.msra.mxu0 %v1159
  %1240 = vmatpush.bf16.msra.mxu0 %v1155
  %1241 = vmatpush.bf16.msra.mxu0 %v1151
  %1242 = vmatpush.bf16.msra.mxu0 %v1147
  %1243 = vmatmul.bf16.gmra.mxu0 0
  %v1244 = vpop.f32.mrf.mxu0
  %v1245 = vadd.f32 0.0, %v1244
  %v1246 = vpop.f32.mrf.mxu0
  %1247 = vdwg.mxu0
  %1248 = vmatpush.bf16.msra.mxu0 %v1176
  %1249 = vmatpush.bf16.msra.mxu0 %v1172
  %1250 = vmatpush.bf16.msra.mxu0 %v1168
  %1251 = vmatpush.bf16.msra.mxu0 %v1164
  %1252 = vmatpush.bf16.msra.mxu0 %v1160
  %1253 = vmatpush.bf16.msra.mxu0 %v1156
  %1254 = vmatpush.bf16.msra.mxu0 %v1152
  %1255 = vmatpush.bf16.msra.mxu0 %v1148
  %1256 = vmatmul.bf16.gmra.mxu0 0
  %v1257 = vpop.f32.mrf.mxu0
  %v1258 = vadd.f32 0.0, %v1257
  %v1259 = vpop.f32.mrf.mxu0
  %1260 = vdwg.mxu0
  %v1261 = vadd.f32 %v1045, %v1219
  %v1262 = vadd.f32 %v1046, %v1232
  %v1263 = vadd.f32 %v1047, %v1245
  %v1264 = vadd.f32 %v1048, %v1258
  %v1265 = vxor.u32 %v1041, 2147483648
  %v1266 = vmul.f32 %v1265, 1.442695
  %v1267 = vpow.pop %v1266
  %v1268 = vadd.f32 %v1267, 1.0
  %v1269 = vrcp.pop %v1268
  %v1270 = vmul.f32 %v1268, %v1269
  %v1271 = vsub.f32 1.0, %v1270
  %v1272 = vmul.f32 %v1269, %v1271
  %v1273 = vadd.f32 %v1269, %v1272
  %vm1274 = vweird.f32 %v1268
  %vm1275 = vweird.f32 %v1269
  %vm1276 = vmor %vm1274, %vm1275
  %v1277 = vsel %vm1276, %v1269, %v1273
  %v1278 = vand.u32 2147483647, %v1268
  %vm1279 = vcmp.eq.f32.partialorder %v1278, 8.507059e+37
  %v1280 = vand.u32 %v1268, 2147483648
  %v1281 = vor.u32 1.1754944e-38, %v1280
  %v1282 = vsel %vm1279, %v1281, %v1277
  %v1283 = vmul.f32 1.0, %v1282
  %v1284 = vxor.u32 %v1042, 2147483648
  %v1285 = vmul.f32 %v1284, 1.442695
  %v1286 = vpow.pop %v1285
  %v1287 = vadd.f32 %v1286, 1.0
  %v1288 = vrcp.pop %v1287
  %v1289 = vmul.f32 %v1287, %v1288
  %v1290 = vsub.f32 1.0, %v1289
  %v1291 = vmul.f32 %v1288, %v1290
  %v1292 = vadd.f32 %v1288, %v1291
  %vm1293 = vweird.f32 %v1287
  %vm1294 = vweird.f32 %v1288
  %vm1295 = vmor %vm1293, %vm1294
  %v1296 = vsel %vm1295, %v1288, %v1292
  %v1297 = vand.u32 2147483647, %v1287
  %vm1298 = vcmp.eq.f32.partialorder %v1297, 8.507059e+37
  %v1299 = vand.u32 %v1287, 2147483648
  %v1300 = vor.u32 1.1754944e-38, %v1299
  %v1301 = vsel %vm1298, %v1300, %v1296
  %v1302 = vmul.f32 1.0, %v1301
  %v1303 = vtanh.pop %v1043
  %v1304 = vxor.u32 %v1044, 2147483648
  %v1305 = vmul.f32 %v1304, 1.442695
  %v1306 = vpow.pop %v1305
  %v1307 = vadd.f32 %v1306, 1.0
  %v1308 = vrcp.pop %v1307
  %v1309 = vmul.f32 %v1307, %v1308
  %v1310 = vsub.f32 1.0, %v1309
  %v1311 = vmul.f32 %v1308, %v1310
  %v1312 = vadd.f32 %v1308, %v1311
  %vm1313 = vweird.f32 %v1307
  %vm1314 = vweird.f32 %v1308
  %vm1315 = vmor %vm1313, %vm1314
  %v1316 = vsel %vm1315, %v1308, %v1312
  %v1317 = vand.u32 2147483647, %v1307
  %vm1318 = vcmp.eq.f32.partialorder %v1317, 8.507059e+37
  %v1319 = vand.u32 %v1307, 2147483648
  %v1320 = vor.u32 1.1754944e-38, %v1319
  %v1321 = vsel %vm1318, %v1320, %v1316
  %v1322 = vmul.f32 1.0, %v1321
  %v1323 = vmul.f32 %v1302, 0.0
  %v1324 = vmul.f32 %v1283, %v1303
  %v1325 = vadd.f32 %v1323, %v1324
  %v1326 = vtanh.pop %v1325
  %v1327 = vmul.f32 %v1322, %v1326
  %v1328 = vxor.u32 %v1261, 2147483648
  %v1329 = vmul.f32 %v1328, 1.442695
  %v1330 = vpow.pop %v1329
  %v1331 = vadd.f32 %v1330, 1.0
  %v1332 = vrcp.pop %v1331
  %v1333 = vmul.f32 %v1331, %v1332
  %v1334 = vsub.f32 1.0, %v1333
  %v1335 = vmul.f32 %v1332, %v1334
  %v1336 = vadd.f32 %v1332, %v1335
  %vm1337 = vweird.f32 %v1331
  %vm1338 = vweird.f32 %v1332
  %vm1339 = vmor %vm1337, %vm1338
  %v1340 = vsel %vm1339, %v1332, %v1336
  %v1341 = vand.u32 2147483647, %v1331
  %vm1342 = vcmp.eq.f32.partialorder %v1341, 8.507059e+37
  %v1343 = vand.u32 %v1331, 2147483648
  %v1344 = vor.u32 1.1754944e-38, %v1343
  %v1345 = vsel %vm1342, %v1344, %v1340
  %v1346 = vmul.f32 1.0, %v1345
  %v1347 = vxor.u32 %v1262, 2147483648
  %v1348 = vmul.f32 %v1347, 1.442695
  %v1349 = vpow.pop %v1348
  %v1350 = vadd.f32 %v1349, 1.0
  %v1351 = vrcp.pop %v1350
  %v1352 = vmul.f32 %v1350, %v1351
  %v1353 = vsub.f32 1.0, %v1352
  %v1354 = vmul.f32 %v1351, %v1353
  %v1355 = vadd.f32 %v1351, %v1354
  %vm1356 = vweird.f32 %v1350
  %vm1357 = vweird.f32 %v1351
  %vm1358 = vmor %vm1356, %vm1357
  %v1359 = vsel %vm1358, %v1351, %v1355
  %v1360 = vand.u32 2147483647, %v1350
  %vm1361 = vcmp.eq.f32.partialorder %v1360, 8.507059e+37
  %v1362 = vand.u32 %v1350, 2147483648
  %v1363 = vor.u32 1.1754944e-38, %v1362
  %v1364 = vsel %vm1361, %v1363, %v1359
  %v1365 = vmul.f32 1.0, %v1364
  %v1366 = vtanh.pop %v1263
  %v1367 = vxor.u32 %v1264, 2147483648
  %v1368 = vmul.f32 %v1367, 1.442695
  %v1369 = vpow.pop %v1368
  %v1370 = vadd.f32 %v1369, 1.0
  %v1371 = vrcp.pop %v1370
  %v1372 = vmul.f32 %v1370, %v1371
  %v1373 = vsub.f32 1.0, %v1372
  %v1374 = vmul.f32 %v1371, %v1373
  %v1375 = vadd.f32 %v1371, %v1374
  %vm1376 = vweird.f32 %v1370
  %vm1377 = vweird.f32 %v1371
  %vm1378 = vmor %vm1376, %vm1377
  %v1379 = vsel %vm1378, %v1371, %v1375
  %v1380 = vand.u32 2147483647, %v1370
  %vm1381 = vcmp.eq.f32.partialorder %v1380, 8.507059e+37
  %v1382 = vand.u32 %v1370, 2147483648
  %v1383 = vor.u32 1.1754944e-38, %v1382
  %v1384 = vsel %vm1381, %v1383, %v1379
  %v1385 = vmul.f32 1.0, %v1384
  %v1386 = vmul.f32 %v1365, 0.0
  %v1387 = vmul.f32 %v1346, %v1366
  %v1388 = vadd.f32 %v1386, %v1387
  %v1389 = vtanh.pop %v1388
  %v1390 = vmul.f32 %v1385, %v1389
  %vm1391 = vcmp.gt.s32.totalorder %v824, 0
  %vm1392 = vcmp.gt.s32.totalorder %v824, 7
  %v1393 = vsel %vm1391, 1, 0
  %1394 = vset.pattern.permute.xlu0 0
  %1395 = vperm.xlu0 %1394, %v1393
  %v1396 = vpop.permute.xlu0 %1395
  %vm1397 = vcmp.eq.s32.totalorder %v1396, 1
  %v1398 = vsel %vm1397, %v1327, 0.0
  %v1399 = vsel %vm1397, %v1325, 0.0
  %v1400 = vsel %vm1392, 1, 0
  %1401 = vset.pattern.permute.xlu0 0
  %1402 = vperm.xlu0 %1401, %v1400
  %v1403 = vpop.permute.xlu0 %1402
  %vm1404 = vcmp.eq.s32.totalorder %v1403, 1
  %v1405 = vsel %vm1404, %v1390, 0.0
  %v1406 = vsel %vm1404, %v1388, 0.0
  %v1407 = vld [vmem:[#allocation2 + $0x40] sm:$0xff]
  %v1408 = vld [vmem:[#allocation2 + $0x48] sm:$0xff]
  %v1409 = vld [vmem:[#allocation2 + $0x50] sm:$0xff]
  %v1410 = vld [vmem:[#allocation2 + $0x58] sm:$0xff]
  %v1411 = vpack.c.bf16 %v1398, %v1398
  %1412 = vmatpush.bf16.msra.mxu0 %v953
  %1413 = vmatpush.bf16.msra.mxu0 %v949
  %1414 = vmatpush.bf16.msra.mxu0 %v945
  %1415 = vmatpush.bf16.msra.mxu0 %v941
  %1416 = vmatpush.bf16.msra.mxu0 %v937
  %1417 = vmatpush.bf16.msra.mxu0 %v933
  %1418 = vmatpush.bf16.msra.mxu0 %v929
  %1419 = vmatpush.bf16.msra.mxu0 %v925
  %1420 = vmatmul.bf16.gmra.mxu0 %v1411
  %v1421 = vpop.f32.mrf.mxu0
  %v1422 = vadd.f32 0.0, %v1421
  %v1423 = vpop.f32.mrf.mxu0
  %1424 = vdwg.mxu0
  %1425 = vmatpush.bf16.msra.mxu0 %v954
  %1426 = vmatpush.bf16.msra.mxu0 %v950
  %1427 = vmatpush.bf16.msra.mxu0 %v946
  %1428 = vmatpush.bf16.msra.mxu0 %v942
  %1429 = vmatpush.bf16.msra.mxu0 %v938
  %1430 = vmatpush.bf16.msra.mxu0 %v934
  %1431 = vmatpush.bf16.msra.mxu0 %v930
  %1432 = vmatpush.bf16.msra.mxu0 %v926
  %1433 = vmatmul.bf16.gmra.mxu0 %v1411
  %v1434 = vpop.f32.mrf.mxu0
  %v1435 = vadd.f32 0.0, %v1434
  %v1436 = vpop.f32.mrf.mxu0
  %1437 = vdwg.mxu0
  %1438 = vmatpush.bf16.msra.mxu0 %v955
  %1439 = vmatpush.bf16.msra.mxu0 %v951
  %1440 = vmatpush.bf16.msra.mxu0 %v947
  %1441 = vmatpush.bf16.msra.mxu0 %v943
  %1442 = vmatpush.bf16.msra.mxu0 %v939
  %1443 = vmatpush.bf16.msra.mxu0 %v935
  %1444 = vmatpush.bf16.msra.mxu0 %v931
  %1445 = vmatpush.bf16.msra.mxu0 %v927
  %1446 = vmatmul.bf16.gmra.mxu0 %v1411
  %v1447 = vpop.f32.mrf.mxu0
  %v1448 = vadd.f32 0.0, %v1447
  %v1449 = vpop.f32.mrf.mxu0
  %1450 = vdwg.mxu0
  %1451 = vmatpush.bf16.msra.mxu0 %v956
  %1452 = vmatpush.bf16.msra.mxu0 %v952
  %1453 = vmatpush.bf16.msra.mxu0 %v948
  %1454 = vmatpush.bf16.msra.mxu0 %v944
  %1455 = vmatpush.bf16.msra.mxu0 %v940
  %1456 = vmatpush.bf16.msra.mxu0 %v936
  %1457 = vmatpush.bf16.msra.mxu0 %v932
  %1458 = vmatpush.bf16.msra.mxu0 %v928
  %1459 = vmatmul.bf16.gmra.mxu0 %v1411
  %v1460 = vpop.f32.mrf.mxu0
  %v1461 = vadd.f32 0.0, %v1460
  %v1462 = vpop.f32.mrf.mxu0
  %1463 = vdwg.mxu0
  %v1464 = vadd.f32 %v1407, %v1422
  %v1465 = vadd.f32 %v1408, %v1435
  %v1466 = vadd.f32 %v1409, %v1448
  %v1467 = vadd.f32 %v1410, %v1461
  %v1468 = vld [vmem:[#allocation2 + $0x1a0] sm:$0xff]
  %v1469 = vld [vmem:[#allocation2 + $0x1a8] sm:$0xff]
  %v1470 = vld [vmem:[#allocation2 + $0x1b0] sm:$0xff]
  %v1471 = vld [vmem:[#allocation2 + $0x1b8] sm:$0xff]
  %v1472 = vpack.c.bf16 %v1405, %v1405
  %1473 = vmatpush.bf16.msra.mxu0 %v1173
  %1474 = vmatpush.bf16.msra.mxu0 %v1169
  %1475 = vmatpush.bf16.msra.mxu0 %v1165
  %1476 = vmatpush.bf16.msra.mxu0 %v1161
  %1477 = vmatpush.bf16.msra.mxu0 %v1157
  %1478 = vmatpush.bf16.msra.mxu0 %v1153
  %1479 = vmatpush.bf16.msra.mxu0 %v1149
  %1480 = vmatpush.bf16.msra.mxu0 %v1145
  %1481 = vmatmul.bf16.gmra.mxu0 %v1472
  %v1482 = vpop.f32.mrf.mxu0
  %v1483 = vadd.f32 0.0, %v1482
  %v1484 = vpop.f32.mrf.mxu0
  %1485 = vdwg.mxu0
  %1486 = vmatpush.bf16.msra.mxu0 %v1174
  %1487 = vmatpush.bf16.msra.mxu0 %v1170
  %1488 = vmatpush.bf16.msra.mxu0 %v1166
  %1489 = vmatpush.bf16.msra.mxu0 %v1162
  %1490 = vmatpush.bf16.msra.mxu0 %v1158
  %1491 = vmatpush.bf16.msra.mxu0 %v1154
  %1492 = vmatpush.bf16.msra.mxu0 %v1150
  %1493 = vmatpush.bf16.msra.mxu0 %v1146
  %1494 = vmatmul.bf16.gmra.mxu0 %v1472
  %v1495 = vpop.f32.mrf.mxu0
  %v1496 = vadd.f32 0.0, %v1495
  %v1497 = vpop.f32.mrf.mxu0
  %1498 = vdwg.mxu0
  %1499 = vmatpush.bf16.msra.mxu0 %v1175
  %1500 = vmatpush.bf16.msra.mxu0 %v1171
  %1501 = vmatpush.bf16.msra.mxu0 %v1167
  %1502 = vmatpush.bf16.msra.mxu0 %v1163
  %1503 = vmatpush.bf16.msra.mxu0 %v1159
  %1504 = vmatpush.bf16.msra.mxu0 %v1155
  %1505 = vmatpush.bf16.msra.mxu0 %v1151
  %1506 = vmatpush.bf16.msra.mxu0 %v1147
  %1507 = vmatmul.bf16.gmra.mxu0 %v1472
  %v1508 = vpop.f32.mrf.mxu0
  %v1509 = vadd.f32 0.0, %v1508
  %v1510 = vpop.f32.mrf.mxu0
  %1511 = vdwg.mxu0
  %1512 = vmatpush.bf16.msra.mxu0 %v1176
  %1513 = vmatpush.bf16.msra.mxu0 %v1172
  %1514 = vmatpush.bf16.msra.mxu0 %v1168
  %1515 = vmatpush.bf16.msra.mxu0 %v1164
  %1516 = vmatpush.bf16.msra.mxu0 %v1160
  %1517 = vmatpush.bf16.msra.mxu0 %v1156
  %1518 = vmatpush.bf16.msra.mxu0 %v1152
  %1519 = vmatpush.bf16.msra.mxu0 %v1148
  %1520 = vmatmul.bf16.gmra.mxu0 %v1472
  %v1521 = vpop.f32.mrf.mxu0
  %v1522 = vadd.f32 0.0, %v1521
  %v1523 = vpop.f32.mrf.mxu0
  %1524 = vdwg.mxu0
  %v1525 = vadd.f32 %v1468, %v1483
  %v1526 = vadd.f32 %v1469, %v1496
  %v1527 = vadd.f32 %v1470, %v1509
  %v1528 = vadd.f32 %v1471, %v1522
  %v1529 = vxor.u32 %v1464, 2147483648
  %v1530 = vmul.f32 %v1529, 1.442695
  %v1531 = vpow.pop %v1530
  %v1532 = vadd.f32 %v1531, 1.0
  %v1533 = vrcp.pop %v1532
  %v1534 = vmul.f32 %v1532, %v1533
  %v1535 = vsub.f32 1.0, %v1534
  %v1536 = vmul.f32 %v1533, %v1535
  %v1537 = vadd.f32 %v1533, %v1536
  %vm1538 = vweird.f32 %v1532
  %vm1539 = vweird.f32 %v1533
  %vm1540 = vmor %vm1538, %vm1539
  %v1541 = vsel %vm1540, %v1533, %v1537
  %v1542 = vand.u32 2147483647, %v1532
  %vm1543 = vcmp.eq.f32.partialorder %v1542, 8.507059e+37
  %v1544 = vand.u32 %v1532, 2147483648
  %v1545 = vor.u32 1.1754944e-38, %v1544
  %v1546 = vsel %vm1543, %v1545, %v1541
  %v1547 = vmul.f32 1.0, %v1546
  %v1548 = vxor.u32 %v1465, 2147483648
  %v1549 = vmul.f32 %v1548, 1.442695
  %v1550 = vpow.pop %v1549
  %v1551 = vadd.f32 %v1550, 1.0
  %v1552 = vrcp.pop %v1551
  %v1553 = vmul.f32 %v1551, %v1552
  %v1554 = vsub.f32 1.0, %v1553
  %v1555 = vmul.f32 %v1552, %v1554
  %v1556 = vadd.f32 %v1552, %v1555
  %vm1557 = vweird.f32 %v1551
  %vm1558 = vweird.f32 %v1552
  %vm1559 = vmor %vm1557, %vm1558
  %v1560 = vsel %vm1559, %v1552, %v1556
  %v1561 = vand.u32 2147483647, %v1551
  %vm1562 = vcmp.eq.f32.partialorder %v1561, 8.507059e+37
  %v1563 = vand.u32 %v1551, 2147483648
  %v1564 = vor.u32 1.1754944e-38, %v1563
  %v1565 = vsel %vm1562, %v1564, %v1560
  %v1566 = vmul.f32 1.0, %v1565
  %v1567 = vtanh.pop %v1466
  %v1568 = vxor.u32 %v1467, 2147483648
  %v1569 = vmul.f32 %v1568, 1.442695
  %v1570 = vpow.pop %v1569
  %v1571 = vadd.f32 %v1570, 1.0
  %v1572 = vrcp.pop %v1571
  %v1573 = vmul.f32 %v1571, %v1572
  %v1574 = vsub.f32 1.0, %v1573
  %v1575 = vmul.f32 %v1572, %v1574
  %v1576 = vadd.f32 %v1572, %v1575
  %vm1577 = vweird.f32 %v1571
  %vm1578 = vweird.f32 %v1572
  %vm1579 = vmor %vm1577, %vm1578
  %v1580 = vsel %vm1579, %v1572, %v1576
  %v1581 = vand.u32 2147483647, %v1571
  %vm1582 = vcmp.eq.f32.partialorder %v1581, 8.507059e+37
  %v1583 = vand.u32 %v1571, 2147483648
  %v1584 = vor.u32 1.1754944e-38, %v1583
  %v1585 = vsel %vm1582, %v1584, %v1580
  %v1586 = vmul.f32 1.0, %v1585
  %v1587 = vmul.f32 %v1566, %v1399
  %v1588 = vmul.f32 %v1547, %v1567
  %v1589 = vadd.f32 %v1587, %v1588
  %v1590 = vtanh.pop %v1589
  %v1591 = vmul.f32 %v1586, %v1590
  %v1592 = vxor.u32 %v1525, 2147483648
  %v1593 = vmul.f32 %v1592, 1.442695
  %v1594 = vpow.pop %v1593
  %v1595 = vadd.f32 %v1594, 1.0
  %v1596 = vrcp.pop %v1595
  %v1597 = vmul.f32 %v1595, %v1596
  %v1598 = vsub.f32 1.0, %v1597
  %v1599 = vmul.f32 %v1596, %v1598
  %v1600 = vadd.f32 %v1596, %v1599
  %vm1601 = vweird.f32 %v1595
  %vm1602 = vweird.f32 %v1596
  %vm1603 = vmor %vm1601, %vm1602
  %v1604 = vsel %vm1603, %v1596, %v1600
  %v1605 = vand.u32 2147483647, %v1595
  %vm1606 = vcmp.eq.f32.partialorder %v1605, 8.507059e+37
  %v1607 = vand.u32 %v1595, 2147483648
  %v1608 = vor.u32 1.1754944e-38, %v1607
  %v1609 = vsel %vm1606, %v1608, %v1604
  %v1610 = vmul.f32 1.0, %v1609
  %v1611 = vxor.u32 %v1526, 2147483648
  %v1612 = vmul.f32 %v1611, 1.442695
  %v1613 = vpow.pop %v1612
  %v1614 = vadd.f32 %v1613, 1.0
  %v1615 = vrcp.pop %v1614
  %v1616 = vmul.f32 %v1614, %v1615
  %v1617 = vsub.f32 1.0, %v1616
  %v1618 = vmul.f32 %v1615, %v1617
  %v1619 = vadd.f32 %v1615, %v1618
  %vm1620 = vweird.f32 %v1614
  %vm1621 = vweird.f32 %v1615
  %vm1622 = vmor %vm1620, %vm1621
  %v1623 = vsel %vm1622, %v1615, %v1619
  %v1624 = vand.u32 2147483647, %v1614
  %vm1625 = vcmp.eq.f32.partialorder %v1624, 8.507059e+37
  %v1626 = vand.u32 %v1614, 2147483648
  %v1627 = vor.u32 1.1754944e-38, %v1626
  %v1628 = vsel %vm1625, %v1627, %v1623
  %v1629 = vmul.f32 1.0, %v1628
  %v1630 = vtanh.pop %v1527
  %v1631 = vxor.u32 %v1528, 2147483648
  %v1632 = vmul.f32 %v1631, 1.442695
  %v1633 = vpow.pop %v1632
  %v1634 = vadd.f32 %v1633, 1.0
  %v1635 = vrcp.pop %v1634
  %v1636 = vmul.f32 %v1634, %v1635
  %v1637 = vsub.f32 1.0, %v1636
  %v1638 = vmul.f32 %v1635, %v1637
  %v1639 = vadd.f32 %v1635, %v1638
  %vm1640 = vweird.f32 %v1634
  %vm1641 = vweird.f32 %v1635
  %vm1642 = vmor %vm1640, %vm1641
  %v1643 = vsel %vm1642, %v1635, %v1639
  %v1644 = vand.u32 2147483647, %v1634
  %vm1645 = vcmp.eq.f32.partialorder %v1644, 8.507059e+37
  %v1646 = vand.u32 %v1634, 2147483648
  %v1647 = vor.u32 1.1754944e-38, %v1646
  %v1648 = vsel %vm1645, %v1647, %v1643
  %v1649 = vmul.f32 1.0, %v1648
  %v1650 = vmul.f32 %v1629, %v1406
  %v1651 = vmul.f32 %v1610, %v1630
  %v1652 = vadd.f32 %v1650, %v1651
  %v1653 = vtanh.pop %v1652
  %v1654 = vmul.f32 %v1649, %v1653
  %vm1655 = vcmp.gt.s32.totalorder %v824, 1
  %vm1656 = vcmp.gt.s32.totalorder %v824, 6
  %v1657 = vsel %vm1655, 1, 0
  %1658 = vset.pattern.permute.xlu0 0
  %1659 = vperm.xlu0 %1658, %v1657
  %v1660 = vpop.permute.xlu0 %1659
  %vm1661 = vcmp.eq.s32.totalorder %v1660, 1
  %v1662 = vsel %vm1661, %v1591, %v1398
  %v1663 = vsel %vm1661, %v1589, %v1399
  %v1664 = vsel %vm1656, 1, 0
  %1665 = vset.pattern.permute.xlu0 0
  %1666 = vperm.xlu0 %1665, %v1664
  %v1667 = vpop.permute.xlu0 %1666
  %vm1668 = vcmp.eq.s32.totalorder %v1667, 1
  %v1669 = vsel %vm1668, %v1654, %v1405
  %v1670 = vsel %vm1668, %v1652, %v1406
  %v1671 = vld [vmem:[#allocation2 + $0x80] sm:$0xff]
  %v1672 = vld [vmem:[#allocation2 + $0x88] sm:$0xff]
  %v1673 = vld [vmem:[#allocation2 + $0x90] sm:$0xff]
  %v1674 = vld [vmem:[#allocation2 + $0x98] sm:$0xff]
  %v1675 = vpack.c.bf16 %v1662, %v1662
  %1676 = vmatpush.bf16.msra.mxu0 %v953
  %1677 = vmatpush.bf16.msra.mxu0 %v949
  %1678 = vmatpush.bf16.msra.mxu0 %v945
  %1679 = vmatpush.bf16.msra.mxu0 %v941
  %1680 = vmatpush.bf16.msra.mxu0 %v937
  %1681 = vmatpush.bf16.msra.mxu0 %v933
  %1682 = vmatpush.bf16.msra.mxu0 %v929
  %1683 = vmatpush.bf16.msra.mxu0 %v925
  %1684 = vmatmul.bf16.gmra.mxu0 %v1675
  %v1685 = vpop.f32.mrf.mxu0
  %v1686 = vadd.f32 0.0, %v1685
  %v1687 = vpop.f32.mrf.mxu0
  %1688 = vdwg.mxu0
  %1689 = vmatpush.bf16.msra.mxu0 %v954
  %1690 = vmatpush.bf16.msra.mxu0 %v950
  %1691 = vmatpush.bf16.msra.mxu0 %v946
  %1692 = vmatpush.bf16.msra.mxu0 %v942
  %1693 = vmatpush.bf16.msra.mxu0 %v938
  %1694 = vmatpush.bf16.msra.mxu0 %v934
  %1695 = vmatpush.bf16.msra.mxu0 %v930
  %1696 = vmatpush.bf16.msra.mxu0 %v926
  %1697 = vmatmul.bf16.gmra.mxu0 %v1675
  %v1698 = vpop.f32.mrf.mxu0
  %v1699 = vadd.f32 0.0, %v1698
  %v1700 = vpop.f32.mrf.mxu0
  %1701 = vdwg.mxu0
  %1702 = vmatpush.bf16.msra.mxu0 %v955
  %1703 = vmatpush.bf16.msra.mxu0 %v951
  %1704 = vmatpush.bf16.msra.mxu0 %v947
  %1705 = vmatpush.bf16.msra.mxu0 %v943
  %1706 = vmatpush.bf16.msra.mxu0 %v939
  %1707 = vmatpush.bf16.msra.mxu0 %v935
  %1708 = vmatpush.bf16.msra.mxu0 %v931
  %1709 = vmatpush.bf16.msra.mxu0 %v927
  %1710 = vmatmul.bf16.gmra.mxu0 %v1675
  %v1711 = vpop.f32.mrf.mxu0
  %v1712 = vadd.f32 0.0, %v1711
  %v1713 = vpop.f32.mrf.mxu0
  %1714 = vdwg.mxu0
  %1715 = vmatpush.bf16.msra.mxu0 %v956
  %1716 = vmatpush.bf16.msra.mxu0 %v952
  %1717 = vmatpush.bf16.msra.mxu0 %v948
  %1718 = vmatpush.bf16.msra.mxu0 %v944
  %1719 = vmatpush.bf16.msra.mxu0 %v940
  %1720 = vmatpush.bf16.msra.mxu0 %v936
  %1721 = vmatpush.bf16.msra.mxu0 %v932
  %1722 = vmatpush.bf16.msra.mxu0 %v928
  %1723 = vmatmul.bf16.gmra.mxu0 %v1675
  %v1724 = vpop.f32.mrf.mxu0
  %v1725 = vadd.f32 0.0, %v1724
  %v1726 = vpop.f32.mrf.mxu0
  %1727 = vdwg.mxu0
  %v1728 = vadd.f32 %v1671, %v1686
  %v1729 = vadd.f32 %v1672, %v1699
  %v1730 = vadd.f32 %v1673, %v1712
  %v1731 = vadd.f32 %v1674, %v1725
  %v1732 = vld [vmem:[#allocation2 + $0x160] sm:$0xff]
  %v1733 = vld [vmem:[#allocation2 + $0x168] sm:$0xff]
  %v1734 = vld [vmem:[#allocation2 + $0x170] sm:$0xff]
  %v1735 = vld [vmem:[#allocation2 + $0x178] sm:$0xff]
  %v1736 = vpack.c.bf16 %v1669, %v1669
  %1737 = vmatpush.bf16.msra.mxu0 %v1173
  %1738 = vmatpush.bf16.msra.mxu0 %v1169
  %1739 = vmatpush.bf16.msra.mxu0 %v1165
  %1740 = vmatpush.bf16.msra.mxu0 %v1161
  %1741 = vmatpush.bf16.msra.mxu0 %v1157
  %1742 = vmatpush.bf16.msra.mxu0 %v1153
  %1743 = vmatpush.bf16.msra.mxu0 %v1149
  %1744 = vmatpush.bf16.msra.mxu0 %v1145
  %1745 = vmatmul.bf16.gmra.mxu0 %v1736
  %v1746 = vpop.f32.mrf.mxu0
  %v1747 = vadd.f32 0.0, %v1746
  %v1748 = vpop.f32.mrf.mxu0
  %1749 = vdwg.mxu0
  %1750 = vmatpush.bf16.msra.mxu0 %v1174
  %1751 = vmatpush.bf16.msra.mxu0 %v1170
  %1752 = vmatpush.bf16.msra.mxu0 %v1166
  %1753 = vmatpush.bf16.msra.mxu0 %v1162
  %1754 = vmatpush.bf16.msra.mxu0 %v1158
  %1755 = vmatpush.bf16.msra.mxu0 %v1154
  %1756 = vmatpush.bf16.msra.mxu0 %v1150
  %1757 = vmatpush.bf16.msra.mxu0 %v1146
  %1758 = vmatmul.bf16.gmra.mxu0 %v1736
  %v1759 = vpop.f32.mrf.mxu0
  %v1760 = vadd.f32 0.0, %v1759
  %v1761 = vpop.f32.mrf.mxu0
  %1762 = vdwg.mxu0
  %1763 = vmatpush.bf16.msra.mxu0 %v1175
  %1764 = vmatpush.bf16.msra.mxu0 %v1171
  %1765 = vmatpush.bf16.msra.mxu0 %v1167
  %1766 = vmatpush.bf16.msra.mxu0 %v1163
  %1767 = vmatpush.bf16.msra.mxu0 %v1159
  %1768 = vmatpush.bf16.msra.mxu0 %v1155
  %1769 = vmatpush.bf16.msra.mxu0 %v1151
  %1770 = vmatpush.bf16.msra.mxu0 %v1147
  %1771 = vmatmul.bf16.gmra.mxu0 %v1736
  %v1772 = vpop.f32.mrf.mxu0
  %v1773 = vadd.f32 0.0, %v1772
  %v1774 = vpop.f32.mrf.mxu0
  %1775 = vdwg.mxu0
  %1776 = vmatpush.bf16.msra.mxu0 %v1176
  %1777 = vmatpush.bf16.msra.mxu0 %v1172
  %1778 = vmatpush.bf16.msra.mxu0 %v1168
  %1779 = vmatpush.bf16.msra.mxu0 %v1164
  %1780 = vmatpush.bf16.msra.mxu0 %v1160
  %1781 = vmatpush.bf16.msra.mxu0 %v1156
  %1782 = vmatpush.bf16.msra.mxu0 %v1152
  %1783 = vmatpush.bf16.msra.mxu0 %v1148
  %1784 = vmatmul.bf16.gmra.mxu0 %v1736
  %v1785 = vpop.f32.mrf.mxu0
  %v1786 = vadd.f32 0.0, %v1785
  %v1787 = vpop.f32.mrf.mxu0
  %1788 = vdwg.mxu0
  %v1789 = vadd.f32 %v1732, %v1747
  %v1790 = vadd.f32 %v1733, %v1760
  %v1791 = vadd.f32 %v1734, %v1773
  %v1792 = vadd.f32 %v1735, %v1786
  %v1793 = vxor.u32 %v1728, 2147483648
  %v1794 = vmul.f32 %v1793, 1.442695
  %v1795 = vpow.pop %v1794
  %v1796 = vadd.f32 %v1795, 1.0
  %v1797 = vrcp.pop %v1796
  %v1798 = vmul.f32 %v1796, %v1797
  %v1799 = vsub.f32 1.0, %v1798
  %v1800 = vmul.f32 %v1797, %v1799
  %v1801 = vadd.f32 %v1797, %v1800
  %vm1802 = vweird.f32 %v1796
  %vm1803 = vweird.f32 %v1797
  %vm1804 = vmor %vm1802, %vm1803
  %v1805 = vsel %vm1804, %v1797, %v1801
  %v1806 = vand.u32 2147483647, %v1796
  %vm1807 = vcmp.eq.f32.partialorder %v1806, 8.507059e+37
  %v1808 = vand.u32 %v1796, 2147483648
  %v1809 = vor.u32 1.1754944e-38, %v1808
  %v1810 = vsel %vm1807, %v1809, %v1805
  %v1811 = vmul.f32 1.0, %v1810
  %v1812 = vxor.u32 %v1729, 2147483648
  %v1813 = vmul.f32 %v1812, 1.442695
  %v1814 = vpow.pop %v1813
  %v1815 = vadd.f32 %v1814, 1.0
  %v1816 = vrcp.pop %v1815
  %v1817 = vmul.f32 %v1815, %v1816
  %v1818 = vsub.f32 1.0, %v1817
  %v1819 = vmul.f32 %v1816, %v1818
  %v1820 = vadd.f32 %v1816, %v1819
  %vm1821 = vweird.f32 %v1815
  %vm1822 = vweird.f32 %v1816
  %vm1823 = vmor %vm1821, %vm1822
  %v1824 = vsel %vm1823, %v1816, %v1820
  %v1825 = vand.u32 2147483647, %v1815
  %vm1826 = vcmp.eq.f32.partialorder %v1825, 8.507059e+37
  %v1827 = vand.u32 %v1815, 2147483648
  %v1828 = vor.u32 1.1754944e-38, %v1827
  %v1829 = vsel %vm1826, %v1828, %v1824
  %v1830 = vmul.f32 1.0, %v1829
  %v1831 = vtanh.pop %v1730
  %v1832 = vxor.u32 %v1731, 2147483648
  %v1833 = vmul.f32 %v1832, 1.442695
  %v1834 = vpow.pop %v1833
  %v1835 = vadd.f32 %v1834, 1.0
  %v1836 = vrcp.pop %v1835
  %v1837 = vmul.f32 %v1835, %v1836
  %v1838 = vsub.f32 1.0, %v1837
  %v1839 = vmul.f32 %v1836, %v1838
  %v1840 = vadd.f32 %v1836, %v1839
  %vm1841 = vweird.f32 %v1835
  %vm1842 = vweird.f32 %v1836
  %vm1843 = vmor %vm1841, %vm1842
  %v1844 = vsel %vm1843, %v1836, %v1840
  %v1845 = vand.u32 2147483647, %v1835
  %vm1846 = vcmp.eq.f32.partialorder %v1845, 8.507059e+37
  %v1847 = vand.u32 %v1835, 2147483648
  %v1848 = vor.u32 1.1754944e-38, %v1847
  %v1849 = vsel %vm1846, %v1848, %v1844
  %v1850 = vmul.f32 1.0, %v1849
  %v1851 = vmul.f32 %v1830, %v1663
  %v1852 = vmul.f32 %v1811, %v1831
  %v1853 = vadd.f32 %v1851, %v1852
  %v1854 = vtanh.pop %v1853
  %v1855 = vmul.f32 %v1850, %v1854
  %v1856 = vxor.u32 %v1789, 2147483648
  %v1857 = vmul.f32 %v1856, 1.442695
  %v1858 = vpow.pop %v1857
  %v1859 = vadd.f32 %v1858, 1.0
  %v1860 = vrcp.pop %v1859
  %v1861 = vmul.f32 %v1859, %v1860
  %v1862 = vsub.f32 1.0, %v1861
  %v1863 = vmul.f32 %v1860, %v1862
  %v1864 = vadd.f32 %v1860, %v1863
  %vm1865 = vweird.f32 %v1859
  %vm1866 = vweird.f32 %v1860
  %vm1867 = vmor %vm1865, %vm1866
  %v1868 = vsel %vm1867, %v1860, %v1864
  %v1869 = vand.u32 2147483647, %v1859
  %vm1870 = vcmp.eq.f32.partialorder %v1869, 8.507059e+37
  %v1871 = vand.u32 %v1859, 2147483648
  %v1872 = vor.u32 1.1754944e-38, %v1871
  %v1873 = vsel %vm1870, %v1872, %v1868
  %v1874 = vmul.f32 1.0, %v1873
  %v1875 = vxor.u32 %v1790, 2147483648
  %v1876 = vmul.f32 %v1875, 1.442695
  %v1877 = vpow.pop %v1876
  %v1878 = vadd.f32 %v1877, 1.0
  %v1879 = vrcp.pop %v1878
  %v1880 = vmul.f32 %v1878, %v1879
  %v1881 = vsub.f32 1.0, %v1880
  %v1882 = vmul.f32 %v1879, %v1881
  %v1883 = vadd.f32 %v1879, %v1882
  %vm1884 = vweird.f32 %v1878
  %vm1885 = vweird.f32 %v1879
  %vm1886 = vmor %vm1884, %vm1885
  %v1887 = vsel %vm1886, %v1879, %v1883
  %v1888 = vand.u32 2147483647, %v1878
  %vm1889 = vcmp.eq.f32.partialorder %v1888, 8.507059e+37
  %v1890 = vand.u32 %v1878, 2147483648
  %v1891 = vor.u32 1.1754944e-38, %v1890
  %v1892 = vsel %vm1889, %v1891, %v1887
  %v1893 = vmul.f32 1.0, %v1892
  %v1894 = vtanh.pop %v1791
  %v1895 = vxor.u32 %v1792, 2147483648
  %v1896 = vmul.f32 %v1895, 1.442695
  %v1897 = vpow.pop %v1896
  %v1898 = vadd.f32 %v1897, 1.0
  %v1899 = vrcp.pop %v1898
  %v1900 = vmul.f32 %v1898, %v1899
  %v1901 = vsub.f32 1.0, %v1900
  %v1902 = vmul.f32 %v1899, %v1901
  %v1903 = vadd.f32 %v1899, %v1902
  %vm1904 = vweird.f32 %v1898
  %vm1905 = vweird.f32 %v1899
  %vm1906 = vmor %vm1904, %vm1905
  %v1907 = vsel %vm1906, %v1899, %v1903
  %v1908 = vand.u32 2147483647, %v1898
  %vm1909 = vcmp.eq.f32.partialorder %v1908, 8.507059e+37
  %v1910 = vand.u32 %v1898, 2147483648
  %v1911 = vor.u32 1.1754944e-38, %v1910
  %v1912 = vsel %vm1909, %v1911, %v1907
  %v1913 = vmul.f32 1.0, %v1912
  %v1914 = vmul.f32 %v1893, %v1670
  %v1915 = vmul.f32 %v1874, %v1894
  %v1916 = vadd.f32 %v1914, %v1915
  %v1917 = vtanh.pop %v1916
  %v1918 = vmul.f32 %v1913, %v1917
  %vm1919 = vcmp.gt.s32.totalorder %v824, 2
  %vm1920 = vcmp.gt.s32.totalorder %v824, 5
  %v1921 = vsel %vm1919, 1, 0
  %1922 = vset.pattern.permute.xlu0 0
  %1923 = vperm.xlu0 %1922, %v1921
  %v1924 = vpop.permute.xlu0 %1923
  %vm1925 = vcmp.eq.s32.totalorder %v1924, 1
  %v1926 = vsel %vm1925, %v1855, %v1662
  %v1927 = vsel %vm1925, %v1853, %v1663
  %v1928 = vsel %vm1920, 1, 0
  %1929 = vset.pattern.permute.xlu0 0
  %1930 = vperm.xlu0 %1929, %v1928
  %v1931 = vpop.permute.xlu0 %1930
  %vm1932 = vcmp.eq.s32.totalorder %v1931, 1
  %v1933 = vsel %vm1932, %v1918, %v1669
  %v1934 = vsel %vm1932, %v1916, %v1670
  %v1935 = vld [vmem:[#allocation2 + $0xc0] sm:$0xff]
  %v1936 = vld [vmem:[#allocation2 + $0xc8] sm:$0xff]
  %v1937 = vld [vmem:[#allocation2 + $0xd0] sm:$0xff]
  %v1938 = vld [vmem:[#allocation2 + $0xd8] sm:$0xff]
  %v1939 = vpack.c.bf16 %v1926, %v1926
  %1940 = vmatpush.bf16.msra.mxu0 %v953
  %1941 = vmatpush.bf16.msra.mxu0 %v949
  %1942 = vmatpush.bf16.msra.mxu0 %v945
  %1943 = vmatpush.bf16.msra.mxu0 %v941
  %1944 = vmatpush.bf16.msra.mxu0 %v937
  %1945 = vmatpush.bf16.msra.mxu0 %v933
  %1946 = vmatpush.bf16.msra.mxu0 %v929
  %1947 = vmatpush.bf16.msra.mxu0 %v925
  %1948 = vmatmul.bf16.gmra.mxu0 %v1939
  %v1949 = vpop.f32.mrf.mxu0
  %v1950 = vadd.f32 0.0, %v1949
  %v1951 = vpop.f32.mrf.mxu0
  %1952 = vdwg.mxu0
  %1953 = vmatpush.bf16.msra.mxu0 %v954
  %1954 = vmatpush.bf16.msra.mxu0 %v950
  %1955 = vmatpush.bf16.msra.mxu0 %v946
  %1956 = vmatpush.bf16.msra.mxu0 %v942
  %1957 = vmatpush.bf16.msra.mxu0 %v938
  %1958 = vmatpush.bf16.msra.mxu0 %v934
  %1959 = vmatpush.bf16.msra.mxu0 %v930
  %1960 = vmatpush.bf16.msra.mxu0 %v926
  %1961 = vmatmul.bf16.gmra.mxu0 %v1939
  %v1962 = vpop.f32.mrf.mxu0
  %v1963 = vadd.f32 0.0, %v1962
  %v1964 = vpop.f32.mrf.mxu0
  %1965 = vdwg.mxu0
  %1966 = vmatpush.bf16.msra.mxu0 %v955
  %1967 = vmatpush.bf16.msra.mxu0 %v951
  %1968 = vmatpush.bf16.msra.mxu0 %v947
  %1969 = vmatpush.bf16.msra.mxu0 %v943
  %1970 = vmatpush.bf16.msra.mxu0 %v939
  %1971 = vmatpush.bf16.msra.mxu0 %v935
  %1972 = vmatpush.bf16.msra.mxu0 %v931
  %1973 = vmatpush.bf16.msra.mxu0 %v927
  %1974 = vmatmul.bf16.gmra.mxu0 %v1939
  %v1975 = vpop.f32.mrf.mxu0
  %v1976 = vadd.f32 0.0, %v1975
  %v1977 = vpop.f32.mrf.mxu0
  %1978 = vdwg.mxu0
  %1979 = vmatpush.bf16.msra.mxu0 %v956
  %1980 = vmatpush.bf16.msra.mxu0 %v952
  %1981 = vmatpush.bf16.msra.mxu0 %v948
  %1982 = vmatpush.bf16.msra.mxu0 %v944
  %1983 = vmatpush.bf16.msra.mxu0 %v940
  %1984 = vmatpush.bf16.msra.mxu0 %v936
  %1985 = vmatpush.bf16.msra.mxu0 %v932
  %1986 = vmatpush.bf16.msra.mxu0 %v928
  %1987 = vmatmul.bf16.gmra.mxu0 %v1939
  %v1988 = vpop.f32.mrf.mxu0
  %v1989 = vadd.f32 0.0, %v1988
  %v1990 = vpop.f32.mrf.mxu0
  %1991 = vdwg.mxu0
  %v1992 = vadd.f32 %v1935, %v1950
  %v1993 = vadd.f32 %v1936, %v1963
  %v1994 = vadd.f32 %v1937, %v1976
  %v1995 = vadd.f32 %v1938, %v1989
  %v1996 = vld [vmem:[#allocation2 + $0x120] sm:$0xff]
  %v1997 = vld [vmem:[#allocation2 + $0x128] sm:$0xff]
  %v1998 = vld [vmem:[#allocation2 + $0x130] sm:$0xff]
  %v1999 = vld [vmem:[#allocation2 + $0x138] sm:$0xff]
  %v2000 = vpack.c.bf16 %v1933, %v1933
  %2001 = vmatpush.bf16.msra.mxu0 %v1173
  %2002 = vmatpush.bf16.msra.mxu0 %v1169
  %2003 = vmatpush.bf16.msra.mxu0 %v1165
  %2004 = vmatpush.bf16.msra.mxu0 %v1161
  %2005 = vmatpush.bf16.msra.mxu0 %v1157
  %2006 = vmatpush.bf16.msra.mxu0 %v1153
  %2007 = vmatpush.bf16.msra.mxu0 %v1149
  %2008 = vmatpush.bf16.msra.mxu0 %v1145
  %2009 = vmatmul.bf16.gmra.mxu0 %v2000
  %v2010 = vpop.f32.mrf.mxu0
  %v2011 = vadd.f32 0.0, %v2010
  %v2012 = vpop.f32.mrf.mxu0
  %2013 = vdwg.mxu0
  %2014 = vmatpush.bf16.msra.mxu0 %v1174
  %2015 = vmatpush.bf16.msra.mxu0 %v1170
  %2016 = vmatpush.bf16.msra.mxu0 %v1166
  %2017 = vmatpush.bf16.msra.mxu0 %v1162
  %2018 = vmatpush.bf16.msra.mxu0 %v1158
  %2019 = vmatpush.bf16.msra.mxu0 %v1154
  %2020 = vmatpush.bf16.msra.mxu0 %v1150
  %2021 = vmatpush.bf16.msra.mxu0 %v1146
  %2022 = vmatmul.bf16.gmra.mxu0 %v2000
  %v2023 = vpop.f32.mrf.mxu0
  %v2024 = vadd.f32 0.0, %v2023
  %v2025 = vpop.f32.mrf.mxu0
  %2026 = vdwg.mxu0
  %2027 = vmatpush.bf16.msra.mxu0 %v1175
  %2028 = vmatpush.bf16.msra.mxu0 %v1171
  %2029 = vmatpush.bf16.msra.mxu0 %v1167
  %2030 = vmatpush.bf16.msra.mxu0 %v1163
  %2031 = vmatpush.bf16.msra.mxu0 %v1159
  %2032 = vmatpush.bf16.msra.mxu0 %v1155
  %2033 = vmatpush.bf16.msra.mxu0 %v1151
  %2034 = vmatpush.bf16.msra.mxu0 %v1147
  %2035 = vmatmul.bf16.gmra.mxu0 %v2000
  %v2036 = vpop.f32.mrf.mxu0
  %v2037 = vadd.f32 0.0, %v2036
  %v2038 = vpop.f32.mrf.mxu0
  %2039 = vdwg.mxu0
  %2040 = vmatpush.bf16.msra.mxu0 %v1176
  %2041 = vmatpush.bf16.msra.mxu0 %v1172
  %2042 = vmatpush.bf16.msra.mxu0 %v1168
  %2043 = vmatpush.bf16.msra.mxu0 %v1164
  %2044 = vmatpush.bf16.msra.mxu0 %v1160
  %2045 = vmatpush.bf16.msra.mxu0 %v1156
  %2046 = vmatpush.bf16.msra.mxu0 %v1152
  %2047 = vmatpush.bf16.msra.mxu0 %v1148
  %2048 = vmatmul.bf16.gmra.mxu0 %v2000
  %v2049 = vpop.f32.mrf.mxu0
  %v2050 = vadd.f32 0.0, %v2049
  %v2051 = vpop.f32.mrf.mxu0
  %2052 = vdwg.mxu0
  %v2053 = vadd.f32 %v1996, %v2011
  %v2054 = vadd.f32 %v1997, %v2024
  %v2055 = vadd.f32 %v1998, %v2037
  %v2056 = vadd.f32 %v1999, %v2050
  %v2057 = vxor.u32 %v1992, 2147483648
  %v2058 = vmul.f32 %v2057, 1.442695
  %v2059 = vpow.pop %v2058
  %v2060 = vadd.f32 %v2059, 1.0
  %v2061 = vrcp.pop %v2060
  %v2062 = vmul.f32 %v2060, %v2061
  %v2063 = vsub.f32 1.0, %v2062
  %v2064 = vmul.f32 %v2061, %v2063
  %v2065 = vadd.f32 %v2061, %v2064
  %vm2066 = vweird.f32 %v2060
  %vm2067 = vweird.f32 %v2061
  %vm2068 = vmor %vm2066, %vm2067
  %v2069 = vsel %vm2068, %v2061, %v2065
  %v2070 = vand.u32 2147483647, %v2060
  %vm2071 = vcmp.eq.f32.partialorder %v2070, 8.507059e+37
  %v2072 = vand.u32 %v2060, 2147483648
  %v2073 = vor.u32 1.1754944e-38, %v2072
  %v2074 = vsel %vm2071, %v2073, %v2069
  %v2075 = vmul.f32 1.0, %v2074
  %v2076 = vxor.u32 %v1993, 2147483648
  %v2077 = vmul.f32 %v2076, 1.442695
  %v2078 = vpow.pop %v2077
  %v2079 = vadd.f32 %v2078, 1.0
  %v2080 = vrcp.pop %v2079
  %v2081 = vmul.f32 %v2079, %v2080
  %v2082 = vsub.f32 1.0, %v2081
  %v2083 = vmul.f32 %v2080, %v2082
  %v2084 = vadd.f32 %v2080, %v2083
  %vm2085 = vweird.f32 %v2079
  %vm2086 = vweird.f32 %v2080
  %vm2087 = vmor %vm2085, %vm2086
  %v2088 = vsel %vm2087, %v2080, %v2084
  %v2089 = vand.u32 2147483647, %v2079
  %vm2090 = vcmp.eq.f32.partialorder %v2089, 8.507059e+37
  %v2091 = vand.u32 %v2079, 2147483648
  %v2092 = vor.u32 1.1754944e-38, %v2091
  %v2093 = vsel %vm2090, %v2092, %v2088
  %v2094 = vmul.f32 1.0, %v2093
  %v2095 = vtanh.pop %v1994
  %v2096 = vxor.u32 %v1995, 2147483648
  %v2097 = vmul.f32 %v2096, 1.442695
  %v2098 = vpow.pop %v2097
  %v2099 = vadd.f32 %v2098, 1.0
  %v2100 = vrcp.pop %v2099
  %v2101 = vmul.f32 %v2099, %v2100
  %v2102 = vsub.f32 1.0, %v2101
  %v2103 = vmul.f32 %v2100, %v2102
  %v2104 = vadd.f32 %v2100, %v2103
  %vm2105 = vweird.f32 %v2099
  %vm2106 = vweird.f32 %v2100
  %vm2107 = vmor %vm2105, %vm2106
  %v2108 = vsel %vm2107, %v2100, %v2104
  %v2109 = vand.u32 2147483647, %v2099
  %vm2110 = vcmp.eq.f32.partialorder %v2109, 8.507059e+37
  %v2111 = vand.u32 %v2099, 2147483648
  %v2112 = vor.u32 1.1754944e-38, %v2111
  %v2113 = vsel %vm2110, %v2112, %v2108
  %v2114 = vmul.f32 1.0, %v2113
  %v2115 = vmul.f32 %v2094, %v1927
  %v2116 = vmul.f32 %v2075, %v2095
  %v2117 = vadd.f32 %v2115, %v2116
  %v2118 = vtanh.pop %v2117
  %v2119 = vmul.f32 %v2114, %v2118
  %v2120 = vxor.u32 %v2053, 2147483648
  %v2121 = vmul.f32 %v2120, 1.442695
  %v2122 = vpow.pop %v2121
  %v2123 = vadd.f32 %v2122, 1.0
  %v2124 = vrcp.pop %v2123
  %v2125 = vmul.f32 %v2123, %v2124
  %v2126 = vsub.f32 1.0, %v2125
  %v2127 = vmul.f32 %v2124, %v2126
  %v2128 = vadd.f32 %v2124, %v2127
  %vm2129 = vweird.f32 %v2123
  %vm2130 = vweird.f32 %v2124
  %vm2131 = vmor %vm2129, %vm2130
  %v2132 = vsel %vm2131, %v2124, %v2128
  %v2133 = vand.u32 2147483647, %v2123
  %vm2134 = vcmp.eq.f32.partialorder %v2133, 8.507059e+37
  %v2135 = vand.u32 %v2123, 2147483648
  %v2136 = vor.u32 1.1754944e-38, %v2135
  %v2137 = vsel %vm2134, %v2136, %v2132
  %v2138 = vmul.f32 1.0, %v2137
  %v2139 = vxor.u32 %v2054, 2147483648
  %v2140 = vmul.f32 %v2139, 1.442695
  %v2141 = vpow.pop %v2140
  %v2142 = vadd.f32 %v2141, 1.0
  %v2143 = vrcp.pop %v2142
  %v2144 = vmul.f32 %v2142, %v2143
  %v2145 = vsub.f32 1.0, %v2144
  %v2146 = vmul.f32 %v2143, %v2145
  %v2147 = vadd.f32 %v2143, %v2146
  %vm2148 = vweird.f32 %v2142
  %vm2149 = vweird.f32 %v2143
  %vm2150 = vmor %vm2148, %vm2149
  %v2151 = vsel %vm2150, %v2143, %v2147
  %v2152 = vand.u32 2147483647, %v2142
  %vm2153 = vcmp.eq.f32.partialorder %v2152, 8.507059e+37
  %v2154 = vand.u32 %v2142, 2147483648
  %v2155 = vor.u32 1.1754944e-38, %v2154
  %v2156 = vsel %vm2153, %v2155, %v2151
  %v2157 = vmul.f32 1.0, %v2156
  %v2158 = vtanh.pop %v2055
  %v2159 = vxor.u32 %v2056, 2147483648
  %v2160 = vmul.f32 %v2159, 1.442695
  %v2161 = vpow.pop %v2160
  %v2162 = vadd.f32 %v2161, 1.0
  %v2163 = vrcp.pop %v2162
  %v2164 = vmul.f32 %v2162, %v2163
  %v2165 = vsub.f32 1.0, %v2164
  %v2166 = vmul.f32 %v2163, %v2165
  %v2167 = vadd.f32 %v2163, %v2166
  %vm2168 = vweird.f32 %v2162
  %vm2169 = vweird.f32 %v2163
  %vm2170 = vmor %vm2168, %vm2169
  %v2171 = vsel %vm2170, %v2163, %v2167
  %v2172 = vand.u32 2147483647, %v2162
  %vm2173 = vcmp.eq.f32.partialorder %v2172, 8.507059e+37
  %v2174 = vand.u32 %v2162, 2147483648
  %v2175 = vor.u32 1.1754944e-38, %v2174
  %v2176 = vsel %vm2173, %v2175, %v2171
  %v2177 = vmul.f32 1.0, %v2176
  %v2178 = vmul.f32 %v2157, %v1934
  %v2179 = vmul.f32 %v2138, %v2158
  %v2180 = vadd.f32 %v2178, %v2179
  %v2181 = vtanh.pop %v2180
  %v2182 = vmul.f32 %v2177, %v2181
  %vm2183 = vcmp.gt.s32.totalorder %v824, 3
  %vm2184 = vcmp.gt.s32.totalorder %v824, 4
  %v2185 = vsel %vm2183, 1, 0
  %2186 = vset.pattern.permute.xlu0 0
  %2187 = vperm.xlu0 %2186, %v2185
  %v2188 = vpop.permute.xlu0 %2187
  %vm2189 = vcmp.eq.s32.totalorder %v2188, 1
  %v2190 = vsel %vm2189, %v2119, %v1926
  %v2191 = vsel %vm2189, %v2117, %v1927
  %v2192 = vsel %vm2184, 1, 0
  %2193 = vset.pattern.permute.xlu0 0
  %2194 = vperm.xlu0 %2193, %v2192
  %v2195 = vpop.permute.xlu0 %2194
  %vm2196 = vcmp.eq.s32.totalorder %v2195, 1
  %v2197 = vsel %vm2196, %v2182, %v1933
  %v2198 = vsel %vm2196, %v2180, %v1934
  %v2199 = vld [vmem:[#allocation2 + $0x100] sm:$0xff]
  %v2200 = vld [vmem:[#allocation2 + $0x108] sm:$0xff]
  %v2201 = vld [vmem:[#allocation2 + $0x110] sm:$0xff]
  %v2202 = vld [vmem:[#allocation2 + $0x118] sm:$0xff]
  %v2203 = vpack.c.bf16 %v2190, %v2190
  %2204 = vmatpush.bf16.msra.mxu0 %v953
  %2205 = vmatpush.bf16.msra.mxu0 %v949
  %2206 = vmatpush.bf16.msra.mxu0 %v945
  %2207 = vmatpush.bf16.msra.mxu0 %v941
  %2208 = vmatpush.bf16.msra.mxu0 %v937
  %2209 = vmatpush.bf16.msra.mxu0 %v933
  %2210 = vmatpush.bf16.msra.mxu0 %v929
  %2211 = vmatpush.bf16.msra.mxu0 %v925
  %2212 = vmatmul.bf16.gmra.mxu0 %v2203
  %v2213 = vpop.f32.mrf.mxu0
  %v2214 = vadd.f32 0.0, %v2213
  %v2215 = vpop.f32.mrf.mxu0
  %2216 = vdwg.mxu0
  %2217 = vmatpush.bf16.msra.mxu0 %v954
  %2218 = vmatpush.bf16.msra.mxu0 %v950
  %2219 = vmatpush.bf16.msra.mxu0 %v946
  %2220 = vmatpush.bf16.msra.mxu0 %v942
  %2221 = vmatpush.bf16.msra.mxu0 %v938
  %2222 = vmatpush.bf16.msra.mxu0 %v934
  %2223 = vmatpush.bf16.msra.mxu0 %v930
  %2224 = vmatpush.bf16.msra.mxu0 %v926
  %2225 = vmatmul.bf16.gmra.mxu0 %v2203
  %v2226 = vpop.f32.mrf.mxu0
  %v2227 = vadd.f32 0.0, %v2226
  %v2228 = vpop.f32.mrf.mxu0
  %2229 = vdwg.mxu0
  %2230 = vmatpush.bf16.msra.mxu0 %v955
  %2231 = vmatpush.bf16.msra.mxu0 %v951
  %2232 = vmatpush.bf16.msra.mxu0 %v947
  %2233 = vmatpush.bf16.msra.mxu0 %v943
  %2234 = vmatpush.bf16.msra.mxu0 %v939
  %2235 = vmatpush.bf16.msra.mxu0 %v935
  %2236 = vmatpush.bf16.msra.mxu0 %v931
  %2237 = vmatpush.bf16.msra.mxu0 %v927
  %2238 = vmatmul.bf16.gmra.mxu0 %v2203
  %v2239 = vpop.f32.mrf.mxu0
  %v2240 = vadd.f32 0.0, %v2239
  %v2241 = vpop.f32.mrf.mxu0
  %2242 = vdwg.mxu0
  %2243 = vmatpush.bf16.msra.mxu0 %v956
  %2244 = vmatpush.bf16.msra.mxu0 %v952
  %2245 = vmatpush.bf16.msra.mxu0 %v948
  %2246 = vmatpush.bf16.msra.mxu0 %v944
  %2247 = vmatpush.bf16.msra.mxu0 %v940
  %2248 = vmatpush.bf16.msra.mxu0 %v936
  %2249 = vmatpush.bf16.msra.mxu0 %v932
  %2250 = vmatpush.bf16.msra.mxu0 %v928
  %2251 = vmatmul.bf16.gmra.mxu0 %v2203
  %v2252 = vpop.f32.mrf.mxu0
  %v2253 = vadd.f32 0.0, %v2252
  %v2254 = vpop.f32.mrf.mxu0
  %2255 = vdwg.mxu0
  %v2256 = vadd.f32 %v2199, %v2214
  %v2257 = vadd.f32 %v2200, %v2227
  %v2258 = vadd.f32 %v2201, %v2240
  %v2259 = vadd.f32 %v2202, %v2253
  %v2260 = vld [vmem:[#allocation2 + $0xe0] sm:$0xff]
  %v2261 = vld [vmem:[#allocation2 + $0xe8] sm:$0xff]
  %v2262 = vld [vmem:[#allocation2 + $0xf0] sm:$0xff]
  %v2263 = vld [vmem:[#allocation2 + $0xf8] sm:$0xff]
  %v2264 = vpack.c.bf16 %v2197, %v2197
  %2265 = vmatpush.bf16.msra.mxu0 %v1173
  %2266 = vmatpush.bf16.msra.mxu0 %v1169
  %2267 = vmatpush.bf16.msra.mxu0 %v1165
  %2268 = vmatpush.bf16.msra.mxu0 %v1161
  %2269 = vmatpush.bf16.msra.mxu0 %v1157
  %2270 = vmatpush.bf16.msra.mxu0 %v1153
  %2271 = vmatpush.bf16.msra.mxu0 %v1149
  %2272 = vmatpush.bf16.msra.mxu0 %v1145
  %2273 = vmatmul.bf16.gmra.mxu0 %v2264
  %v2274 = vpop.f32.mrf.mxu0
  %v2275 = vadd.f32 0.0, %v2274
  %v2276 = vpop.f32.mrf.mxu0
  %2277 = vdwg.mxu0
  %2278 = vmatpush.bf16.msra.mxu0 %v1174
  %2279 = vmatpush.bf16.msra.mxu0 %v1170
  %2280 = vmatpush.bf16.msra.mxu0 %v1166
  %2281 = vmatpush.bf16.msra.mxu0 %v1162
  %2282 = vmatpush.bf16.msra.mxu0 %v1158
  %2283 = vmatpush.bf16.msra.mxu0 %v1154
  %2284 = vmatpush.bf16.msra.mxu0 %v1150
  %2285 = vmatpush.bf16.msra.mxu0 %v1146
  %2286 = vmatmul.bf16.gmra.mxu0 %v2264
  %v2287 = vpop.f32.mrf.mxu0
  %v2288 = vadd.f32 0.0, %v2287
  %v2289 = vpop.f32.mrf.mxu0
  %2290 = vdwg.mxu0
  %2291 = vmatpush.bf16.msra.mxu0 %v1175
  %2292 = vmatpush.bf16.msra.mxu0 %v1171
  %2293 = vmatpush.bf16.msra.mxu0 %v1167
  %2294 = vmatpush.bf16.msra.mxu0 %v1163
  %2295 = vmatpush.bf16.msra.mxu0 %v1159
  %2296 = vmatpush.bf16.msra.mxu0 %v1155
  %2297 = vmatpush.bf16.msra.mxu0 %v1151
  %2298 = vmatpush.bf16.msra.mxu0 %v1147
  %2299 = vmatmul.bf16.gmra.mxu0 %v2264
  %v2300 = vpop.f32.mrf.mxu0
  %v2301 = vadd.f32 0.0, %v2300
  %v2302 = vpop.f32.mrf.mxu0
  %2303 = vdwg.mxu0
  %2304 = vmatpush.bf16.msra.mxu0 %v1176
  %2305 = vmatpush.bf16.msra.mxu0 %v1172
  %2306 = vmatpush.bf16.msra.mxu0 %v1168
  %2307 = vmatpush.bf16.msra.mxu0 %v1164
  %2308 = vmatpush.bf16.msra.mxu0 %v1160
  %2309 = vmatpush.bf16.msra.mxu0 %v1156
  %2310 = vmatpush.bf16.msra.mxu0 %v1152
  %2311 = vmatpush.bf16.msra.mxu0 %v1148
  %2312 = vmatmul.bf16.gmra.mxu0 %v2264
  %v2313 = vpop.f32.mrf.mxu0
  %v2314 = vadd.f32 0.0, %v2313
  %v2315 = vpop.f32.mrf.mxu0
  %2316 = vdwg.mxu0
  %v2317 = vadd.f32 %v2260, %v2275
  %v2318 = vadd.f32 %v2261, %v2288
  %v2319 = vadd.f32 %v2262, %v2301
  %v2320 = vadd.f32 %v2263, %v2314
  %v2321 = vxor.u32 %v2256, 2147483648
  %v2322 = vmul.f32 %v2321, 1.442695
  %v2323 = vpow.pop %v2322
  %v2324 = vadd.f32 %v2323, 1.0
  %v2325 = vrcp.pop %v2324
  %v2326 = vmul.f32 %v2324, %v2325
  %v2327 = vsub.f32 1.0, %v2326
  %v2328 = vmul.f32 %v2325, %v2327
  %v2329 = vadd.f32 %v2325, %v2328
  %vm2330 = vweird.f32 %v2324
  %vm2331 = vweird.f32 %v2325
  %vm2332 = vmor %vm2330, %vm2331
  %v2333 = vsel %vm2332, %v2325, %v2329
  %v2334 = vand.u32 2147483647, %v2324
  %vm2335 = vcmp.eq.f32.partialorder %v2334, 8.507059e+37
  %v2336 = vand.u32 %v2324, 2147483648
  %v2337 = vor.u32 1.1754944e-38, %v2336
  %v2338 = vsel %vm2335, %v2337, %v2333
  %v2339 = vmul.f32 1.0, %v2338
  %v2340 = vxor.u32 %v2257, 2147483648
  %v2341 = vmul.f32 %v2340, 1.442695
  %v2342 = vpow.pop %v2341
  %v2343 = vadd.f32 %v2342, 1.0
  %v2344 = vrcp.pop %v2343
  %v2345 = vmul.f32 %v2343, %v2344
  %v2346 = vsub.f32 1.0, %v2345
  %v2347 = vmul.f32 %v2344, %v2346
  %v2348 = vadd.f32 %v2344, %v2347
  %vm2349 = vweird.f32 %v2343
  %vm2350 = vweird.f32 %v2344
  %vm2351 = vmor %vm2349, %vm2350
  %v2352 = vsel %vm2351, %v2344, %v2348
  %v2353 = vand.u32 2147483647, %v2343
  %vm2354 = vcmp.eq.f32.partialorder %v2353, 8.507059e+37
  %v2355 = vand.u32 %v2343, 2147483648
  %v2356 = vor.u32 1.1754944e-38, %v2355
  %v2357 = vsel %vm2354, %v2356, %v2352
  %v2358 = vmul.f32 1.0, %v2357
  %v2359 = vtanh.pop %v2258
  %v2360 = vxor.u32 %v2259, 2147483648
  %v2361 = vmul.f32 %v2360, 1.442695
  %v2362 = vpow.pop %v2361
  %v2363 = vadd.f32 %v2362, 1.0
  %v2364 = vrcp.pop %v2363
  %v2365 = vmul.f32 %v2363, %v2364
  %v2366 = vsub.f32 1.0, %v2365
  %v2367 = vmul.f32 %v2364, %v2366
  %v2368 = vadd.f32 %v2364, %v2367
  %vm2369 = vweird.f32 %v2363
  %vm2370 = vweird.f32 %v2364
  %vm2371 = vmor %vm2369, %vm2370
  %v2372 = vsel %vm2371, %v2364, %v2368
  %v2373 = vand.u32 2147483647, %v2363
  %vm2374 = vcmp.eq.f32.partialorder %v2373, 8.507059e+37
  %v2375 = vand.u32 %v2363, 2147483648
  %v2376 = vor.u32 1.1754944e-38, %v2375
  %v2377 = vsel %vm2374, %v2376, %v2372
  %v2378 = vmul.f32 1.0, %v2377
  %v2379 = vmul.f32 %v2358, %v2191
  %v2380 = vmul.f32 %v2339, %v2359
  %v2381 = vadd.f32 %v2379, %v2380
  %v2382 = vtanh.pop %v2381
  %v2383 = vmul.f32 %v2378, %v2382
  %v2384 = vxor.u32 %v2317, 2147483648
  %v2385 = vmul.f32 %v2384, 1.442695
  %v2386 = vpow.pop %v2385
  %v2387 = vadd.f32 %v2386, 1.0
  %v2388 = vrcp.pop %v2387
  %v2389 = vmul.f32 %v2387, %v2388
  %v2390 = vsub.f32 1.0, %v2389
  %v2391 = vmul.f32 %v2388, %v2390
  %v2392 = vadd.f32 %v2388, %v2391
  %vm2393 = vweird.f32 %v2387
  %vm2394 = vweird.f32 %v2388
  %vm2395 = vmor %vm2393, %vm2394
  %v2396 = vsel %vm2395, %v2388, %v2392
  %v2397 = vand.u32 2147483647, %v2387
  %vm2398 = vcmp.eq.f32.partialorder %v2397, 8.507059e+37
  %v2399 = vand.u32 %v2387, 2147483648
  %v2400 = vor.u32 1.1754944e-38, %v2399
  %v2401 = vsel %vm2398, %v2400, %v2396
  %v2402 = vmul.f32 1.0, %v2401
  %v2403 = vxor.u32 %v2318, 2147483648
  %v2404 = vmul.f32 %v2403, 1.442695
  %v2405 = vpow.pop %v2404
  %v2406 = vadd.f32 %v2405, 1.0
  %v2407 = vrcp.pop %v2406
  %v2408 = vmul.f32 %v2406, %v2407
  %v2409 = vsub.f32 1.0, %v2408
  %v2410 = vmul.f32 %v2407, %v2409
  %v2411 = vadd.f32 %v2407, %v2410
  %vm2412 = vweird.f32 %v2406
  %vm2413 = vweird.f32 %v2407
  %vm2414 = vmor %vm2412, %vm2413
  %v2415 = vsel %vm2414, %v2407, %v2411
  %v2416 = vand.u32 2147483647, %v2406
  %vm2417 = vcmp.eq.f32.partialorder %v2416, 8.507059e+37
  %v2418 = vand.u32 %v2406, 2147483648
  %v2419 = vor.u32 1.1754944e-38, %v2418
  %v2420 = vsel %vm2417, %v2419, %v2415
  %v2421 = vmul.f32 1.0, %v2420
  %v2422 = vtanh.pop %v2319
  %v2423 = vxor.u32 %v2320, 2147483648
  %v2424 = vmul.f32 %v2423, 1.442695
  %v2425 = vpow.pop %v2424
  %v2426 = vadd.f32 %v2425, 1.0
  %v2427 = vrcp.pop %v2426
  %v2428 = vmul.f32 %v2426, %v2427
  %v2429 = vsub.f32 1.0, %v2428
  %v2430 = vmul.f32 %v2427, %v2429
  %v2431 = vadd.f32 %v2427, %v2430
  %vm2432 = vweird.f32 %v2426
  %vm2433 = vweird.f32 %v2427
  %vm2434 = vmor %vm2432, %vm2433
  %v2435 = vsel %vm2434, %v2427, %v2431
  %v2436 = vand.u32 2147483647, %v2426
  %vm2437 = vcmp.eq.f32.partialorder %v2436, 8.507059e+37
  %v2438 = vand.u32 %v2426, 2147483648
  %v2439 = vor.u32 1.1754944e-38, %v2438
  %v2440 = vsel %vm2437, %v2439, %v2435
  %v2441 = vmul.f32 1.0, %v2440
  %v2442 = vmul.f32 %v2421, %v2198
  %v2443 = vmul.f32 %v2402, %v2422
  %v2444 = vadd.f32 %v2442, %v2443
  %v2445 = vtanh.pop %v2444
  %v2446 = vmul.f32 %v2441, %v2445
  %v2447 = vsel %vm2196, %v2383, %v2190
  %v2448 = vsel %vm2196, %v2381, %v2191
  %v2449 = vsel %vm2189, %v2446, %v2197
  %v2450 = vsel %vm2189, %v2444, %v2198
  %v2451 = vld [vmem:[#allocation2 + $0x140] sm:$0xff]
  %v2452 = vld [vmem:[#allocation2 + $0x148] sm:$0xff]
  %v2453 = vld [vmem:[#allocation2 + $0x150] sm:$0xff]
  %v2454 = vld [vmem:[#allocation2 + $0x158] sm:$0xff]
  %v2455 = vpack.c.bf16 %v2447, %v2447
  %2456 = vmatpush.bf16.msra.mxu0 %v953
  %2457 = vmatpush.bf16.msra.mxu0 %v949
  %2458 = vmatpush.bf16.msra.mxu0 %v945
  %2459 = vmatpush.bf16.msra.mxu0 %v941
  %2460 = vmatpush.bf16.msra.mxu0 %v937
  %2461 = vmatpush.bf16.msra.mxu0 %v933
  %2462 = vmatpush.bf16.msra.mxu0 %v929
  %2463 = vmatpush.bf16.msra.mxu0 %v925
  %2464 = vmatmul.bf16.gmra.mxu0 %v2455
  %v2465 = vpop.f32.mrf.mxu0
  %v2466 = vadd.f32 0.0, %v2465
  %v2467 = vpop.f32.mrf.mxu0
  %2468 = vdwg.mxu0
  %2469 = vmatpush.bf16.msra.mxu0 %v954
  %2470 = vmatpush.bf16.msra.mxu0 %v950
  %2471 = vmatpush.bf16.msra.mxu0 %v946
  %2472 = vmatpush.bf16.msra.mxu0 %v942
  %2473 = vmatpush.bf16.msra.mxu0 %v938
  %2474 = vmatpush.bf16.msra.mxu0 %v934
  %2475 = vmatpush.bf16.msra.mxu0 %v930
  %2476 = vmatpush.bf16.msra.mxu0 %v926
  %2477 = vmatmul.bf16.gmra.mxu0 %v2455
  %v2478 = vpop.f32.mrf.mxu0
  %v2479 = vadd.f32 0.0, %v2478
  %v2480 = vpop.f32.mrf.mxu0
  %2481 = vdwg.mxu0
  %2482 = vmatpush.bf16.msra.mxu0 %v955
  %2483 = vmatpush.bf16.msra.mxu0 %v951
  %2484 = vmatpush.bf16.msra.mxu0 %v947
  %2485 = vmatpush.bf16.msra.mxu0 %v943
  %2486 = vmatpush.bf16.msra.mxu0 %v939
  %2487 = vmatpush.bf16.msra.mxu0 %v935
  %2488 = vmatpush.bf16.msra.mxu0 %v931
  %2489 = vmatpush.bf16.msra.mxu0 %v927
  %2490 = vmatmul.bf16.gmra.mxu0 %v2455
  %v2491 = vpop.f32.mrf.mxu0
  %v2492 = vadd.f32 0.0, %v2491
  %v2493 = vpop.f32.mrf.mxu0
  %2494 = vdwg.mxu0
  %2495 = vmatpush.bf16.msra.mxu0 %v956
  %2496 = vmatpush.bf16.msra.mxu0 %v952
  %2497 = vmatpush.bf16.msra.mxu0 %v948
  %2498 = vmatpush.bf16.msra.mxu0 %v944
  %2499 = vmatpush.bf16.msra.mxu0 %v940
  %2500 = vmatpush.bf16.msra.mxu0 %v936
  %2501 = vmatpush.bf16.msra.mxu0 %v932
  %2502 = vmatpush.bf16.msra.mxu0 %v928
  %2503 = vmatmul.bf16.gmra.mxu0 %v2455
  %v2504 = vpop.f32.mrf.mxu0
  %v2505 = vadd.f32 0.0, %v2504
  %v2506 = vpop.f32.mrf.mxu0
  %2507 = vdwg.mxu0
  %v2508 = vadd.f32 %v2451, %v2466
  %v2509 = vadd.f32 %v2452, %v2479
  %v2510 = vadd.f32 %v2453, %v2492
  %v2511 = vadd.f32 %v2454, %v2505
  %v2512 = vld [vmem:[#allocation2 + $0xa0] sm:$0xff]
  %v2513 = vld [vmem:[#allocation2 + $0xa8] sm:$0xff]
  %v2514 = vld [vmem:[#allocation2 + $0xb0] sm:$0xff]
  %v2515 = vld [vmem:[#allocation2 + $0xb8] sm:$0xff]
  %v2516 = vpack.c.bf16 %v2449, %v2449
  %2517 = vmatpush.bf16.msra.mxu0 %v1173
  %2518 = vmatpush.bf16.msra.mxu0 %v1169
  %2519 = vmatpush.bf16.msra.mxu0 %v1165
  %2520 = vmatpush.bf16.msra.mxu0 %v1161
  %2521 = vmatpush.bf16.msra.mxu0 %v1157
  %2522 = vmatpush.bf16.msra.mxu0 %v1153
  %2523 = vmatpush.bf16.msra.mxu0 %v1149
  %2524 = vmatpush.bf16.msra.mxu0 %v1145
  %2525 = vmatmul.bf16.gmra.mxu0 %v2516
  %v2526 = vpop.f32.mrf.mxu0
  %v2527 = vadd.f32 0.0, %v2526
  %v2528 = vpop.f32.mrf.mxu0
  %2529 = vdwg.mxu0
  %2530 = vmatpush.bf16.msra.mxu0 %v1174
  %2531 = vmatpush.bf16.msra.mxu0 %v1170
  %2532 = vmatpush.bf16.msra.mxu0 %v1166
  %2533 = vmatpush.bf16.msra.mxu0 %v1162
  %2534 = vmatpush.bf16.msra.mxu0 %v1158
  %2535 = vmatpush.bf16.msra.mxu0 %v1154
  %2536 = vmatpush.bf16.msra.mxu0 %v1150
  %2537 = vmatpush.bf16.msra.mxu0 %v1146
  %2538 = vmatmul.bf16.gmra.mxu0 %v2516
  %v2539 = vpop.f32.mrf.mxu0
  %v2540 = vadd.f32 0.0, %v2539
  %v2541 = vpop.f32.mrf.mxu0
  %2542 = vdwg.mxu0
  %2543 = vmatpush.bf16.msra.mxu0 %v1175
  %2544 = vmatpush.bf16.msra.mxu0 %v1171
  %2545 = vmatpush.bf16.msra.mxu0 %v1167
  %2546 = vmatpush.bf16.msra.mxu0 %v1163
  %2547 = vmatpush.bf16.msra.mxu0 %v1159
  %2548 = vmatpush.bf16.msra.mxu0 %v1155
  %2549 = vmatpush.bf16.msra.mxu0 %v1151
  %2550 = vmatpush.bf16.msra.mxu0 %v1147
  %2551 = vmatmul.bf16.gmra.mxu0 %v2516
  %v2552 = vpop.f32.mrf.mxu0
  %v2553 = vadd.f32 0.0, %v2552
  %v2554 = vpop.f32.mrf.mxu0
  %2555 = vdwg.mxu0
  %2556 = vmatpush.bf16.msra.mxu0 %v1176
  %2557 = vmatpush.bf16.msra.mxu0 %v1172
  %2558 = vmatpush.bf16.msra.mxu0 %v1168
  %2559 = vmatpush.bf16.msra.mxu0 %v1164
  %2560 = vmatpush.bf16.msra.mxu0 %v1160
  %2561 = vmatpush.bf16.msra.mxu0 %v1156
  %2562 = vmatpush.bf16.msra.mxu0 %v1152
  %2563 = vmatpush.bf16.msra.mxu0 %v1148
  %2564 = vmatmul.bf16.gmra.mxu0 %v2516
  %v2565 = vpop.f32.mrf.mxu0
  %v2566 = vadd.f32 0.0, %v2565
  %v2567 = vpop.f32.mrf.mxu0
  %2568 = vdwg.mxu0
  %v2569 = vadd.f32 %v2512, %v2527
  %v2570 = vadd.f32 %v2513, %v2540
  %v2571 = vadd.f32 %v2514, %v2553
  %v2572 = vadd.f32 %v2515, %v2566
  %v2573 = vxor.u32 %v2508, 2147483648
  %v2574 = vmul.f32 %v2573, 1.442695
  %v2575 = vpow.pop %v2574
  %v2576 = vadd.f32 %v2575, 1.0
  %v2577 = vrcp.pop %v2576
  %v2578 = vmul.f32 %v2576, %v2577
  %v2579 = vsub.f32 1.0, %v2578
  %v2580 = vmul.f32 %v2577, %v2579
  %v2581 = vadd.f32 %v2577, %v2580
  %vm2582 = vweird.f32 %v2576
  %vm2583 = vweird.f32 %v2577
  %vm2584 = vmor %vm2582, %vm2583
  %v2585 = vsel %vm2584, %v2577, %v2581
  %v2586 = vand.u32 2147483647, %v2576
  %vm2587 = vcmp.eq.f32.partialorder %v2586, 8.507059e+37
  %v2588 = vand.u32 %v2576, 2147483648
  %v2589 = vor.u32 1.1754944e-38, %v2588
  %v2590 = vsel %vm2587, %v2589, %v2585
  %v2591 = vmul.f32 1.0, %v2590
  %v2592 = vxor.u32 %v2509, 2147483648
  %v2593 = vmul.f32 %v2592, 1.442695
  %v2594 = vpow.pop %v2593
  %v2595 = vadd.f32 %v2594, 1.0
  %v2596 = vrcp.pop %v2595
  %v2597 = vmul.f32 %v2595, %v2596
  %v2598 = vsub.f32 1.0, %v2597
  %v2599 = vmul.f32 %v2596, %v2598
  %v2600 = vadd.f32 %v2596, %v2599
  %vm2601 = vweird.f32 %v2595
  %vm2602 = vweird.f32 %v2596
  %vm2603 = vmor %vm2601, %vm2602
  %v2604 = vsel %vm2603, %v2596, %v2600
  %v2605 = vand.u32 2147483647, %v2595
  %vm2606 = vcmp.eq.f32.partialorder %v2605, 8.507059e+37
  %v2607 = vand.u32 %v2595, 2147483648
  %v2608 = vor.u32 1.1754944e-38, %v2607
  %v2609 = vsel %vm2606, %v2608, %v2604
  %v2610 = vmul.f32 1.0, %v2609
  %v2611 = vtanh.pop %v2510
  %v2612 = vxor.u32 %v2511, 2147483648
  %v2613 = vmul.f32 %v2612, 1.442695
  %v2614 = vpow.pop %v2613
  %v2615 = vadd.f32 %v2614, 1.0
  %v2616 = vrcp.pop %v2615
  %v2617 = vmul.f32 %v2615, %v2616
  %v2618 = vsub.f32 1.0, %v2617
  %v2619 = vmul.f32 %v2616, %v2618
  %v2620 = vadd.f32 %v2616, %v2619
  %vm2621 = vweird.f32 %v2615
  %vm2622 = vweird.f32 %v2616
  %vm2623 = vmor %vm2621, %vm2622
  %v2624 = vsel %vm2623, %v2616, %v2620
  %v2625 = vand.u32 2147483647, %v2615
  %vm2626 = vcmp.eq.f32.partialorder %v2625, 8.507059e+37
  %v2627 = vand.u32 %v2615, 2147483648
  %v2628 = vor.u32 1.1754944e-38, %v2627
  %v2629 = vsel %vm2626, %v2628, %v2624
  %v2630 = vmul.f32 1.0, %v2629
  %v2631 = vmul.f32 %v2610, %v2448
  %v2632 = vmul.f32 %v2591, %v2611
  %v2633 = vadd.f32 %v2631, %v2632
  %v2634 = vtanh.pop %v2633
  %v2635 = vmul.f32 %v2630, %v2634
  %v2636 = vxor.u32 %v2569, 2147483648
  %v2637 = vmul.f32 %v2636, 1.442695
  %v2638 = vpow.pop %v2637
  %v2639 = vadd.f32 %v2638, 1.0
  %v2640 = vrcp.pop %v2639
  %v2641 = vmul.f32 %v2639, %v2640
  %v2642 = vsub.f32 1.0, %v2641
  %v2643 = vmul.f32 %v2640, %v2642
  %v2644 = vadd.f32 %v2640, %v2643
  %vm2645 = vweird.f32 %v2639
  %vm2646 = vweird.f32 %v2640
  %vm2647 = vmor %vm2645, %vm2646
  %v2648 = vsel %vm2647, %v2640, %v2644
  %v2649 = vand.u32 2147483647, %v2639
  %vm2650 = vcmp.eq.f32.partialorder %v2649, 8.507059e+37
  %v2651 = vand.u32 %v2639, 2147483648
  %v2652 = vor.u32 1.1754944e-38, %v2651
  %v2653 = vsel %vm2650, %v2652, %v2648
  %v2654 = vmul.f32 1.0, %v2653
  %v2655 = vxor.u32 %v2570, 2147483648
  %v2656 = vmul.f32 %v2655, 1.442695
  %v2657 = vpow.pop %v2656
  %v2658 = vadd.f32 %v2657, 1.0
  %v2659 = vrcp.pop %v2658
  %v2660 = vmul.f32 %v2658, %v2659
  %v2661 = vsub.f32 1.0, %v2660
  %v2662 = vmul.f32 %v2659, %v2661
  %v2663 = vadd.f32 %v2659, %v2662
  %vm2664 = vweird.f32 %v2658
  %vm2665 = vweird.f32 %v2659
  %vm2666 = vmor %vm2664, %vm2665
  %v2667 = vsel %vm2666, %v2659, %v2663
  %v2668 = vand.u32 2147483647, %v2658
  %vm2669 = vcmp.eq.f32.partialorder %v2668, 8.507059e+37
  %v2670 = vand.u32 %v2658, 2147483648
  %v2671 = vor.u32 1.1754944e-38, %v2670
  %v2672 = vsel %vm2669, %v2671, %v2667
  %v2673 = vmul.f32 1.0, %v2672
  %v2674 = vtanh.pop %v2571
  %v2675 = vxor.u32 %v2572, 2147483648
  %v2676 = vmul.f32 %v2675, 1.442695
  %v2677 = vpow.pop %v2676
  %v2678 = vadd.f32 %v2677, 1.0
  %v2679 = vrcp.pop %v2678
  %v2680 = vmul.f32 %v2678, %v2679
  %v2681 = vsub.f32 1.0, %v2680
  %v2682 = vmul.f32 %v2679, %v2681
  %v2683 = vadd.f32 %v2679, %v2682
  %vm2684 = vweird.f32 %v2678
  %vm2685 = vweird.f32 %v2679
  %vm2686 = vmor %vm2684, %vm2685
  %v2687 = vsel %vm2686, %v2679, %v2683
  %v2688 = vand.u32 2147483647, %v2678
  %vm2689 = vcmp.eq.f32.partialorder %v2688, 8.507059e+37
  %v2690 = vand.u32 %v2678, 2147483648
  %v2691 = vor.u32 1.1754944e-38, %v2690
  %v2692 = vsel %vm2689, %v2691, %v2687
  %v2693 = vmul.f32 1.0, %v2692
  %v2694 = vmul.f32 %v2673, %v2450
  %v2695 = vmul.f32 %v2654, %v2674
  %v2696 = vadd.f32 %v2694, %v2695
  %v2697 = vtanh.pop %v2696
  %v2698 = vmul.f32 %v2693, %v2697
  %v2699 = vsel %vm1932, %v2635, %v2447
  %v2700 = vsel %vm1932, %v2633, %v2448
  %v2701 = vsel %vm1925, %v2698, %v2449
  %v2702 = vsel %vm1925, %v2696, %v2450
  %v2703 = vld [vmem:[#allocation2 + $0x180] sm:$0xff]
  %v2704 = vld [vmem:[#allocation2 + $0x188] sm:$0xff]
  %v2705 = vld [vmem:[#allocation2 + $0x190] sm:$0xff]
  %v2706 = vld [vmem:[#allocation2 + $0x198] sm:$0xff]
  %v2707 = vpack.c.bf16 %v2699, %v2699
  %2708 = vmatpush.bf16.msra.mxu0 %v953
  %2709 = vmatpush.bf16.msra.mxu0 %v949
  %2710 = vmatpush.bf16.msra.mxu0 %v945
  %2711 = vmatpush.bf16.msra.mxu0 %v941
  %2712 = vmatpush.bf16.msra.mxu0 %v937
  %2713 = vmatpush.bf16.msra.mxu0 %v933
  %2714 = vmatpush.bf16.msra.mxu0 %v929
  %2715 = vmatpush.bf16.msra.mxu0 %v925
  %2716 = vmatmul.bf16.gmra.mxu0 %v2707
  %v2717 = vpop.f32.mrf.mxu0
  %v2718 = vadd.f32 0.0, %v2717
  %v2719 = vpop.f32.mrf.mxu0
  %2720 = vdwg.mxu0
  %2721 = vmatpush.bf16.msra.mxu0 %v954
  %2722 = vmatpush.bf16.msra.mxu0 %v950
  %2723 = vmatpush.bf16.msra.mxu0 %v946
  %2724 = vmatpush.bf16.msra.mxu0 %v942
  %2725 = vmatpush.bf16.msra.mxu0 %v938
  %2726 = vmatpush.bf16.msra.mxu0 %v934
  %2727 = vmatpush.bf16.msra.mxu0 %v930
  %2728 = vmatpush.bf16.msra.mxu0 %v926
  %2729 = vmatmul.bf16.gmra.mxu0 %v2707
  %v2730 = vpop.f32.mrf.mxu0
  %v2731 = vadd.f32 0.0, %v2730
  %v2732 = vpop.f32.mrf.mxu0
  %2733 = vdwg.mxu0
  %2734 = vmatpush.bf16.msra.mxu0 %v955
  %2735 = vmatpush.bf16.msra.mxu0 %v951
  %2736 = vmatpush.bf16.msra.mxu0 %v947
  %2737 = vmatpush.bf16.msra.mxu0 %v943
  %2738 = vmatpush.bf16.msra.mxu0 %v939
  %2739 = vmatpush.bf16.msra.mxu0 %v935
  %2740 = vmatpush.bf16.msra.mxu0 %v931
  %2741 = vmatpush.bf16.msra.mxu0 %v927
  %2742 = vmatmul.bf16.gmra.mxu0 %v2707
  %v2743 = vpop.f32.mrf.mxu0
  %v2744 = vadd.f32 0.0, %v2743
  %v2745 = vpop.f32.mrf.mxu0
  %2746 = vdwg.mxu0
  %2747 = vmatpush.bf16.msra.mxu0 %v956
  %2748 = vmatpush.bf16.msra.mxu0 %v952
  %2749 = vmatpush.bf16.msra.mxu0 %v948
  %2750 = vmatpush.bf16.msra.mxu0 %v944
  %2751 = vmatpush.bf16.msra.mxu0 %v940
  %2752 = vmatpush.bf16.msra.mxu0 %v936
  %2753 = vmatpush.bf16.msra.mxu0 %v932
  %2754 = vmatpush.bf16.msra.mxu0 %v928
  %2755 = vmatmul.bf16.gmra.mxu0 %v2707
  %v2756 = vpop.f32.mrf.mxu0
  %v2757 = vadd.f32 0.0, %v2756
  %v2758 = vpop.f32.mrf.mxu0
  %2759 = vdwg.mxu0
  %v2760 = vadd.f32 %v2703, %v2718
  %v2761 = vadd.f32 %v2704, %v2731
  %v2762 = vadd.f32 %v2705, %v2744
  %v2763 = vadd.f32 %v2706, %v2757
  %v2764 = vld [vmem:[#allocation2 + $0x60] sm:$0xff]
  %v2765 = vld [vmem:[#allocation2 + $0x68] sm:$0xff]
  %v2766 = vld [vmem:[#allocation2 + $0x70] sm:$0xff]
  %v2767 = vld [vmem:[#allocation2 + $0x78] sm:$0xff]
  %v2768 = vpack.c.bf16 %v2701, %v2701
  %2769 = vmatpush.bf16.msra.mxu0 %v1173
  %2770 = vmatpush.bf16.msra.mxu0 %v1169
  %2771 = vmatpush.bf16.msra.mxu0 %v1165
  %2772 = vmatpush.bf16.msra.mxu0 %v1161
  %2773 = vmatpush.bf16.msra.mxu0 %v1157
  %2774 = vmatpush.bf16.msra.mxu0 %v1153
  %2775 = vmatpush.bf16.msra.mxu0 %v1149
  %2776 = vmatpush.bf16.msra.mxu0 %v1145
  %2777 = vmatmul.bf16.gmra.mxu0 %v2768
  %v2778 = vpop.f32.mrf.mxu0
  %v2779 = vadd.f32 0.0, %v2778
  %v2780 = vpop.f32.mrf.mxu0
  %2781 = vdwg.mxu0
  %2782 = vmatpush.bf16.msra.mxu0 %v1174
  %2783 = vmatpush.bf16.msra.mxu0 %v1170
  %2784 = vmatpush.bf16.msra.mxu0 %v1166
  %2785 = vmatpush.bf16.msra.mxu0 %v1162
  %2786 = vmatpush.bf16.msra.mxu0 %v1158
  %2787 = vmatpush.bf16.msra.mxu0 %v1154
  %2788 = vmatpush.bf16.msra.mxu0 %v1150
  %2789 = vmatpush.bf16.msra.mxu0 %v1146
  %2790 = vmatmul.bf16.gmra.mxu0 %v2768
  %v2791 = vpop.f32.mrf.mxu0
  %v2792 = vadd.f32 0.0, %v2791
  %v2793 = vpop.f32.mrf.mxu0
  %2794 = vdwg.mxu0
  %2795 = vmatpush.bf16.msra.mxu0 %v1175
  %2796 = vmatpush.bf16.msra.mxu0 %v1171
  %2797 = vmatpush.bf16.msra.mxu0 %v1167
  %2798 = vmatpush.bf16.msra.mxu0 %v1163
  %2799 = vmatpush.bf16.msra.mxu0 %v1159
  %2800 = vmatpush.bf16.msra.mxu0 %v1155
  %2801 = vmatpush.bf16.msra.mxu0 %v1151
  %2802 = vmatpush.bf16.msra.mxu0 %v1147
  %2803 = vmatmul.bf16.gmra.mxu0 %v2768
  %v2804 = vpop.f32.mrf.mxu0
  %v2805 = vadd.f32 0.0, %v2804
  %v2806 = vpop.f32.mrf.mxu0
  %2807 = vdwg.mxu0
  %2808 = vmatpush.bf16.msra.mxu0 %v1176
  %2809 = vmatpush.bf16.msra.mxu0 %v1172
  %2810 = vmatpush.bf16.msra.mxu0 %v1168
  %2811 = vmatpush.bf16.msra.mxu0 %v1164
  %2812 = vmatpush.bf16.msra.mxu0 %v1160
  %2813 = vmatpush.bf16.msra.mxu0 %v1156
  %2814 = vmatpush.bf16.msra.mxu0 %v1152
  %2815 = vmatpush.bf16.msra.mxu0 %v1148
  %2816 = vmatmul.bf16.gmra.mxu0 %v2768
  %v2817 = vpop.f32.mrf.mxu0
  %v2818 = vadd.f32 0.0, %v2817
  %v2819 = vpop.f32.mrf.mxu0
  %2820 = vdwg.mxu0
  %v2821 = vadd.f32 %v2764, %v2779
  %v2822 = vadd.f32 %v2765, %v2792
  %v2823 = vadd.f32 %v2766, %v2805
  %v2824 = vadd.f32 %v2767, %v2818
  %v2825 = vxor.u32 %v2760, 2147483648
  %v2826 = vmul.f32 %v2825, 1.442695
  %v2827 = vpow.pop %v2826
  %v2828 = vadd.f32 %v2827, 1.0
  %v2829 = vrcp.pop %v2828
  %v2830 = vmul.f32 %v2828, %v2829
  %v2831 = vsub.f32 1.0, %v2830
  %v2832 = vmul.f32 %v2829, %v2831
  %v2833 = vadd.f32 %v2829, %v2832
  %vm2834 = vweird.f32 %v2828
  %vm2835 = vweird.f32 %v2829
  %vm2836 = vmor %vm2834, %vm2835
  %v2837 = vsel %vm2836, %v2829, %v2833
  %v2838 = vand.u32 2147483647, %v2828
  %vm2839 = vcmp.eq.f32.partialorder %v2838, 8.507059e+37
  %v2840 = vand.u32 %v2828, 2147483648
  %v2841 = vor.u32 1.1754944e-38, %v2840
  %v2842 = vsel %vm2839, %v2841, %v2837
  %v2843 = vmul.f32 1.0, %v2842
  %v2844 = vxor.u32 %v2761, 2147483648
  %v2845 = vmul.f32 %v2844, 1.442695
  %v2846 = vpow.pop %v2845
  %v2847 = vadd.f32 %v2846, 1.0
  %v2848 = vrcp.pop %v2847
  %v2849 = vmul.f32 %v2847, %v2848
  %v2850 = vsub.f32 1.0, %v2849
  %v2851 = vmul.f32 %v2848, %v2850
  %v2852 = vadd.f32 %v2848, %v2851
  %vm2853 = vweird.f32 %v2847
  %vm2854 = vweird.f32 %v2848
  %vm2855 = vmor %vm2853, %vm2854
  %v2856 = vsel %vm2855, %v2848, %v2852
  %v2857 = vand.u32 2147483647, %v2847
  %vm2858 = vcmp.eq.f32.partialorder %v2857, 8.507059e+37
  %v2859 = vand.u32 %v2847, 2147483648
  %v2860 = vor.u32 1.1754944e-38, %v2859
  %v2861 = vsel %vm2858, %v2860, %v2856
  %v2862 = vmul.f32 1.0, %v2861
  %v2863 = vtanh.pop %v2762
  %v2864 = vxor.u32 %v2763, 2147483648
  %v2865 = vmul.f32 %v2864, 1.442695
  %v2866 = vpow.pop %v2865
  %v2867 = vadd.f32 %v2866, 1.0
  %v2868 = vrcp.pop %v2867
  %v2869 = vmul.f32 %v2867, %v2868
  %v2870 = vsub.f32 1.0, %v2869
  %v2871 = vmul.f32 %v2868, %v2870
  %v2872 = vadd.f32 %v2868, %v2871
  %vm2873 = vweird.f32 %v2867
  %vm2874 = vweird.f32 %v2868
  %vm2875 = vmor %vm2873, %vm2874
  %v2876 = vsel %vm2875, %v2868, %v2872
  %v2877 = vand.u32 2147483647, %v2867
  %vm2878 = vcmp.eq.f32.partialorder %v2877, 8.507059e+37
  %v2879 = vand.u32 %v2867, 2147483648
  %v2880 = vor.u32 1.1754944e-38, %v2879
  %v2881 = vsel %vm2878, %v2880, %v2876
  %v2882 = vmul.f32 1.0, %v2881
  %v2883 = vmul.f32 %v2862, %v2700
  %v2884 = vmul.f32 %v2843, %v2863
  %v2885 = vadd.f32 %v2883, %v2884
  %v2886 = vtanh.pop %v2885
  %v2887 = vmul.f32 %v2882, %v2886
  %v2888 = vxor.u32 %v2821, 2147483648
  %v2889 = vmul.f32 %v2888, 1.442695
  %v2890 = vpow.pop %v2889
  %v2891 = vadd.f32 %v2890, 1.0
  %v2892 = vrcp.pop %v2891
  %v2893 = vmul.f32 %v2891, %v2892
  %v2894 = vsub.f32 1.0, %v2893
  %v2895 = vmul.f32 %v2892, %v2894
  %v2896 = vadd.f32 %v2892, %v2895
  %vm2897 = vweird.f32 %v2891
  %vm2898 = vweird.f32 %v2892
  %vm2899 = vmor %vm2897, %vm2898
  %v2900 = vsel %vm2899, %v2892, %v2896
  %v2901 = vand.u32 2147483647, %v2891
  %vm2902 = vcmp.eq.f32.partialorder %v2901, 8.507059e+37
  %v2903 = vand.u32 %v2891, 2147483648
  %v2904 = vor.u32 1.1754944e-38, %v2903
  %v2905 = vsel %vm2902, %v2904, %v2900
  %v2906 = vmul.f32 1.0, %v2905
  %v2907 = vxor.u32 %v2822, 2147483648
  %v2908 = vmul.f32 %v2907, 1.442695
  %v2909 = vpow.pop %v2908
  %v2910 = vadd.f32 %v2909, 1.0
  %v2911 = vrcp.pop %v2910
  %v2912 = vmul.f32 %v2910, %v2911
  %v2913 = vsub.f32 1.0, %v2912
  %v2914 = vmul.f32 %v2911, %v2913
  %v2915 = vadd.f32 %v2911, %v2914
  %vm2916 = vweird.f32 %v2910
  %vm2917 = vweird.f32 %v2911
  %vm2918 = vmor %vm2916, %vm2917
  %v2919 = vsel %vm2918, %v2911, %v2915
  %v2920 = vand.u32 2147483647, %v2910
  %vm2921 = vcmp.eq.f32.partialorder %v2920, 8.507059e+37
  %v2922 = vand.u32 %v2910, 2147483648
  %v2923 = vor.u32 1.1754944e-38, %v2922
  %v2924 = vsel %vm2921, %v2923, %v2919
  %v2925 = vmul.f32 1.0, %v2924
  %v2926 = vtanh.pop %v2823
  %v2927 = vxor.u32 %v2824, 2147483648
  %v2928 = vmul.f32 %v2927, 1.442695
  %v2929 = vpow.pop %v2928
  %v2930 = vadd.f32 %v2929, 1.0
  %v2931 = vrcp.pop %v2930
  %v2932 = vmul.f32 %v2930, %v2931
  %v2933 = vsub.f32 1.0, %v2932
  %v2934 = vmul.f32 %v2931, %v2933
  %v2935 = vadd.f32 %v2931, %v2934
  %vm2936 = vweird.f32 %v2930
  %vm2937 = vweird.f32 %v2931
  %vm2938 = vmor %vm2936, %vm2937
  %v2939 = vsel %vm2938, %v2931, %v2935
  %v2940 = vand.u32 2147483647, %v2930
  %vm2941 = vcmp.eq.f32.partialorder %v2940, 8.507059e+37
  %v2942 = vand.u32 %v2930, 2147483648
  %v2943 = vor.u32 1.1754944e-38, %v2942
  %v2944 = vsel %vm2941, %v2943, %v2939
  %v2945 = vmul.f32 1.0, %v2944
  %v2946 = vmul.f32 %v2925, %v2702
  %v2947 = vmul.f32 %v2906, %v2926
  %v2948 = vadd.f32 %v2946, %v2947
  %v2949 = vtanh.pop %v2948
  %v2950 = vmul.f32 %v2945, %v2949
  %v2951 = vsel %vm1668, %v2887, %v2699
  %v2952 = vsel %vm1668, %v2885, %v2700
  %v2953 = vsel %vm1661, %v2950, %v2701
  %v2954 = vsel %vm1661, %v2948, %v2702
  %v2955 = vld [vmem:[#allocation2 + $0x1c0] sm:$0xff]
  %v2956 = vld [vmem:[#allocation2 + $0x1c8] sm:$0xff]
  %v2957 = vld [vmem:[#allocation2 + $0x1d0] sm:$0xff]
  %v2958 = vld [vmem:[#allocation2 + $0x1d8] sm:$0xff]
  %v2959 = vpack.c.bf16 %v2951, %v2951
  %2960 = vmatpush.bf16.msra.mxu0 %v953
  %2961 = vmatpush.bf16.msra.mxu0 %v949
  %2962 = vmatpush.bf16.msra.mxu0 %v945
  %2963 = vmatpush.bf16.msra.mxu0 %v941
  %2964 = vmatpush.bf16.msra.mxu0 %v937
  %2965 = vmatpush.bf16.msra.mxu0 %v933
  %2966 = vmatpush.bf16.msra.mxu0 %v929
  %2967 = vmatpush.bf16.msra.mxu0 %v925
  %2968 = vmatmul.bf16.gmra.mxu0 %v2959
  %v2969 = vpop.f32.mrf.mxu0
  %v2970 = vadd.f32 0.0, %v2969
  %v2971 = vpop.f32.mrf.mxu0
  %2972 = vdwg.mxu0
  %2973 = vmatpush.bf16.msra.mxu0 %v954
  %2974 = vmatpush.bf16.msra.mxu0 %v950
  %2975 = vmatpush.bf16.msra.mxu0 %v946
  %2976 = vmatpush.bf16.msra.mxu0 %v942
  %2977 = vmatpush.bf16.msra.mxu0 %v938
  %2978 = vmatpush.bf16.msra.mxu0 %v934
  %2979 = vmatpush.bf16.msra.mxu0 %v930
  %2980 = vmatpush.bf16.msra.mxu0 %v926
  %2981 = vmatmul.bf16.gmra.mxu0 %v2959
  %v2982 = vpop.f32.mrf.mxu0
  %v2983 = vadd.f32 0.0, %v2982
  %v2984 = vpop.f32.mrf.mxu0
  %2985 = vdwg.mxu0
  %2986 = vmatpush.bf16.msra.mxu0 %v955
  %2987 = vmatpush.bf16.msra.mxu0 %v951
  %2988 = vmatpush.bf16.msra.mxu0 %v947
  %2989 = vmatpush.bf16.msra.mxu0 %v943
  %2990 = vmatpush.bf16.msra.mxu0 %v939
  %2991 = vmatpush.bf16.msra.mxu0 %v935
  %2992 = vmatpush.bf16.msra.mxu0 %v931
  %2993 = vmatpush.bf16.msra.mxu0 %v927
  %2994 = vmatmul.bf16.gmra.mxu0 %v2959
  %v2995 = vpop.f32.mrf.mxu0
  %v2996 = vadd.f32 0.0, %v2995
  %v2997 = vpop.f32.mrf.mxu0
  %2998 = vdwg.mxu0
  %2999 = vmatpush.bf16.msra.mxu0 %v956
  %3000 = vmatpush.bf16.msra.mxu0 %v952
  %3001 = vmatpush.bf16.msra.mxu0 %v948
  %3002 = vmatpush.bf16.msra.mxu0 %v944
  %3003 = vmatpush.bf16.msra.mxu0 %v940
  %3004 = vmatpush.bf16.msra.mxu0 %v936
  %3005 = vmatpush.bf16.msra.mxu0 %v932
  %3006 = vmatpush.bf16.msra.mxu0 %v928
  %3007 = vmatmul.bf16.gmra.mxu0 %v2959
  %v3008 = vpop.f32.mrf.mxu0
  %v3009 = vadd.f32 0.0, %v3008
  %v3010 = vpop.f32.mrf.mxu0
  %3011 = vdwg.mxu0
  %v3012 = vadd.f32 %v2955, %v2970
  %v3013 = vadd.f32 %v2956, %v2983
  %v3014 = vadd.f32 %v2957, %v2996
  %v3015 = vadd.f32 %v2958, %v3009
  %v3016 = vld [vmem:[#allocation2 + $0x20] sm:$0xff]
  %v3017 = vld [vmem:[#allocation2 + $0x28] sm:$0xff]
  %v3018 = vld [vmem:[#allocation2 + $0x30] sm:$0xff]
  %v3019 = vld [vmem:[#allocation2 + $0x38] sm:$0xff]
  %v3020 = vpack.c.bf16 %v2953, %v2953
  %3021 = vmatpush.bf16.msra.mxu0 %v1173
  %3022 = vmatpush.bf16.msra.mxu0 %v1169
  %3023 = vmatpush.bf16.msra.mxu0 %v1165
  %3024 = vmatpush.bf16.msra.mxu0 %v1161
  %3025 = vmatpush.bf16.msra.mxu0 %v1157
  %3026 = vmatpush.bf16.msra.mxu0 %v1153
  %3027 = vmatpush.bf16.msra.mxu0 %v1149
  %3028 = vmatpush.bf16.msra.mxu0 %v1145
  %3029 = vmatmul.bf16.gmra.mxu0 %v3020
  %v3030 = vpop.f32.mrf.mxu0
  %v3031 = vadd.f32 0.0, %v3030
  %v3032 = vpop.f32.mrf.mxu0
  %3033 = vdwg.mxu0
  %3034 = vmatpush.bf16.msra.mxu0 %v1174
  %3035 = vmatpush.bf16.msra.mxu0 %v1170
  %3036 = vmatpush.bf16.msra.mxu0 %v1166
  %3037 = vmatpush.bf16.msra.mxu0 %v1162
  %3038 = vmatpush.bf16.msra.mxu0 %v1158
  %3039 = vmatpush.bf16.msra.mxu0 %v1154
  %3040 = vmatpush.bf16.msra.mxu0 %v1150
  %3041 = vmatpush.bf16.msra.mxu0 %v1146
  %3042 = vmatmul.bf16.gmra.mxu0 %v3020
  %v3043 = vpop.f32.mrf.mxu0
  %v3044 = vadd.f32 0.0, %v3043
  %v3045 = vpop.f32.mrf.mxu0
  %3046 = vdwg.mxu0
  %3047 = vmatpush.bf16.msra.mxu0 %v1175
  %3048 = vmatpush.bf16.msra.mxu0 %v1171
  %3049 = vmatpush.bf16.msra.mxu0 %v1167
  %3050 = vmatpush.bf16.msra.mxu0 %v1163
  %3051 = vmatpush.bf16.msra.mxu0 %v1159
  %3052 = vmatpush.bf16.msra.mxu0 %v1155
  %3053 = vmatpush.bf16.msra.mxu0 %v1151
  %3054 = vmatpush.bf16.msra.mxu0 %v1147
  %3055 = vmatmul.bf16.gmra.mxu0 %v3020
  %v3056 = vpop.f32.mrf.mxu0
  %v3057 = vadd.f32 0.0, %v3056
  %v3058 = vpop.f32.mrf.mxu0
  %3059 = vdwg.mxu0
  %3060 = vmatpush.bf16.msra.mxu0 %v1176
  %3061 = vmatpush.bf16.msra.mxu0 %v1172
  %3062 = vmatpush.bf16.msra.mxu0 %v1168
  %3063 = vmatpush.bf16.msra.mxu0 %v1164
  %3064 = vmatpush.bf16.msra.mxu0 %v1160
  %3065 = vmatpush.bf16.msra.mxu0 %v1156
  %3066 = vmatpush.bf16.msra.mxu0 %v1152
  %3067 = vmatpush.bf16.msra.mxu0 %v1148
  %3068 = vmatmul.bf16.gmra.mxu0 %v3020
  %v3069 = vpop.f32.mrf.mxu0
  %v3070 = vadd.f32 0.0, %v3069
  %v3071 = vpop.f32.mrf.mxu0
  %3072 = vdwg.mxu0
  %v3073 = vadd.f32 %v3016, %v3031
  %v3074 = vadd.f32 %v3017, %v3044
  %v3075 = vadd.f32 %v3018, %v3057
  %v3076 = vadd.f32 %v3019, %v3070
  %v3077 = vxor.u32 %v3012, 2147483648
  %v3078 = vmul.f32 %v3077, 1.442695
  %v3079 = vpow.pop %v3078
  %v3080 = vadd.f32 %v3079, 1.0
  %v3081 = vrcp.pop %v3080
  %v3082 = vmul.f32 %v3080, %v3081
  %v3083 = vsub.f32 1.0, %v3082
  %v3084 = vmul.f32 %v3081, %v3083
  %v3085 = vadd.f32 %v3081, %v3084
  %vm3086 = vweird.f32 %v3080
  %vm3087 = vweird.f32 %v3081
  %vm3088 = vmor %vm3086, %vm3087
  %v3089 = vsel %vm3088, %v3081, %v3085
  %v3090 = vand.u32 2147483647, %v3080
  %vm3091 = vcmp.eq.f32.partialorder %v3090, 8.507059e+37
  %v3092 = vand.u32 %v3080, 2147483648
  %v3093 = vor.u32 1.1754944e-38, %v3092
  %v3094 = vsel %vm3091, %v3093, %v3089
  %v3095 = vmul.f32 1.0, %v3094
  %v3096 = vxor.u32 %v3013, 2147483648
  %v3097 = vmul.f32 %v3096, 1.442695
  %v3098 = vpow.pop %v3097
  %v3099 = vadd.f32 %v3098, 1.0
  %v3100 = vrcp.pop %v3099
  %v3101 = vmul.f32 %v3099, %v3100
  %v3102 = vsub.f32 1.0, %v3101
  %v3103 = vmul.f32 %v3100, %v3102
  %v3104 = vadd.f32 %v3100, %v3103
  %vm3105 = vweird.f32 %v3099
  %vm3106 = vweird.f32 %v3100
  %vm3107 = vmor %vm3105, %vm3106
  %v3108 = vsel %vm3107, %v3100, %v3104
  %v3109 = vand.u32 2147483647, %v3099
  %vm3110 = vcmp.eq.f32.partialorder %v3109, 8.507059e+37
  %v3111 = vand.u32 %v3099, 2147483648
  %v3112 = vor.u32 1.1754944e-38, %v3111
  %v3113 = vsel %vm3110, %v3112, %v3108
  %v3114 = vmul.f32 1.0, %v3113
  %v3115 = vtanh.pop %v3014
  %v3116 = vxor.u32 %v3015, 2147483648
  %v3117 = vmul.f32 %v3116, 1.442695
  %v3118 = vpow.pop %v3117
  %v3119 = vadd.f32 %v3118, 1.0
  %v3120 = vrcp.pop %v3119
  %v3121 = vmul.f32 %v3119, %v3120
  %v3122 = vsub.f32 1.0, %v3121
  %v3123 = vmul.f32 %v3120, %v3122
  %v3124 = vadd.f32 %v3120, %v3123
  %vm3125 = vweird.f32 %v3119
  %vm3126 = vweird.f32 %v3120
  %vm3127 = vmor %vm3125, %vm3126
  %v3128 = vsel %vm3127, %v3120, %v3124
  %v3129 = vand.u32 2147483647, %v3119
  %vm3130 = vcmp.eq.f32.partialorder %v3129, 8.507059e+37
  %v3131 = vand.u32 %v3119, 2147483648
  %v3132 = vor.u32 1.1754944e-38, %v3131
  %v3133 = vsel %vm3130, %v3132, %v3128
  %v3134 = vmul.f32 1.0, %v3133
  %v3135 = vmul.f32 %v3114, %v2952
  %v3136 = vmul.f32 %v3095, %v3115
  %v3137 = vadd.f32 %v3135, %v3136
  %v3138 = vtanh.pop %v3137
  %v3139 = vmul.f32 %v3134, %v3138
  %v3140 = vxor.u32 %v3073, 2147483648
  %v3141 = vmul.f32 %v3140, 1.442695
  %v3142 = vpow.pop %v3141
  %v3143 = vadd.f32 %v3142, 1.0
  %v3144 = vrcp.pop %v3143
  %v3145 = vmul.f32 %v3143, %v3144
  %v3146 = vsub.f32 1.0, %v3145
  %v3147 = vmul.f32 %v3144, %v3146
  %v3148 = vadd.f32 %v3144, %v3147
  %vm3149 = vweird.f32 %v3143
  %vm3150 = vweird.f32 %v3144
  %vm3151 = vmor %vm3149, %vm3150
  %v3152 = vsel %vm3151, %v3144, %v3148
  %v3153 = vand.u32 2147483647, %v3143
  %vm3154 = vcmp.eq.f32.partialorder %v3153, 8.507059e+37
  %v3155 = vand.u32 %v3143, 2147483648
  %v3156 = vor.u32 1.1754944e-38, %v3155
  %v3157 = vsel %vm3154, %v3156, %v3152
  %v3158 = vmul.f32 1.0, %v3157
  %v3159 = vxor.u32 %v3074, 2147483648
  %v3160 = vmul.f32 %v3159, 1.442695
  %v3161 = vpow.pop %v3160
  %v3162 = vadd.f32 %v3161, 1.0
  %v3163 = vrcp.pop %v3162
  %v3164 = vmul.f32 %v3162, %v3163
  %v3165 = vsub.f32 1.0, %v3164
  %v3166 = vmul.f32 %v3163, %v3165
  %v3167 = vadd.f32 %v3163, %v3166
  %vm3168 = vweird.f32 %v3162
  %vm3169 = vweird.f32 %v3163
  %vm3170 = vmor %vm3168, %vm3169
  %v3171 = vsel %vm3170, %v3163, %v3167
  %v3172 = vand.u32 2147483647, %v3162
  %vm3173 = vcmp.eq.f32.partialorder %v3172, 8.507059e+37
  %v3174 = vand.u32 %v3162, 2147483648
  %v3175 = vor.u32 1.1754944e-38, %v3174
  %v3176 = vsel %vm3173, %v3175, %v3171
  %v3177 = vmul.f32 1.0, %v3176
  %v3178 = vtanh.pop %v3075
  %v3179 = vxor.u32 %v3076, 2147483648
  %v3180 = vmul.f32 %v3179, 1.442695
  %v3181 = vpow.pop %v3180
  %v3182 = vadd.f32 %v3181, 1.0
  %v3183 = vrcp.pop %v3182
  %v3184 = vmul.f32 %v3182, %v3183
  %v3185 = vsub.f32 1.0, %v3184
  %v3186 = vmul.f32 %v3183, %v3185
  %v3187 = vadd.f32 %v3183, %v3186
  %vm3188 = vweird.f32 %v3182
  %vm3189 = vweird.f32 %v3183
  %vm3190 = vmor %vm3188, %vm3189
  %v3191 = vsel %vm3190, %v3183, %v3187
  %v3192 = vand.u32 2147483647, %v3182
  %vm3193 = vcmp.eq.f32.partialorder %v3192, 8.507059e+37
  %v3194 = vand.u32 %v3182, 2147483648
  %v3195 = vor.u32 1.1754944e-38, %v3194
  %v3196 = vsel %vm3193, %v3195, %v3191
  %v3197 = vmul.f32 1.0, %v3196
  %v3198 = vmul.f32 %v3177, %v2954
  %v3199 = vmul.f32 %v3158, %v3178
  %v3200 = vadd.f32 %v3198, %v3199
  %v3201 = vtanh.pop %v3200
  %v3202 = vmul.f32 %v3197, %v3201
  %v3203 = vsel %vm1404, %v3139, %v2951
  %v3204 = vsel %vm1397, %v3202, %v2953
  %v3205 = vpack.c.bf16 %v3203, %v3203
  %v3206 = vpack.c.bf16 %v3204, %v3204
  %v3207 = vld [vmem:[%s6] sm:$0xf]
  %v3208 = vld [vmem:[%s6 + $0x4] sm:$0xf]
  %v3209 = vld [vmem:[%s6 + $0x8] sm:$0xf]
  %v3210 = vld [vmem:[%s6 + $0xc] sm:$0xf]
  %v3211 = vld [vmem:[%s6 + $0x10] sm:$0xf]
  %v3212 = vld [vmem:[%s6 + $0x14] sm:$0xf]
  %v3213 = vld [vmem:[%s6 + $0x18] sm:$0xf]
  %v3214 = vld [vmem:[%s6 + $0x1c] sm:$0xf]
  %v3215 = vld [vmem:[%s6 + $0x20] sm:$0xf]
  %v3216 = vld [vmem:[%s6 + $0x24] sm:$0xf]
  %v3217 = vld [vmem:[%s6 + $0x28] sm:$0xf]
  %v3218 = vld [vmem:[%s6 + $0x2c] sm:$0xf]
  %v3219 = vld [vmem:[%s6 + $0x30] sm:$0xf]
  %v3220 = vld [vmem:[%s6 + $0x34] sm:$0xf]
  %v3221 = vld [vmem:[%s6 + $0x38] sm:$0xf]
  %v3222 = vld [vmem:[%s6 + $0x3c] sm:$0xf]
  %v3223 = vld [vmem:[%s6 + $0x40] sm:$0xf]
  %v3224 = vld [vmem:[%s6 + $0x44] sm:$0xf]
  %v3225 = vld [vmem:[%s6 + $0x48] sm:$0xf]
  %v3226 = vld [vmem:[%s6 + $0x4c] sm:$0xf]
  %v3227 = vld [vmem:[%s6 + $0x50] sm:$0xf]
  %v3228 = vld [vmem:[%s6 + $0x54] sm:$0xf]
  %v3229 = vld [vmem:[%s6 + $0x58] sm:$0xf]
  %v3230 = vld [vmem:[%s6 + $0x5c] sm:$0xf]
  %v3231 = vld [vmem:[%s6 + $0x60] sm:$0xf]
  %v3232 = vld [vmem:[%s6 + $0x64] sm:$0xf]
  %v3233 = vld [vmem:[%s6 + $0x68] sm:$0xf]
  %v3234 = vld [vmem:[%s6 + $0x6c] sm:$0xf]
  %v3235 = vld [vmem:[%s6 + $0x70] sm:$0xf]
  %v3236 = vld [vmem:[%s6 + $0x74] sm:$0xf]
  %v3237 = vld [vmem:[%s6 + $0x78] sm:$0xf]
  %v3238 = vld [vmem:[%s6 + $0x7c] sm:$0xf]
  %v3239 = vld [vmem:[%s7] sm:$0x1]
  %v3241 = vperm.slane %v3239, 0
  %v3275 = vunpack.c.l.b16 %v3207
  %v3276 = vunpack.c.l.b16 %v3208
  %v3277 = vunpack.c.l.b16 %v3209
  %v3278 = vunpack.c.l.b16 %v3210
  %v3279 = vunpack.c.l.b16 %v3211
  %v3280 = vunpack.c.l.b16 %v3212
  %v3281 = vunpack.c.l.b16 %v3213
  %v3282 = vunpack.c.l.b16 %v3214
  %v3283 = vunpack.c.l.b16 %v3215
  %v3284 = vunpack.c.l.b16 %v3216
  %v3285 = vunpack.c.l.b16 %v3217
  %v3286 = vunpack.c.l.b16 %v3218
  %v3287 = vunpack.c.l.b16 %v3219
  %v3288 = vunpack.c.l.b16 %v3220
  %v3289 = vunpack.c.l.b16 %v3221
  %v3290 = vunpack.c.l.b16 %v3222
  %v3291 = vunpack.c.l.b16 %v3223
  %v3292 = vunpack.c.l.b16 %v3224
  %v3293 = vunpack.c.l.b16 %v3225
  %v3294 = vunpack.c.l.b16 %v3226
  %v3295 = vunpack.c.l.b16 %v3227
  %v3296 = vunpack.c.l.b16 %v3228
  %v3297 = vunpack.c.l.b16 %v3229
  %v3298 = vunpack.c.l.b16 %v3230
  %v3299 = vunpack.c.l.b16 %v3231
  %v3300 = vunpack.c.l.b16 %v3232
  %v3301 = vunpack.c.l.b16 %v3233
  %v3302 = vunpack.c.l.b16 %v3234
  %v3303 = vunpack.c.l.b16 %v3235
  %v3304 = vunpack.c.l.b16 %v3236
  %v3305 = vunpack.c.l.b16 %v3237
  %v3306 = vunpack.c.l.b16 %v3238
  %v3307 = vpack.c.b16 %v3276, %v3275
  %v3308 = vpack.c.b16 %v3278, %v3277
  %v3309 = vpack.c.b16 %v3280, %v3279
  %v3310 = vpack.c.b16 %v3282, %v3281
  %v3311 = vpack.c.b16 %v3284, %v3283
  %v3312 = vpack.c.b16 %v3286, %v3285
  %v3313 = vpack.c.b16 %v3288, %v3287
  %v3314 = vpack.c.b16 %v3290, %v3289
  %v3315 = vpack.c.b16 %v3292, %v3291
  %v3316 = vpack.c.b16 %v3294, %v3293
  %v3317 = vpack.c.b16 %v3296, %v3295
  %v3318 = vpack.c.b16 %v3298, %v3297
  %v3319 = vpack.c.b16 %v3300, %v3299
  %v3320 = vpack.c.b16 %v3302, %v3301
  %v3321 = vpack.c.b16 %v3304, %v3303
  %v3322 = vpack.c.b16 %v3306, %v3305
  %3339 = vmatpush.bf16.msra.mxu0 %v3314
  %3340 = vmatpush.bf16.msra.mxu0 %v3313
  %3341 = vmatpush.bf16.msra.mxu0 %v3312
  %3342 = vmatpush.bf16.msra.mxu0 %v3311
  %3343 = vmatpush.bf16.msra.mxu0 %v3310
  %3344 = vmatpush.bf16.msra.mxu0 %v3309
  %3345 = vmatpush.bf16.msra.mxu0 %v3308
  %3346 = vmatpush.bf16.msra.mxu0 %v3307
  %3347 = vmatmul.bf16.gmra.mxu0 %v3205
  %v3348 = vpop.f32.mrf.mxu0
  %v3349 = vadd.f32 %v3241, %v3348
  %v3350 = vpop.f32.mrf.mxu0
  %3351 = vdwg.mxu0
  %3352 = vmatpush.bf16.msra.mxu0 %v3322
  %3353 = vmatpush.bf16.msra.mxu0 %v3321
  %3354 = vmatpush.bf16.msra.mxu0 %v3320
  %3355 = vmatpush.bf16.msra.mxu0 %v3319
  %3356 = vmatpush.bf16.msra.mxu0 %v3318
  %3357 = vmatpush.bf16.msra.mxu0 %v3317
  %3358 = vmatpush.bf16.msra.mxu0 %v3316
  %3359 = vmatpush.bf16.msra.mxu0 %v3315
  %3360 = vmatmul.bf16.gmra.mxu0 %v3206
  %v3361 = vpop.f32.mrf.mxu0
  %v3362 = vadd.f32 %v3349, %v3361
  %v3363 = vpop.f32.mrf.mxu0
  %3364 = vdwg.mxu0
  %3365 = vst [vmem:[%s8] sm:$0xff] %v3362
  // Predicated region
  $region34: #{rnn_encoder_forward.1} parent=0 // pred_check
    _
  $region35: #{rnn_encoder_forward.1} parent=0 // pred_check_branch
    %3367 = sbr.rel (0) target = $region37
  $region36: #{rnn_encoder_forward.1} parent=0 // pred_region
    _
  $region37: #{rnn_encoder_forward.1} parent=0 // pred_fallthru
    _
  // Predicated region
  $region38: #{rnn_encoder_forward.1} parent=0 // pred_check
    _
  $region39: #{rnn_encoder_forward.1} parent=0 // pred_check_branch
    %3369 = sbr.rel (0) target = $region41
  $region40: #{rnn_encoder_forward.1} parent=0 // pred_region
    _
  $region41: #{rnn_encoder_forward.1} parent=0 // pred_fallthru
    _

</llo_original>
